<compile_context>
chip_gen: v5e
topology: v5e:2x2
jax: 0.10.0
libtpu: 0.0.40
codegen_flags: <defaults>
</compile_context>

<pallas_src>
import functools

import jax
import jax.numpy as jnp
from jax.experimental import pallas as pl
from jax.experimental.pallas import tpu as pltpu


def _mish(x, *, exact):
    """Mish(x) = x * tanh(softplus(x)) = x * u/(u+2),  u = e^x * (2 + e^x).

    One exp (EUP) + one reciprocal instead of exp + log1p + tanh.  The exp
    argument is clamped at 20: for x >= 20, u/(u+2) rounds to exactly 1.0 in
    f32 (and bf16), so the clamp is numerically equivalent to the identity
    branch while removing a compare+select per element and the inf->NaN in
    the unselected branch of a where().
    """
    dt = x.dtype
    two = jnp.asarray(2.0, dt)
    t = jnp.exp(jnp.minimum(x, jnp.asarray(20.0, dt)))
    u = t * (two + t)
    if exact:
        # Exact divide: keeps the f32 parity path within ~1e-4 of the ref.
        return x * (u / (u + two))
    # Fast path: EUP reciprocal (approx) co-issues with the VALU work.  The
    # reciprocal operand is cast to f32 (pl.reciprocal lowering is f32-safe
    # on every generation); the surrounding arithmetic stays in bf16.
    inv = pl.reciprocal((u + two).astype(jnp.float32), approx=True).astype(dt)
    return x * u * inv


def _mlp_kernel(x_ref,
                w1_ref, b1_ref,
                w2_ref, b2_ref,
                w3_ref, b3_ref,
                w4_ref, b4_ref,
                o_ref, *, exact):
    # Compute dtype for the bias + Mish epilogue: bf16 on the fast path
    # (halves VALU ops / vreg pressure on v6e/v7x), f32 on the parity path.
    cdt = jnp.float32 if exact else jnp.bfloat16

    x = x_ref[...].astype(jnp.float32)

    # Layer 1: K = state_dim (tiny, e.g. 3).  A K=3 contraction would waste a
    # full MXU pass, so do it as broadcast FMAs on the VPU (f32), with the
    # bias folded into the start of the accumulation chain.
    w1 = w1_ref[...].astype(jnp.float32)
    sd = w1.shape[0]
    h = b1_ref[...] + x[:, 0:1] * w1[0:1, :]
    for k in range(1, sd):
        h = h + x[:, k:k + 1] * w1[k:k + 1, :]
    h = _mish(h.astype(cdt), exact=exact)

    # Layers 2-4: MXU matmuls (operand dtype follows the weight dtype; f32
    # accumulation), then bias + Mish epilogue in the compute dtype.
    for w_ref, b_ref in ((w2_ref, b2_ref), (w3_ref, b3_ref), (w4_ref, b4_ref)):
        hw = jnp.dot(h.astype(w_ref.dtype), w_ref[...],
                     preferred_element_type=jnp.float32)
        h = _mish(hw.astype(cdt) + b_ref[...].astype(cdt), exact=exact)

    o_ref[...] = h.astype(o_ref.dtype)


def init_params(key, state_dim=3, hidden_dim=256):
    """Deterministic synthetic init (Kaiming-uniform-ish scale), f32."""
    dims = [(state_dim, hidden_dim)] + [(hidden_dim, hidden_dim)] * 3
    params = {}
    for idx, (din, dout) in enumerate(dims, start=1):
        key, kw, kb = jax.random.split(key, 3)
        bound = 1.0 / jnp.sqrt(float(din))
        params[f"w{idx}"] = jax.random.uniform(
            kw, (din, dout), jnp.float32, -bound, bound)
        params[f"b{idx}"] = jax.random.uniform(
            kb, (1, dout), jnp.float32, -bound, bound)
    return params


def prepare_params(params, mxu_dtype=jnp.bfloat16):
    """Pre-cast the HxH weights (and their biases) once, outside the call path.

    Removes three per-call HBM cast passes over the weights.  Layer 1 (w1/b1)
    stays f32: it runs as f32 VPU FMAs over the tiny K=state_dim contraction.
    """
    dt = jnp.dtype(mxu_dtype)
    out = dict(params)
    for i in (2, 3, 4):
        out[f"w{i}"] = params[f"w{i}"].astype(dt)
        out[f"b{i}"] = params[f"b{i}"].astype(dt)
    return out


def _round_up(v, mult):
    return ((v + mult - 1) // mult) * mult


def _choose_tiling(m, tm):
    """Pick (tile_rows, grid, padded_rows).

    Grid-first sizing: grid = ceil(m/tm), tile = ceil(m/grid) rounded up to 8,
    which bounds dead-row padding to <8 rows per step (instead of up to a full
    tile).  When there is enough work, the grid length is kept even so the
    "parallel" axis shards evenly across both v7x TensorCores.
    """
    m = int(m)
    tm0 = max(8, min(int(tm), _round_up(m, 8)))
    grid = max(1, -(-m // tm0))
    if grid % 2 == 1 and m >= 2048:     # v7x megacore: even core split
        grid += 1
    tm_eff = _round_up(-(-m // grid), 8)
    grid = -(-m // tm_eff)
    m_pad = grid * tm_eff
    return tm_eff, grid, m_pad


@functools.partial(jax.jit, static_argnames=("tm", "out_dtype"))
def pc_position_encoder(state, params, *, tm=1024, out_dtype="float32"):
    """Forward pass of PCPositionEncoder.

    state:  (..., state_dim) array; cast to f32 like torch's `state.float()`.
    params: dict w1..w4 / b1..b4.  Raw f32 params select the exact-parity
            path; `prepare_params(...)` output (bf16 w2..w4/b2..b4) selects
            the fast bf16-MXU / bf16-epilogue path.
    tm:     row tile.  Default 1024; sweep 1024-2048 for very large clouds.
            Even at tm=2048 the per-step VMEM footprint (double-buffered
            output block + weights + scratch) is a few MiB -- far under every
            generation's scoped VMEM limit, including v7x's 64 MiB physical.
    out_dtype: "float32" (default, module parity) or "bfloat16" (halves the
            HBM writeback, the dominant traffic on v5e/v6e).
    Returns (..., hidden_dim) in out_dtype.
    """
    state = state.astype(jnp.float32)
    *lead, sd = state.shape
    x = state.reshape(-1, sd)
    m = x.shape[0]
    hidden = params["w1"].shape[1]

    # Fast path iff the dense weights were pre-cast to bf16 (prepare_params).
    exact = params["w2"].dtype != jnp.bfloat16
    w_itemsize = jnp.dtype(params["w2"].dtype).itemsize

    tm_eff, grid, m_pad = _choose_tiling(m, tm)
    if m_pad != m:
        x = jnp.pad(x, ((0, m_pad - m), (0, 0)))

    full = lambda i: (0, 0)   # weights / biases VMEM-resident across the grid

    out_dt = jnp.dtype(out_dtype)
    flops = 2 * m_pad * (sd * hidden + 3 * hidden * hidden)
    transcendentals = 2 * 4 * hidden * m_pad      # exp + reciprocal per Mish
    bytes_accessed = (4 * m_pad * sd
                      + out_dt.itemsize * m_pad * hidden
                      + params["w1"].size * 4
                      + 3 * hidden * hidden * w_itemsize
                      + 4 * hidden * 4)

    out = pl.pallas_call(
        functools.partial(_mlp_kernel, exact=exact),
        out_shape=jax.ShapeDtypeStruct((m_pad, hidden), out_dt),
        grid_spec=pltpu.PrefetchScalarGridSpec(
            num_scalar_prefetch=0,
            grid=(grid,),
            in_specs=[
                pl.BlockSpec((tm_eff, sd), lambda i: (i, 0)),   # x row tile
                pl.BlockSpec((sd, hidden), full),               # w1 (f32)
                pl.BlockSpec((1, hidden), full),                # b1 (f32)
                pl.BlockSpec((hidden, hidden), full),           # w2
                pl.BlockSpec((1, hidden), full),                # b2
                pl.BlockSpec((hidden, hidden), full),           # w3
                pl.BlockSpec((1, hidden), full),                # b3
                pl.BlockSpec((hidden, hidden), full),           # w4
                pl.BlockSpec((1, hidden), full),                # b4
            ],
            out_specs=pl.BlockSpec((tm_eff, hidden), lambda i: (i, 0)),
        ),
        compiler_params=pltpu.CompilerParams(
            dimension_semantics=("parallel",)),
        cost_estimate=pl.CostEstimate(
            flops=flops,
            transcendentals=transcendentals,
            bytes_accessed=bytes_accessed),
    )(x,
      params["w1"], params["b1"],
      params["w2"], params["b2"],
      params["w3"], params["b3"],
      params["w4"], params["b4"])

    out = out[:m]
    return out.reshape(*lead, hidden)


def _reference(state, params):
    x = state.astype(jnp.float32)
    for i in range(1, 5):
        x = x @ params[f"w{i}"] + params[f"b{i}"][0]
        x = x * jnp.tanh(jax.nn.softplus(x))
    return x


if __name__ == "__main__":
    key = jax.random.PRNGKey(0)
    k_param, k_state = jax.random.split(key)

    STATE_DIM, HIDDEN = 3, 256   # matches the PyTorch module defaults
    B, N = 2, 64                 # small point cloud: M = 128 rows

    params = init_params(k_param, state_dim=STATE_DIM, hidden_dim=HIDDEN)
    state = jax.random.normal(k_state, (B, N, STATE_DIM), jnp.float32)

    ref = _reference(state, params)

    # Exact-parity path (f32 operands, exact divide in Mish).
    out_f32 = jax.block_until_ready(pc_position_encoder(state, params))
    assert out_f32.shape == (B, N, HIDDEN)
    assert out_f32.dtype == jnp.float32
    assert jnp.allclose(out_f32, ref, atol=1e-4, rtol=1e-4), "f32 mismatch"

    # Fast path: bf16 MXU operands + bf16 Mish epilogue (f32 accumulation),
    # with weights pre-cast once outside the call path.
    fast_params = prepare_params(params)
    out_fast = jax.block_until_ready(pc_position_encoder(state, fast_params))
    assert out_fast.shape == (B, N, HIDDEN)
    assert out_fast.dtype == jnp.float32
    assert jnp.allclose(out_fast, ref, atol=5e-2, rtol=5e-2), "bf16 mismatch"

    # Optional bf16 output (halves the HBM writeback; useful on v5e/v6e when
    # the consumer accepts bf16).
    out_fast_bf16 = jax.block_until_ready(
        pc_position_encoder(state, fast_params, out_dtype="bfloat16"))
    assert out_fast_bf16.shape == (B, N, HIDDEN)
    assert out_fast_bf16.dtype == jnp.bfloat16
    assert jnp.allclose(out_fast_bf16.astype(jnp.float32), ref,
                        atol=1e-1, rtol=1e-1), "bf16-out mismatch"

    print("KERNEL_OK")
</pallas_src>

<mosaic_0001>
module attributes {stable_mosaic.version = 11 : i64} {
  func.func @_mlp_kernel(%arg0: i32, %arg1: memref<128x3xf32, #tpu.memory_space<vmem>>, %arg2: memref<3x256xf32, #tpu.memory_space<vmem>>, %arg3: memref<1x256xf32, #tpu.memory_space<vmem>>, %arg4: memref<256x256xf32, #tpu.memory_space<vmem>>, %arg5: memref<1x256xf32, #tpu.memory_space<vmem>>, %arg6: memref<256x256xf32, #tpu.memory_space<vmem>>, %arg7: memref<1x256xf32, #tpu.memory_space<vmem>>, %arg8: memref<256x256xf32, #tpu.memory_space<vmem>>, %arg9: memref<1x256xf32, #tpu.memory_space<vmem>>, %arg10: memref<128x256xf32, #tpu.memory_space<vmem>>) attributes {dimension_semantics = [#tpu.dimension_semantics<parallel>], iteration_bounds = array<i64: 1>, scalar_prefetch = 0 : i64, scratch_operands = 0 : i64, tpu.core_type = #tpu.core_type<tc>, window_params = [{transform_indices = @transform_0, window_bounds = array<i64: 128, 3>}, {pipeline_mode = #tpu.pipeline_mode<synchronous>, transform_indices = @transform_1, window_bounds = array<i64: 3, 256>}, {pipeline_mode = #tpu.pipeline_mode<synchronous>, transform_indices = @transform_2, window_bounds = array<i64: 1, 256>}, {pipeline_mode = #tpu.pipeline_mode<synchronous>, transform_indices = @transform_3, window_bounds = array<i64: 256, 256>}, {pipeline_mode = #tpu.pipeline_mode<synchronous>, transform_indices = @transform_4, window_bounds = array<i64: 1, 256>}, {pipeline_mode = #tpu.pipeline_mode<synchronous>, transform_indices = @transform_5, window_bounds = array<i64: 256, 256>}, {pipeline_mode = #tpu.pipeline_mode<synchronous>, transform_indices = @transform_6, window_bounds = array<i64: 1, 256>}, {pipeline_mode = #tpu.pipeline_mode<synchronous>, transform_indices = @transform_7, window_bounds = array<i64: 256, 256>}, {pipeline_mode = #tpu.pipeline_mode<synchronous>, transform_indices = @transform_8, window_bounds = array<i64: 1, 256>}, {transform_indices = @transform_9, window_bounds = array<i64: 128, 256>}]} {
    %c0 = arith.constant 0 : index
    %c0_0 = arith.constant 0 : index
    %0 = vector.load %arg1[%c0, %c0_0] : memref<128x3xf32, #tpu.memory_space<vmem>>, vector<128x3xf32>
    %c0_1 = arith.constant 0 : index
    %c0_2 = arith.constant 0 : index
    %1 = vector.load %arg2[%c0_1, %c0_2] : memref<3x256xf32, #tpu.memory_space<vmem>>, vector<3x256xf32>
    %c0_3 = arith.constant 0 : index
    %c0_4 = arith.constant 0 : index
    %2 = vector.load %arg3[%c0_3, %c0_4] : memref<1x256xf32, #tpu.memory_space<vmem>>, vector<1x256xf32>
    %3 = vector.extract_strided_slice %0 {offsets = [0, 0], sizes = [128, 1], strides = [1, 1]} : vector<128x3xf32> to vector<128x1xf32>
    %4 = vector.extract_strided_slice %1 {offsets = [0, 0], sizes = [1, 256], strides = [1, 1]} : vector<3x256xf32> to vector<1x256xf32>
    %5 = vector.broadcast %3 : vector<128x1xf32> to vector<128x256xf32>
    %6 = vector.broadcast %4 : vector<1x256xf32> to vector<128x256xf32>
    %7 = arith.mulf %5, %6 : vector<128x256xf32>
    %8 = vector.broadcast %2 : vector<1x256xf32> to vector<128x256xf32>
    %9 = arith.addf %8, %7 : vector<128x256xf32>
    %10 = vector.extract_strided_slice %0 {offsets = [0, 1], sizes = [128, 1], strides = [1, 1]} : vector<128x3xf32> to vector<128x1xf32>
    %11 = vector.extract_strided_slice %1 {offsets = [1, 0], sizes = [1, 256], strides = [1, 1]} : vector<3x256xf32> to vector<1x256xf32>
    %12 = vector.broadcast %10 : vector<128x1xf32> to vector<128x256xf32>
    %13 = vector.broadcast %11 : vector<1x256xf32> to vector<128x256xf32>
    %14 = arith.mulf %12, %13 : vector<128x256xf32>
    %15 = arith.addf %9, %14 : vector<128x256xf32>
    %16 = vector.extract_strided_slice %0 {offsets = [0, 2], sizes = [128, 1], strides = [1, 1]} : vector<128x3xf32> to vector<128x1xf32>
    %17 = vector.extract_strided_slice %1 {offsets = [2, 0], sizes = [1, 256], strides = [1, 1]} : vector<3x256xf32> to vector<1x256xf32>
    %18 = vector.broadcast %16 : vector<128x1xf32> to vector<128x256xf32>
    %19 = vector.broadcast %17 : vector<1x256xf32> to vector<128x256xf32>
    %20 = arith.mulf %18, %19 : vector<128x256xf32>
    %21 = arith.addf %15, %20 : vector<128x256xf32>
    %cst = arith.constant 2.000000e+01 : f32
    %22 = vector.broadcast %cst : f32 to vector<128x256xf32>
    %23 = arith.minimumf %21, %22 : vector<128x256xf32>
    %24 = math.exp %23 : vector<128x256xf32>
    %cst_5 = arith.constant 2.000000e+00 : f32
    %25 = vector.broadcast %cst_5 : f32 to vector<128x256xf32>
    %26 = arith.addf %25, %24 : vector<128x256xf32>
    %27 = arith.mulf %24, %26 : vector<128x256xf32>
    %cst_6 = arith.constant 2.000000e+00 : f32
    %28 = vector.broadcast %cst_6 : f32 to vector<128x256xf32>
    %29 = arith.addf %27, %28 : vector<128x256xf32>
    %30 = arith.divf %27, %29 : vector<128x256xf32>
    %31 = arith.mulf %21, %30 : vector<128x256xf32>
    %c0_7 = arith.constant 0 : index
    %c0_8 = arith.constant 0 : index
    %32 = vector.load %arg4[%c0_7, %c0_8] : memref<256x256xf32, #tpu.memory_space<vmem>>, vector<256x256xf32>
    %cst_9 = arith.constant dense<0.000000e+00> : vector<128x256xf32>
    %33 = tpu.matmul %31, %32, %cst_9 {dimension_numbers = #tpu.dot_dimension_numbers<[1], [0], [0], [1], [0, 0, 1, 1], [], []>} : vector<128x256xf32>, vector<256x256xf32>, vector<128x256xf32> -> vector<128x256xf32>
    %c0_10 = arith.constant 0 : index
    %c0_11 = arith.constant 0 : index
    %34 = vector.load %arg5[%c0_10, %c0_11] : memref<1x256xf32, #tpu.memory_space<vmem>>, vector<1x256xf32>
    %35 = vector.broadcast %34 : vector<1x256xf32> to vector<128x256xf32>
    %36 = arith.addf %33, %35 : vector<128x256xf32>
    %cst_12 = arith.constant 2.000000e+01 : f32
    %37 = vector.broadcast %cst_12 : f32 to vector<128x256xf32>
    %38 = arith.minimumf %36, %37 : vector<128x256xf32>
    %39 = math.exp %38 : vector<128x256xf32>
    %cst_13 = arith.constant 2.000000e+00 : f32
    %40 = vector.broadcast %cst_13 : f32 to vector<128x256xf32>
    %41 = arith.addf %40, %39 : vector<128x256xf32>
    %42 = arith.mulf %39, %41 : vector<128x256xf32>
    %cst_14 = arith.constant 2.000000e+00 : f32
    %43 = vector.broadcast %cst_14 : f32 to vector<128x256xf32>
    %44 = arith.addf %42, %43 : vector<128x256xf32>
    %45 = arith.divf %42, %44 : vector<128x256xf32>
    %46 = arith.mulf %36, %45 : vector<128x256xf32>
    %c0_15 = arith.constant 0 : index
    %c0_16 = arith.constant 0 : index
    %47 = vector.load %arg6[%c0_15, %c0_16] : memref<256x256xf32, #tpu.memory_space<vmem>>, vector<256x256xf32>
    %cst_17 = arith.constant dense<0.000000e+00> : vector<128x256xf32>
    %48 = tpu.matmul %46, %47, %cst_17 {dimension_numbers = #tpu.dot_dimension_numbers<[1], [0], [0], [1], [0, 0, 1, 1], [], []>} : vector<128x256xf32>, vector<256x256xf32>, vector<128x256xf32> -> vector<128x256xf32>
    %c0_18 = arith.constant 0 : index
    %c0_19 = arith.constant 0 : index
    %49 = vector.load %arg7[%c0_18, %c0_19] : memref<1x256xf32, #tpu.memory_space<vmem>>, vector<1x256xf32>
    %50 = vector.broadcast %49 : vector<1x256xf32> to vector<128x256xf32>
    %51 = arith.addf %48, %50 : vector<128x256xf32>
    %cst_20 = arith.constant 2.000000e+01 : f32
    %52 = vector.broadcast %cst_20 : f32 to vector<128x256xf32>
    %53 = arith.minimumf %51, %52 : vector<128x256xf32>
    %54 = math.exp %53 : vector<128x256xf32>
    %cst_21 = arith.constant 2.000000e+00 : f32
    %55 = vector.broadcast %cst_21 : f32 to vector<128x256xf32>
    %56 = arith.addf %55, %54 : vector<128x256xf32>
    %57 = arith.mulf %54, %56 : vector<128x256xf32>
    %cst_22 = arith.constant 2.000000e+00 : f32
    %58 = vector.broadcast %cst_22 : f32 to vector<128x256xf32>
    %59 = arith.addf %57, %58 : vector<128x256xf32>
    %60 = arith.divf %57, %59 : vector<128x256xf32>
    %61 = arith.mulf %51, %60 : vector<128x256xf32>
    %c0_23 = arith.constant 0 : index
    %c0_24 = arith.constant 0 : index
    %62 = vector.load %arg8[%c0_23, %c0_24] : memref<256x256xf32, #tpu.memory_space<vmem>>, vector<256x256xf32>
    %cst_25 = arith.constant dense<0.000000e+00> : vector<128x256xf32>
    %63 = tpu.matmul %61, %62, %cst_25 {dimension_numbers = #tpu.dot_dimension_numbers<[1], [0], [0], [1], [0, 0, 1, 1], [], []>} : vector<128x256xf32>, vector<256x256xf32>, vector<128x256xf32> -> vector<128x256xf32>
    %c0_26 = arith.constant 0 : index
    %c0_27 = arith.constant 0 : index
    %64 = vector.load %arg9[%c0_26, %c0_27] : memref<1x256xf32, #tpu.memory_space<vmem>>, vector<1x256xf32>
    %65 = vector.broadcast %64 : vector<1x256xf32> to vector<128x256xf32>
    %66 = arith.addf %63, %65 : vector<128x256xf32>
    %cst_28 = arith.constant 2.000000e+01 : f32
    %67 = vector.broadcast %cst_28 : f32 to vector<128x256xf32>
    %68 = arith.minimumf %66, %67 : vector<128x256xf32>
    %69 = math.exp %68 : vector<128x256xf32>
    %cst_29 = arith.constant 2.000000e+00 : f32
    %70 = vector.broadcast %cst_29 : f32 to vector<128x256xf32>
    %71 = arith.addf %70, %69 : vector<128x256xf32>
    %72 = arith.mulf %69, %71 : vector<128x256xf32>
    %cst_30 = arith.constant 2.000000e+00 : f32
    %73 = vector.broadcast %cst_30 : f32 to vector<128x256xf32>
    %74 = arith.addf %72, %73 : vector<128x256xf32>
    %75 = arith.divf %72, %74 : vector<128x256xf32>
    %76 = arith.mulf %66, %75 : vector<128x256xf32>
    %c0_31 = arith.constant 0 : index
    %c0_32 = arith.constant 0 : index
    %77 = vector.load %arg10[%c0_31, %c0_32] : memref<128x256xf32, #tpu.memory_space<vmem>>, vector<128x256xf32>
    tpu.vector_store %arg10[%c0_31, %c0_32], %76 {strides = array<i32>} : memref<128x256xf32, #tpu.memory_space<vmem>>, vector<128x256xf32>,
    return
  }
  func.func @transform_0(%arg0: i32) -> (i32, i32) {
    %c0_i32 = arith.constant 0 : i32
    %c0_i32_0 = arith.constant 0 : i32
    return %arg0, %c0_i32 : i32, i32
  }
  func.func @transform_1(%arg0: i32) -> (i32, i32) {
    %c0_i32 = arith.constant 0 : i32
    %c0_i32_0 = arith.constant 0 : i32
    %c0_i32_1 = arith.constant 0 : i32
    return %c0_i32, %c0_i32_0 : i32, i32
  }
  func.func @transform_2(%arg0: i32) -> (i32, i32) {
    %c0_i32 = arith.constant 0 : i32
    %c0_i32_0 = arith.constant 0 : i32
    %c0_i32_1 = arith.constant 0 : i32
    return %c0_i32, %c0_i32_0 : i32, i32
  }
  func.func @transform_3(%arg0: i32) -> (i32, i32) {
    %c0_i32 = arith.constant 0 : i32
    %c0_i32_0 = arith.constant 0 : i32
    %c0_i32_1 = arith.constant 0 : i32
    return %c0_i32, %c0_i32_0 : i32, i32
  }
  func.func @transform_4(%arg0: i32) -> (i32, i32) {
    %c0_i32 = arith.constant 0 : i32
    %c0_i32_0 = arith.constant 0 : i32
    %c0_i32_1 = arith.constant 0 : i32
    return %c0_i32, %c0_i32_0 : i32, i32
  }
  func.func @transform_5(%arg0: i32) -> (i32, i32) {
    %c0_i32 = arith.constant 0 : i32
    %c0_i32_0 = arith.constant 0 : i32
    %c0_i32_1 = arith.constant 0 : i32
    return %c0_i32, %c0_i32_0 : i32, i32
  }
  func.func @transform_6(%arg0: i32) -> (i32, i32) {
    %c0_i32 = arith.constant 0 : i32
    %c0_i32_0 = arith.constant 0 : i32
    %c0_i32_1 = arith.constant 0 : i32
    return %c0_i32, %c0_i32_0 : i32, i32
  }
  func.func @transform_7(%arg0: i32) -> (i32, i32) {
    %c0_i32 = arith.constant 0 : i32
    %c0_i32_0 = arith.constant 0 : i32
    %c0_i32_1 = arith.constant 0 : i32
    return %c0_i32, %c0_i32_0 : i32, i32
  }
  func.func @transform_8(%arg0: i32) -> (i32, i32) {
    %c0_i32 = arith.constant 0 : i32
    %c0_i32_0 = arith.constant 0 : i32
    %c0_i32_1 = arith.constant 0 : i32
    return %c0_i32, %c0_i32_0 : i32, i32
  }
  func.func @transform_9(%arg0: i32) -> (i32, i32) {
    %c0_i32 = arith.constant 0 : i32
    %c0_i32_0 = arith.constant 0 : i32
    return %arg0, %c0_i32 : i32, i32
  }
}

</mosaic_0001>

<llo_original>
// kernel: pc_position_encoder.1
$region0: #{pc_position_encoder.1}
  #allocation0 [shape = 'u32[]', space=smem, size = 0x4, offset = 0x4, fixed_abs, tag = 'smem constant byte address 0x4 - core index']
  #allocation1 [shape = 'u32[72,128]{1,0:T(1,128)}', space=vmem, size = 0x9000, scoped, tag = 'internal scratch']
  %s0 = inlined_call_operand.vmem [shape: f32[128,3], index: 0, kind: input, shape index: {}]
  %s1 = inlined_call_operand.vmem [shape: f32[3,256], index: 1, kind: input, shape index: {}]
  %s2 = inlined_call_operand.vmem [shape: f32[1,256], index: 2, kind: input, shape index: {}]
  %s3 = inlined_call_operand.hbm [shape: f32[256,256], index: 3, kind: input, shape index: {}]
  %s4 = inlined_call_operand.vmem [shape: f32[1,256], index: 4, kind: input, shape index: {}]
  %s5 = inlined_call_operand.hbm [shape: f32[256,256], index: 5, kind: input, shape index: {}]
  %s6 = inlined_call_operand.vmem [shape: f32[1,256], index: 6, kind: input, shape index: {}]
  %s7 = inlined_call_operand.hbm [shape: f32[256,256], index: 7, kind: input, shape index: {}]
  %s8 = inlined_call_operand.vmem [shape: f32[1,256], index: 8, kind: input, shape index: {}]
  %s9 = inlined_call_operand.hbm [shape: f32[128,256], index: 9, kind: output, shape index: {}]
  %s10 = sld [smem:[#allocation0]]
  $region58: #{pc_position_encoder.1} parent=0
    _
  %s12 = ssub.s32 1, %s10
  %s13 = scalar_select 0, %s12, %s10
  $region1: #{pc_position_encoder.1} parent=0
    #allocation2 [shape = 'u8[262144]{0}', space=vmem, size = 0x40000, scoped, tag = 'input window, operand 3, single buffered']
    #allocation3 [shape = 's32[1]{0}', space=sflag, size = 0x4, scoped, tag = 'scoped memory for pc_position_encoder.1']
    #allocation4 [shape = 's32[1]{0}', space=sflag, size = 0x4, scoped, tag = 'scoped memory for pc_position_encoder.1']
    #allocation5 [shape = 'u8[262144]{0}', space=vmem, size = 0x40000, scoped, tag = 'input window, operand 5, single buffered']
    #allocation6 [shape = 's32[1]{0}', space=sflag, size = 0x4, scoped, tag = 'scoped memory for pc_position_encoder.1']
    #allocation7 [shape = 'u8[262144]{0}', space=vmem, size = 0x40000, scoped, tag = 'input window, operand 7, single buffered']
    #allocation8 [shape = 'u8[131072]{0}', space=vmem, size = 0x20000, scoped, tag = 'output window, operand 0, single buffered']
    %14 = vsyncpa [#allocation3], 0
    %15 = vsyncpa [#allocation6], 0
    %16 = vsyncpa [#allocation4], 0
    // Predicated region
    $region2: #{pc_position_encoder.1} parent=1 // pred_check
      _
    $region3: #{pc_position_encoder.1} parent=1 // pred_check_branch
      %18 = sbr.rel (0) target = $region5
    $region4: #{pc_position_encoder.1} parent=1 // pred_region
      _
    $region5: #{pc_position_encoder.1} parent=1 // pred_fallthru
      _
    // Predicated region
    $region6: #{pc_position_encoder.1} parent=1 // pred_check
      _
    $region7: #{pc_position_encoder.1} parent=1 // pred_check_branch
      %20 = sbr.rel (0) target = $region9
    $region8: #{pc_position_encoder.1} parent=1 // pred_region
      _
    $region9: #{pc_position_encoder.1} parent=1 // pred_fallthru
      _
    // Predicated region
    $region10: #{pc_position_encoder.1} parent=1 // pred_check
      _
    $region11: #{pc_position_encoder.1} parent=1 // pred_check_branch
      %22 = sbr.rel (0) target = $region13
    $region12: #{pc_position_encoder.1} parent=1 // pred_region
      _
    $region13: #{pc_position_encoder.1} parent=1 // pred_fallthru
      _
    // Predicated region
    $region14: #{pc_position_encoder.1} parent=1 // pred_check
      _
    $region15: #{pc_position_encoder.1} parent=1 // pred_check_branch
      %24 = sbr.rel (0) target = $region17
    $region16: #{pc_position_encoder.1} parent=1 // pred_region
      %26 = vsyncadd [#allocation3], 0
      %s27 = sshll.u32 %s3, 4
      %s28 = int_to_ptr.hbm [resolvable:$true] %s27
      %s29 = sshll.u32 [#allocation2], 4
      %s30 = int_to_ptr.vmem [resolvable:$true] %s29
      %35 = dma.hbm_to_vmem [thread:$0]  %s28, 8192, %s30, [#allocation3], 256, 256, 16
    $region17: #{pc_position_encoder.1} parent=1 // pred_fallthru
      _
    // Predicated region
    $region18: #{pc_position_encoder.1} parent=1 // pred_check
      _
    $region19: #{pc_position_encoder.1} parent=1 // pred_check_branch
      %37 = sbr.rel (0) target = $region21
    $region20: #{pc_position_encoder.1} parent=1 // pred_region
      _
    $region21: #{pc_position_encoder.1} parent=1 // pred_fallthru
      _
    // Predicated region
    $region22: #{pc_position_encoder.1} parent=1 // pred_check
      _
    $region23: #{pc_position_encoder.1} parent=1 // pred_check_branch
      %39 = sbr.rel (0) target = $region25
    $region24: #{pc_position_encoder.1} parent=1 // pred_region
      %41 = vsyncadd [#allocation6], 0
      %s42 = sshll.u32 %s5, 4
      %s43 = int_to_ptr.hbm [resolvable:$true] %s42
      %s44 = sshll.u32 [#allocation5], 4
      %s45 = int_to_ptr.vmem [resolvable:$true] %s44
      %50 = dma.hbm_to_vmem [thread:$0]  %s43, 8192, %s45, [#allocation6], 256, 256, 16
    $region25: #{pc_position_encoder.1} parent=1 // pred_fallthru
      _
    // Predicated region
    $region26: #{pc_position_encoder.1} parent=1 // pred_check
      _
    $region27: #{pc_position_encoder.1} parent=1 // pred_check_branch
      %52 = sbr.rel (0) target = $region29
    $region28: #{pc_position_encoder.1} parent=1 // pred_region
      _
    $region29: #{pc_position_encoder.1} parent=1 // pred_fallthru
      _
    // Predicated region
    $region30: #{pc_position_encoder.1} parent=1 // pred_check
      _
    $region31: #{pc_position_encoder.1} parent=1 // pred_check_branch
      %54 = sbr.rel (0) target = $region33
    $region32: #{pc_position_encoder.1} parent=1 // pred_region
      %56 = vsyncadd [#allocation6], 0
      %s57 = sshll.u32 %s7, 4
      %s58 = int_to_ptr.hbm [resolvable:$true] %s57
      %s59 = sshll.u32 [#allocation7], 4
      %s60 = int_to_ptr.vmem [resolvable:$true] %s59
      %65 = dma.hbm_to_vmem [thread:$0]  %s58, 8192, %s60, [#allocation6], 256, 256, 16
    $region33: #{pc_position_encoder.1} parent=1 // pred_fallthru
      _
    // Predicated region
    $region34: #{pc_position_encoder.1} parent=1 // pred_check
      _
    $region35: #{pc_position_encoder.1} parent=1 // pred_check_branch
      %67 = sbr.rel (0) target = $region37
    $region36: #{pc_position_encoder.1} parent=1 // pred_region
      _
    $region37: #{pc_position_encoder.1} parent=1 // pred_fallthru
      _
    // Predicated region
    $region38: #{pc_position_encoder.1} parent=1 // pred_check
      _
    $region39: #{pc_position_encoder.1} parent=1 // pred_check_branch
      %69 = sbr.rel (0) target = $region41
    $region40: #{pc_position_encoder.1} parent=1 // pred_region
      %71 = dma.done [#allocation3], 8192
    $region41: #{pc_position_encoder.1} parent=1 // pred_fallthru
      _
    // Predicated region
    $region42: #{pc_position_encoder.1} parent=1 // pred_check
      _
    $region43: #{pc_position_encoder.1} parent=1 // pred_check_branch
      %73 = sbr.rel (0) target = $region45
    $region44: #{pc_position_encoder.1} parent=1 // pred_region
      %75 = dma.done [#allocation6], 8192
    $region45: #{pc_position_encoder.1} parent=1 // pred_fallthru
      _
    // Predicated region
    $region46: #{pc_position_encoder.1} parent=1 // pred_check
      _
    $region47: #{pc_position_encoder.1} parent=1 // pred_check_branch
      %77 = sbr.rel (0) target = $region49
    $region48: #{pc_position_encoder.1} parent=1 // pred_region
      %79 = dma.done [#allocation6], 8192
    $region49: #{pc_position_encoder.1} parent=1 // pred_fallthru
      _
    %v80 = vld [vmem:[%s0] sm:$0xff]
    %v81 = vld [vmem:[%s0 + $0x8] sm:$0xff]
    %v82 = vld [vmem:[%s0 + $0x10] sm:$0xff]
    %v83 = vld [vmem:[%s0 + $0x18] sm:$0xff]
    %v84 = vld [vmem:[%s0 + $0x20] sm:$0xff]
    %v85 = vld [vmem:[%s0 + $0x28] sm:$0xff]
    %v86 = vld [vmem:[%s0 + $0x30] sm:$0xff]
    %v87 = vld [vmem:[%s0 + $0x38] sm:$0xff]
    %v88 = vld [vmem:[%s0 + $0x40] sm:$0xff]
    %v89 = vld [vmem:[%s0 + $0x48] sm:$0xff]
    %v90 = vld [vmem:[%s0 + $0x50] sm:$0xff]
    %v91 = vld [vmem:[%s0 + $0x58] sm:$0xff]
    %v92 = vld [vmem:[%s0 + $0x60] sm:$0xff]
    %v93 = vld [vmem:[%s0 + $0x68] sm:$0xff]
    %v94 = vld [vmem:[%s0 + $0x70] sm:$0xff]
    %v95 = vld [vmem:[%s0 + $0x78] sm:$0xff]
    %v96 = vld [vmem:[%s1] sm:$0x77]
    %v97 = vld [vmem:[%s2] sm:$0x3]
    %99 = vset.pattern.permute.xlu0 0
    %100 = vperm.xlu0 %99, %v80
    %v101 = vpop.permute.xlu0 %100
    %104 = vset.pattern.permute.xlu0 0
    %105 = vperm.xlu0 %104, %v81
    %v106 = vpop.permute.xlu0 %105
    %109 = vset.pattern.permute.xlu0 0
    %110 = vperm.xlu0 %109, %v82
    %v111 = vpop.permute.xlu0 %110
    %114 = vset.pattern.permute.xlu0 0
    %115 = vperm.xlu0 %114, %v83
    %v116 = vpop.permute.xlu0 %115
    %119 = vset.pattern.permute.xlu0 0
    %120 = vperm.xlu0 %119, %v84
    %v121 = vpop.permute.xlu0 %120
    %124 = vset.pattern.permute.xlu0 0
    %125 = vperm.xlu0 %124, %v85
    %v126 = vpop.permute.xlu0 %125
    %129 = vset.pattern.permute.xlu0 0
    %130 = vperm.xlu0 %129, %v86
    %v131 = vpop.permute.xlu0 %130
    %134 = vset.pattern.permute.xlu0 0
    %135 = vperm.xlu0 %134, %v87
    %v136 = vpop.permute.xlu0 %135
    %139 = vset.pattern.permute.xlu0 0
    %140 = vperm.xlu0 %139, %v88
    %v141 = vpop.permute.xlu0 %140
    %144 = vset.pattern.permute.xlu0 0
    %145 = vperm.xlu0 %144, %v89
    %v146 = vpop.permute.xlu0 %145
    %149 = vset.pattern.permute.xlu0 0
    %150 = vperm.xlu0 %149, %v90
    %v151 = vpop.permute.xlu0 %150
    %154 = vset.pattern.permute.xlu0 0
    %155 = vperm.xlu0 %154, %v91
    %v156 = vpop.permute.xlu0 %155
    %159 = vset.pattern.permute.xlu0 0
    %160 = vperm.xlu0 %159, %v92
    %v161 = vpop.permute.xlu0 %160
    %164 = vset.pattern.permute.xlu0 0
    %165 = vperm.xlu0 %164, %v93
    %v166 = vpop.permute.xlu0 %165
    %169 = vset.pattern.permute.xlu0 0
    %170 = vperm.xlu0 %169, %v94
    %v171 = vpop.permute.xlu0 %170
    %174 = vset.pattern.permute.xlu0 0
    %175 = vperm.xlu0 %174, %v95
    %v176 = vpop.permute.xlu0 %175
    %v179 = vperm.slane %v96, 0
    %v180 = vperm.slane %v96, 4
    %v183 = vperm.slane %v179, 0
    %v184 = vperm.slane %v180, 0
    %v185 = vmul.f32 %v101, %v183
    %v186 = vmul.f32 %v101, %v184
    %v187 = vmul.f32 %v106, %v183
    %v188 = vmul.f32 %v106, %v184
    %v189 = vmul.f32 %v111, %v183
    %v190 = vmul.f32 %v111, %v184
    %v191 = vmul.f32 %v116, %v183
    %v192 = vmul.f32 %v116, %v184
    %v193 = vmul.f32 %v121, %v183
    %v194 = vmul.f32 %v121, %v184
    %v195 = vmul.f32 %v126, %v183
    %v196 = vmul.f32 %v126, %v184
    %v197 = vmul.f32 %v131, %v183
    %v198 = vmul.f32 %v131, %v184
    %v199 = vmul.f32 %v136, %v183
    %v200 = vmul.f32 %v136, %v184
    %v201 = vmul.f32 %v141, %v183
    %v202 = vmul.f32 %v141, %v184
    %v203 = vmul.f32 %v146, %v183
    %v204 = vmul.f32 %v146, %v184
    %v205 = vmul.f32 %v151, %v183
    %v206 = vmul.f32 %v151, %v184
    %v207 = vmul.f32 %v156, %v183
    %v208 = vmul.f32 %v156, %v184
    %v209 = vmul.f32 %v161, %v183
    %v210 = vmul.f32 %v161, %v184
    %v211 = vmul.f32 %v166, %v183
    %v212 = vmul.f32 %v166, %v184
    %v213 = vmul.f32 %v171, %v183
    %v214 = vmul.f32 %v171, %v184
    %v215 = vmul.f32 %v176, %v183
    %v216 = vmul.f32 %v176, %v184
    %v218 = vperm.slane %v97, 0
    %v219 = vperm.slane %v97, 1
    %v222 = vadd.f32 %v218, %v185
    %v223 = vadd.f32 %v219, %v186
    %v224 = vadd.f32 %v218, %v187
    %v225 = vadd.f32 %v219, %v188
    %v226 = vadd.f32 %v218, %v189
    %v227 = vadd.f32 %v219, %v190
    %v228 = vadd.f32 %v218, %v191
    %v229 = vadd.f32 %v219, %v192
    %v230 = vadd.f32 %v218, %v193
    %v231 = vadd.f32 %v219, %v194
    %v232 = vadd.f32 %v218, %v195
    %v233 = vadd.f32 %v219, %v196
    %v234 = vadd.f32 %v218, %v197
    %v235 = vadd.f32 %v219, %v198
    %v236 = vadd.f32 %v218, %v199
    %v237 = vadd.f32 %v219, %v200
    %v238 = vadd.f32 %v218, %v201
    %v239 = vadd.f32 %v219, %v202
    %v240 = vadd.f32 %v218, %v203
    %v241 = vadd.f32 %v219, %v204
    %v242 = vadd.f32 %v218, %v205
    %v243 = vadd.f32 %v219, %v206
    %v244 = vadd.f32 %v218, %v207
    %v245 = vadd.f32 %v219, %v208
    %v246 = vadd.f32 %v218, %v209
    %v247 = vadd.f32 %v219, %v210
    %v248 = vadd.f32 %v218, %v211
    %v249 = vadd.f32 %v219, %v212
    %v250 = vadd.f32 %v218, %v213
    %v251 = vadd.f32 %v219, %v214
    %v252 = vadd.f32 %v218, %v215
    %v253 = vadd.f32 %v219, %v216
    %254 = vset.pattern.permute.xlu0 1
    %255 = vperm.xlu0 %254, %v80
    %v256 = vpop.permute.xlu0 %255
    %258 = vset.pattern.permute.xlu0 1
    %259 = vperm.xlu0 %258, %v81
    %v260 = vpop.permute.xlu0 %259
    %262 = vset.pattern.permute.xlu0 1
    %263 = vperm.xlu0 %262, %v82
    %v264 = vpop.permute.xlu0 %263
    %266 = vset.pattern.permute.xlu0 1
    %267 = vperm.xlu0 %266, %v83
    %v268 = vpop.permute.xlu0 %267
    %270 = vset.pattern.permute.xlu0 1
    %271 = vperm.xlu0 %270, %v84
    %v272 = vpop.permute.xlu0 %271
    %274 = vset.pattern.permute.xlu0 1
    %275 = vperm.xlu0 %274, %v85
    %v276 = vpop.permute.xlu0 %275
    %278 = vset.pattern.permute.xlu0 1
    %279 = vperm.xlu0 %278, %v86
    %v280 = vpop.permute.xlu0 %279
    %282 = vset.pattern.permute.xlu0 1
    %283 = vperm.xlu0 %282, %v87
    %v284 = vpop.permute.xlu0 %283
    %286 = vset.pattern.permute.xlu0 1
    %287 = vperm.xlu0 %286, %v88
    %v288 = vpop.permute.xlu0 %287
    %290 = vset.pattern.permute.xlu0 1
    %291 = vperm.xlu0 %290, %v89
    %v292 = vpop.permute.xlu0 %291
    %294 = vset.pattern.permute.xlu0 1
    %295 = vperm.xlu0 %294, %v90
    %v296 = vpop.permute.xlu0 %295
    %298 = vset.pattern.permute.xlu0 1
    %299 = vperm.xlu0 %298, %v91
    %v300 = vpop.permute.xlu0 %299
    %302 = vset.pattern.permute.xlu0 1
    %303 = vperm.xlu0 %302, %v92
    %v304 = vpop.permute.xlu0 %303
    %306 = vset.pattern.permute.xlu0 1
    %307 = vperm.xlu0 %306, %v93
    %v308 = vpop.permute.xlu0 %307
    %310 = vset.pattern.permute.xlu0 1
    %311 = vperm.xlu0 %310, %v94
    %v312 = vpop.permute.xlu0 %311
    %314 = vset.pattern.permute.xlu0 1
    %315 = vperm.xlu0 %314, %v95
    %v316 = vpop.permute.xlu0 %315
    %v318 = vperm.slane %v96, 1
    %v319 = vperm.slane %v96, 5
    %v322 = vperm.slane %v318, 1
    %v323 = vperm.slane %v319, 1
    %v324 = vmul.f32 %v256, %v322
    %v325 = vmul.f32 %v256, %v323
    %v326 = vmul.f32 %v260, %v322
    %v327 = vmul.f32 %v260, %v323
    %v328 = vmul.f32 %v264, %v322
    %v329 = vmul.f32 %v264, %v323
    %v330 = vmul.f32 %v268, %v322
    %v331 = vmul.f32 %v268, %v323
    %v332 = vmul.f32 %v272, %v322
    %v333 = vmul.f32 %v272, %v323
    %v334 = vmul.f32 %v276, %v322
    %v335 = vmul.f32 %v276, %v323
    %v336 = vmul.f32 %v280, %v322
    %v337 = vmul.f32 %v280, %v323
    %v338 = vmul.f32 %v284, %v322
    %v339 = vmul.f32 %v284, %v323
    %v340 = vmul.f32 %v288, %v322
    %v341 = vmul.f32 %v288, %v323
    %v342 = vmul.f32 %v292, %v322
    %v343 = vmul.f32 %v292, %v323
    %v344 = vmul.f32 %v296, %v322
    %v345 = vmul.f32 %v296, %v323
    %v346 = vmul.f32 %v300, %v322
    %v347 = vmul.f32 %v300, %v323
    %v348 = vmul.f32 %v304, %v322
    %v349 = vmul.f32 %v304, %v323
    %v350 = vmul.f32 %v308, %v322
    %v351 = vmul.f32 %v308, %v323
    %v352 = vmul.f32 %v312, %v322
    %v353 = vmul.f32 %v312, %v323
    %v354 = vmul.f32 %v316, %v322
    %v355 = vmul.f32 %v316, %v323
    %v356 = vadd.f32 %v222, %v324
    %v357 = vadd.f32 %v223, %v325
    %v358 = vadd.f32 %v224, %v326
    %v359 = vadd.f32 %v225, %v327
    %v360 = vadd.f32 %v226, %v328
    %v361 = vadd.f32 %v227, %v329
    %v362 = vadd.f32 %v228, %v330
    %v363 = vadd.f32 %v229, %v331
    %v364 = vadd.f32 %v230, %v332
    %v365 = vadd.f32 %v231, %v333
    %v366 = vadd.f32 %v232, %v334
    %v367 = vadd.f32 %v233, %v335
    %v368 = vadd.f32 %v234, %v336
    %v369 = vadd.f32 %v235, %v337
    %v370 = vadd.f32 %v236, %v338
    %v371 = vadd.f32 %v237, %v339
    %v372 = vadd.f32 %v238, %v340
    %v373 = vadd.f32 %v239, %v341
    %v374 = vadd.f32 %v240, %v342
    %v375 = vadd.f32 %v241, %v343
    %v376 = vadd.f32 %v242, %v344
    %v377 = vadd.f32 %v243, %v345
    %v378 = vadd.f32 %v244, %v346
    %v379 = vadd.f32 %v245, %v347
    %v380 = vadd.f32 %v246, %v348
    %v381 = vadd.f32 %v247, %v349
    %v382 = vadd.f32 %v248, %v350
    %v383 = vadd.f32 %v249, %v351
    %v384 = vadd.f32 %v250, %v352
    %v385 = vadd.f32 %v251, %v353
    %v386 = vadd.f32 %v252, %v354
    %v387 = vadd.f32 %v253, %v355
    %388 = vset.pattern.permute.xlu0 2
    %389 = vperm.xlu0 %388, %v80
    %v390 = vpop.permute.xlu0 %389
    %392 = vset.pattern.permute.xlu0 2
    %393 = vperm.xlu0 %392, %v81
    %v394 = vpop.permute.xlu0 %393
    %396 = vset.pattern.permute.xlu0 2
    %397 = vperm.xlu0 %396, %v82
    %v398 = vpop.permute.xlu0 %397
    %400 = vset.pattern.permute.xlu0 2
    %401 = vperm.xlu0 %400, %v83
    %v402 = vpop.permute.xlu0 %401
    %404 = vset.pattern.permute.xlu0 2
    %405 = vperm.xlu0 %404, %v84
    %v406 = vpop.permute.xlu0 %405
    %408 = vset.pattern.permute.xlu0 2
    %409 = vperm.xlu0 %408, %v85
    %v410 = vpop.permute.xlu0 %409
    %412 = vset.pattern.permute.xlu0 2
    %413 = vperm.xlu0 %412, %v86
    %v414 = vpop.permute.xlu0 %413
    %416 = vset.pattern.permute.xlu0 2
    %417 = vperm.xlu0 %416, %v87
    %v418 = vpop.permute.xlu0 %417
    %420 = vset.pattern.permute.xlu0 2
    %421 = vperm.xlu0 %420, %v88
    %v422 = vpop.permute.xlu0 %421
    %424 = vset.pattern.permute.xlu0 2
    %425 = vperm.xlu0 %424, %v89
    %v426 = vpop.permute.xlu0 %425
    %428 = vset.pattern.permute.xlu0 2
    %429 = vperm.xlu0 %428, %v90
    %v430 = vpop.permute.xlu0 %429
    %432 = vset.pattern.permute.xlu0 2
    %433 = vperm.xlu0 %432, %v91
    %v434 = vpop.permute.xlu0 %433
    %436 = vset.pattern.permute.xlu0 2
    %437 = vperm.xlu0 %436, %v92
    %v438 = vpop.permute.xlu0 %437
    %440 = vset.pattern.permute.xlu0 2
    %441 = vperm.xlu0 %440, %v93
    %v442 = vpop.permute.xlu0 %441
    %444 = vset.pattern.permute.xlu0 2
    %445 = vperm.xlu0 %444, %v94
    %v446 = vpop.permute.xlu0 %445
    %448 = vset.pattern.permute.xlu0 2
    %449 = vperm.xlu0 %448, %v95
    %v450 = vpop.permute.xlu0 %449
    %v452 = vperm.slane %v96, 2
    %v453 = vperm.slane %v96, 6
    %v456 = vperm.slane %v452, 2
    %v457 = vperm.slane %v453, 2
    %v458 = vmul.f32 %v390, %v456
    %v459 = vmul.f32 %v390, %v457
    %v460 = vmul.f32 %v394, %v456
    %v461 = vmul.f32 %v394, %v457
    %v462 = vmul.f32 %v398, %v456
    %v463 = vmul.f32 %v398, %v457
    %v464 = vmul.f32 %v402, %v456
    %v465 = vmul.f32 %v402, %v457
    %v466 = vmul.f32 %v406, %v456
    %v467 = vmul.f32 %v406, %v457
    %v468 = vmul.f32 %v410, %v456
    %v469 = vmul.f32 %v410, %v457
    %v470 = vmul.f32 %v414, %v456
    %v471 = vmul.f32 %v414, %v457
    %v472 = vmul.f32 %v418, %v456
    %v473 = vmul.f32 %v418, %v457
    %v474 = vmul.f32 %v422, %v456
    %v475 = vmul.f32 %v422, %v457
    %v476 = vmul.f32 %v426, %v456
    %v477 = vmul.f32 %v426, %v457
    %v478 = vmul.f32 %v430, %v456
    %v479 = vmul.f32 %v430, %v457
    %v480 = vmul.f32 %v434, %v456
    %v481 = vmul.f32 %v434, %v457
    %v482 = vmul.f32 %v438, %v456
    %v483 = vmul.f32 %v438, %v457
    %v484 = vmul.f32 %v442, %v456
    %v485 = vmul.f32 %v442, %v457
    %v486 = vmul.f32 %v446, %v456
    %v487 = vmul.f32 %v446, %v457
    %v488 = vmul.f32 %v450, %v456
    %v489 = vmul.f32 %v450, %v457
    %v490 = vadd.f32 %v356, %v458
    %v491 = vadd.f32 %v357, %v459
    %v492 = vadd.f32 %v358, %v460
    %v493 = vadd.f32 %v359, %v461
    %v494 = vadd.f32 %v360, %v462
    %v495 = vadd.f32 %v361, %v463
    %v496 = vadd.f32 %v362, %v464
    %v497 = vadd.f32 %v363, %v465
    %v498 = vadd.f32 %v364, %v466
    %v499 = vadd.f32 %v365, %v467
    %v500 = vadd.f32 %v366, %v468
    %v501 = vadd.f32 %v367, %v469
    %v502 = vadd.f32 %v368, %v470
    %v503 = vadd.f32 %v369, %v471
    %v504 = vadd.f32 %v370, %v472
    %v505 = vadd.f32 %v371, %v473
    %v506 = vadd.f32 %v372, %v474
    %v507 = vadd.f32 %v373, %v475
    %v508 = vadd.f32 %v374, %v476
    %v509 = vadd.f32 %v375, %v477
    %v510 = vadd.f32 %v376, %v478
    %v511 = vadd.f32 %v377, %v479
    %v512 = vadd.f32 %v378, %v480
    %v513 = vadd.f32 %v379, %v481
    %v514 = vadd.f32 %v380, %v482
    %v515 = vadd.f32 %v381, %v483
    %v516 = vadd.f32 %v382, %v484
    %v517 = vadd.f32 %v383, %v485
    %v518 = vadd.f32 %v384, %v486
    %v519 = vadd.f32 %v385, %v487
    %v520 = vadd.f32 %v386, %v488
    %v521 = vadd.f32 %v387, %v489
    %v522 = vmin.f32 %v490, 20.0
    %v523 = vmin.f32 %v491, 20.0
    %v524 = vmin.f32 %v492, 20.0
    %v525 = vmin.f32 %v493, 20.0
    %v526 = vmin.f32 %v494, 20.0
    %v527 = vmin.f32 %v495, 20.0
    %v528 = vmin.f32 %v496, 20.0
    %v529 = vmin.f32 %v497, 20.0
    %v530 = vmin.f32 %v498, 20.0
    %v531 = vmin.f32 %v499, 20.0
    %v532 = vmin.f32 %v500, 20.0
    %v533 = vmin.f32 %v501, 20.0
    %v534 = vmin.f32 %v502, 20.0
    %v535 = vmin.f32 %v503, 20.0
    %v536 = vmin.f32 %v504, 20.0
    %v537 = vmin.f32 %v505, 20.0
    %v538 = vmin.f32 %v506, 20.0
    %v539 = vmin.f32 %v507, 20.0
    %v540 = vmin.f32 %v508, 20.0
    %v541 = vmin.f32 %v509, 20.0
    %v542 = vmin.f32 %v510, 20.0
    %v543 = vmin.f32 %v511, 20.0
    %v544 = vmin.f32 %v512, 20.0
    %v545 = vmin.f32 %v513, 20.0
    %v546 = vmin.f32 %v514, 20.0
    %v547 = vmin.f32 %v515, 20.0
    %v548 = vmin.f32 %v516, 20.0
    %v549 = vmin.f32 %v517, 20.0
    %v550 = vmin.f32 %v518, 20.0
    %v551 = vmin.f32 %v519, 20.0
    %v552 = vmin.f32 %v520, 20.0
    %v553 = vmin.f32 %v521, 20.0
    %v554 = vmul.f32 %v522, 1.442695
    %v555 = vpow.pop %v554
    %v556 = vmul.f32 %v523, 1.442695
    %v557 = vpow.pop %v556
    %v558 = vmul.f32 %v524, 1.442695
    %v559 = vpow.pop %v558
    %v560 = vmul.f32 %v525, 1.442695
    %v561 = vpow.pop %v560
    %v562 = vmul.f32 %v526, 1.442695
    %v563 = vpow.pop %v562
    %v564 = vmul.f32 %v527, 1.442695
    %v565 = vpow.pop %v564
    %v566 = vmul.f32 %v528, 1.442695
    %v567 = vpow.pop %v566
    %v568 = vmul.f32 %v529, 1.442695
    %v569 = vpow.pop %v568
    %v570 = vmul.f32 %v530, 1.442695
    %v571 = vpow.pop %v570
    %v572 = vmul.f32 %v531, 1.442695
    %v573 = vpow.pop %v572
    %v574 = vmul.f32 %v532, 1.442695
    %v575 = vpow.pop %v574
    %v576 = vmul.f32 %v533, 1.442695
    %v577 = vpow.pop %v576
    %v578 = vmul.f32 %v534, 1.442695
    %v579 = vpow.pop %v578
    %v580 = vmul.f32 %v535, 1.442695
    %v581 = vpow.pop %v580
    %v582 = vmul.f32 %v536, 1.442695
    %v583 = vpow.pop %v582
    %v584 = vmul.f32 %v537, 1.442695
    %v585 = vpow.pop %v584
    %v586 = vmul.f32 %v538, 1.442695
    %v587 = vpow.pop %v586
    %v588 = vmul.f32 %v539, 1.442695
    %v589 = vpow.pop %v588
    %v590 = vmul.f32 %v540, 1.442695
    %v591 = vpow.pop %v590
    %v592 = vmul.f32 %v541, 1.442695
    %v593 = vpow.pop %v592
    %v594 = vmul.f32 %v542, 1.442695
    %v595 = vpow.pop %v594
    %v596 = vmul.f32 %v543, 1.442695
    %v597 = vpow.pop %v596
    %v598 = vmul.f32 %v544, 1.442695
    %v599 = vpow.pop %v598
    %v600 = vmul.f32 %v545, 1.442695
    %v601 = vpow.pop %v600
    %v602 = vmul.f32 %v546, 1.442695
    %v603 = vpow.pop %v602
    %v604 = vmul.f32 %v547, 1.442695
    %v605 = vpow.pop %v604
    %v606 = vmul.f32 %v548, 1.442695
    %v607 = vpow.pop %v606
    %v608 = vmul.f32 %v549, 1.442695
    %v609 = vpow.pop %v608
    %v610 = vmul.f32 %v550, 1.442695
    %v611 = vpow.pop %v610
    %v612 = vmul.f32 %v551, 1.442695
    %v613 = vpow.pop %v612
    %v614 = vmul.f32 %v552, 1.442695
    %v615 = vpow.pop %v614
    %v616 = vmul.f32 %v553, 1.442695
    %v617 = vpow.pop %v616
    %v618 = vadd.f32 %v555, 2.0
    %v619 = vadd.f32 %v557, 2.0
    %v620 = vadd.f32 %v559, 2.0
    %v621 = vadd.f32 %v561, 2.0
    %v622 = vadd.f32 %v563, 2.0
    %v623 = vadd.f32 %v565, 2.0
    %v624 = vadd.f32 %v567, 2.0
    %v625 = vadd.f32 %v569, 2.0
    %v626 = vadd.f32 %v571, 2.0
    %v627 = vadd.f32 %v573, 2.0
    %v628 = vadd.f32 %v575, 2.0
    %v629 = vadd.f32 %v577, 2.0
    %v630 = vadd.f32 %v579, 2.0
    %v631 = vadd.f32 %v581, 2.0
    %v632 = vadd.f32 %v583, 2.0
    %v633 = vadd.f32 %v585, 2.0
    %v634 = vadd.f32 %v587, 2.0
    %v635 = vadd.f32 %v589, 2.0
    %v636 = vadd.f32 %v591, 2.0
    %v637 = vadd.f32 %v593, 2.0
    %v638 = vadd.f32 %v595, 2.0
    %v639 = vadd.f32 %v597, 2.0
    %v640 = vadd.f32 %v599, 2.0
    %v641 = vadd.f32 %v601, 2.0
    %v642 = vadd.f32 %v603, 2.0
    %v643 = vadd.f32 %v605, 2.0
    %v644 = vadd.f32 %v607, 2.0
    %v645 = vadd.f32 %v609, 2.0
    %v646 = vadd.f32 %v611, 2.0
    %v647 = vadd.f32 %v613, 2.0
    %v648 = vadd.f32 %v615, 2.0
    %v649 = vadd.f32 %v617, 2.0
    %v650 = vmul.f32 %v555, %v618
    %v651 = vmul.f32 %v557, %v619
    %v652 = vmul.f32 %v559, %v620
    %v653 = vmul.f32 %v561, %v621
    %v654 = vmul.f32 %v563, %v622
    %v655 = vmul.f32 %v565, %v623
    %v656 = vmul.f32 %v567, %v624
    %v657 = vmul.f32 %v569, %v625
    %v658 = vmul.f32 %v571, %v626
    %v659 = vmul.f32 %v573, %v627
    %v660 = vmul.f32 %v575, %v628
    %v661 = vmul.f32 %v577, %v629
    %v662 = vmul.f32 %v579, %v630
    %v663 = vmul.f32 %v581, %v631
    %v664 = vmul.f32 %v583, %v632
    %v665 = vmul.f32 %v585, %v633
    %v666 = vmul.f32 %v587, %v634
    %v667 = vmul.f32 %v589, %v635
    %v668 = vmul.f32 %v591, %v636
    %v669 = vmul.f32 %v593, %v637
    %v670 = vmul.f32 %v595, %v638
    %v671 = vmul.f32 %v597, %v639
    %v672 = vmul.f32 %v599, %v640
    %v673 = vmul.f32 %v601, %v641
    %v674 = vmul.f32 %v603, %v642
    %v675 = vmul.f32 %v605, %v643
    %v676 = vmul.f32 %v607, %v644
    %v677 = vmul.f32 %v609, %v645
    %v678 = vmul.f32 %v611, %v646
    %v679 = vmul.f32 %v613, %v647
    %v680 = vmul.f32 %v615, %v648
    %v681 = vmul.f32 %v617, %v649
    %v682 = vadd.f32 %v650, 2.0
    %v683 = vadd.f32 %v651, 2.0
    %v684 = vadd.f32 %v652, 2.0
    %v685 = vadd.f32 %v653, 2.0
    %v686 = vadd.f32 %v654, 2.0
    %v687 = vadd.f32 %v655, 2.0
    %v688 = vadd.f32 %v656, 2.0
    %v689 = vadd.f32 %v657, 2.0
    %v690 = vadd.f32 %v658, 2.0
    %v691 = vadd.f32 %v659, 2.0
    %v692 = vadd.f32 %v660, 2.0
    %v693 = vadd.f32 %v661, 2.0
    %v694 = vadd.f32 %v662, 2.0
    %v695 = vadd.f32 %v663, 2.0
    %v696 = vadd.f32 %v664, 2.0
    %v697 = vadd.f32 %v665, 2.0
    %v698 = vadd.f32 %v666, 2.0
    %v699 = vadd.f32 %v667, 2.0
    %v700 = vadd.f32 %v668, 2.0
    %v701 = vadd.f32 %v669, 2.0
    %v702 = vadd.f32 %v670, 2.0
    %v703 = vadd.f32 %v671, 2.0
    %v704 = vadd.f32 %v672, 2.0
    %v705 = vadd.f32 %v673, 2.0
    %v706 = vadd.f32 %v674, 2.0
    %v707 = vadd.f32 %v675, 2.0
    %v708 = vadd.f32 %v676, 2.0
    %v709 = vadd.f32 %v677, 2.0
    %v710 = vadd.f32 %v678, 2.0
    %v711 = vadd.f32 %v679, 2.0
    %v712 = vadd.f32 %v680, 2.0
    %v713 = vadd.f32 %v681, 2.0
    %v714 = vrcp.pop %v682
    %v715 = vmul.f32 %v682, %v714
    %v716 = vsub.f32 1.0, %v715
    %v717 = vmul.f32 %v714, %v716
    %v718 = vadd.f32 %v714, %v717
    %vm719 = vweird.f32 %v682
    %vm720 = vweird.f32 %v714
    %vm721 = vmor %vm719, %vm720
    %v722 = vsel %vm721, %v714, %v718
    %v723 = vand.u32 2147483647, %v682
    %vm724 = vcmp.eq.f32.partialorder %v723, 8.507059e+37
    %v725 = vand.u32 %v682, 2147483648
    %v726 = vor.u32 1.1754944e-38, %v725
    %v727 = vsel %vm724, %v726, %v722
    %v728 = vmul.f32 %v650, %v727
    %v729 = vrcp.pop %v683
    %v730 = vmul.f32 %v683, %v729
    %v731 = vsub.f32 1.0, %v730
    %v732 = vmul.f32 %v729, %v731
    %v733 = vadd.f32 %v729, %v732
    %vm734 = vweird.f32 %v683
    %vm735 = vweird.f32 %v729
    %vm736 = vmor %vm734, %vm735
    %v737 = vsel %vm736, %v729, %v733
    %v738 = vand.u32 2147483647, %v683
    %vm739 = vcmp.eq.f32.partialorder %v738, 8.507059e+37
    %v740 = vand.u32 %v683, 2147483648
    %v741 = vor.u32 1.1754944e-38, %v740
    %v742 = vsel %vm739, %v741, %v737
    %v743 = vmul.f32 %v651, %v742
    %v744 = vrcp.pop %v684
    %v745 = vmul.f32 %v684, %v744
    %v746 = vsub.f32 1.0, %v745
    %v747 = vmul.f32 %v744, %v746
    %v748 = vadd.f32 %v744, %v747
    %vm749 = vweird.f32 %v684
    %vm750 = vweird.f32 %v744
    %vm751 = vmor %vm749, %vm750
    %v752 = vsel %vm751, %v744, %v748
    %v753 = vand.u32 2147483647, %v684
    %vm754 = vcmp.eq.f32.partialorder %v753, 8.507059e+37
    %v755 = vand.u32 %v684, 2147483648
    %v756 = vor.u32 1.1754944e-38, %v755
    %v757 = vsel %vm754, %v756, %v752
    %v758 = vmul.f32 %v652, %v757
    %v759 = vrcp.pop %v685
    %v760 = vmul.f32 %v685, %v759
    %v761 = vsub.f32 1.0, %v760
    %v762 = vmul.f32 %v759, %v761
    %v763 = vadd.f32 %v759, %v762
    %vm764 = vweird.f32 %v685
    %vm765 = vweird.f32 %v759
    %vm766 = vmor %vm764, %vm765
    %v767 = vsel %vm766, %v759, %v763
    %v768 = vand.u32 2147483647, %v685
    %vm769 = vcmp.eq.f32.partialorder %v768, 8.507059e+37
    %v770 = vand.u32 %v685, 2147483648
    %v771 = vor.u32 1.1754944e-38, %v770
    %v772 = vsel %vm769, %v771, %v767
    %v773 = vmul.f32 %v653, %v772
    %v774 = vrcp.pop %v686
    %v775 = vmul.f32 %v686, %v774
    %v776 = vsub.f32 1.0, %v775
    %v777 = vmul.f32 %v774, %v776
    %v778 = vadd.f32 %v774, %v777
    %vm779 = vweird.f32 %v686
    %vm780 = vweird.f32 %v774
    %vm781 = vmor %vm779, %vm780
    %v782 = vsel %vm781, %v774, %v778
    %v783 = vand.u32 2147483647, %v686
    %vm784 = vcmp.eq.f32.partialorder %v783, 8.507059e+37
    %v785 = vand.u32 %v686, 2147483648
    %v786 = vor.u32 1.1754944e-38, %v785
    %v787 = vsel %vm784, %v786, %v782
    %v788 = vmul.f32 %v654, %v787
    %v789 = vrcp.pop %v687
    %v790 = vmul.f32 %v687, %v789
    %v791 = vsub.f32 1.0, %v790
    %v792 = vmul.f32 %v789, %v791
    %v793 = vadd.f32 %v789, %v792
    %vm794 = vweird.f32 %v687
    %vm795 = vweird.f32 %v789
    %vm796 = vmor %vm794, %vm795
    %v797 = vsel %vm796, %v789, %v793
    %v798 = vand.u32 2147483647, %v687
    %vm799 = vcmp.eq.f32.partialorder %v798, 8.507059e+37
    %v800 = vand.u32 %v687, 2147483648
    %v801 = vor.u32 1.1754944e-38, %v800
    %v802 = vsel %vm799, %v801, %v797
    %v803 = vmul.f32 %v655, %v802
    %v804 = vrcp.pop %v688
    %v805 = vmul.f32 %v688, %v804
    %v806 = vsub.f32 1.0, %v805
    %v807 = vmul.f32 %v804, %v806
    %v808 = vadd.f32 %v804, %v807
    %vm809 = vweird.f32 %v688
    %vm810 = vweird.f32 %v804
    %vm811 = vmor %vm809, %vm810
    %v812 = vsel %vm811, %v804, %v808
    %v813 = vand.u32 2147483647, %v688
    %vm814 = vcmp.eq.f32.partialorder %v813, 8.507059e+37
    %v815 = vand.u32 %v688, 2147483648
    %v816 = vor.u32 1.1754944e-38, %v815
    %v817 = vsel %vm814, %v816, %v812
    %v818 = vmul.f32 %v656, %v817
    %v819 = vrcp.pop %v689
    %v820 = vmul.f32 %v689, %v819
    %v821 = vsub.f32 1.0, %v820
    %v822 = vmul.f32 %v819, %v821
    %v823 = vadd.f32 %v819, %v822
    %vm824 = vweird.f32 %v689
    %vm825 = vweird.f32 %v819
    %vm826 = vmor %vm824, %vm825
    %v827 = vsel %vm826, %v819, %v823
    %v828 = vand.u32 2147483647, %v689
    %vm829 = vcmp.eq.f32.partialorder %v828, 8.507059e+37
    %v830 = vand.u32 %v689, 2147483648
    %v831 = vor.u32 1.1754944e-38, %v830
    %v832 = vsel %vm829, %v831, %v827
    %v833 = vmul.f32 %v657, %v832
    %v834 = vrcp.pop %v690
    %v835 = vmul.f32 %v690, %v834
    %v836 = vsub.f32 1.0, %v835
    %v837 = vmul.f32 %v834, %v836
    %v838 = vadd.f32 %v834, %v837
    %vm839 = vweird.f32 %v690
    %vm840 = vweird.f32 %v834
    %vm841 = vmor %vm839, %vm840
    %v842 = vsel %vm841, %v834, %v838
    %v843 = vand.u32 2147483647, %v690
    %vm844 = vcmp.eq.f32.partialorder %v843, 8.507059e+37
    %v845 = vand.u32 %v690, 2147483648
    %v846 = vor.u32 1.1754944e-38, %v845
    %v847 = vsel %vm844, %v846, %v842
    %v848 = vmul.f32 %v658, %v847
    %v849 = vrcp.pop %v691
    %v850 = vmul.f32 %v691, %v849
    %v851 = vsub.f32 1.0, %v850
    %v852 = vmul.f32 %v849, %v851
    %v853 = vadd.f32 %v849, %v852
    %vm854 = vweird.f32 %v691
    %vm855 = vweird.f32 %v849
    %vm856 = vmor %vm854, %vm855
    %v857 = vsel %vm856, %v849, %v853
    %v858 = vand.u32 2147483647, %v691
    %vm859 = vcmp.eq.f32.partialorder %v858, 8.507059e+37
    %v860 = vand.u32 %v691, 2147483648
    %v861 = vor.u32 1.1754944e-38, %v860
    %v862 = vsel %vm859, %v861, %v857
    %v863 = vmul.f32 %v659, %v862
    %v864 = vrcp.pop %v692
    %v865 = vmul.f32 %v692, %v864
    %v866 = vsub.f32 1.0, %v865
    %v867 = vmul.f32 %v864, %v866
    %v868 = vadd.f32 %v864, %v867
    %vm869 = vweird.f32 %v692
    %vm870 = vweird.f32 %v864
    %vm871 = vmor %vm869, %vm870
    %v872 = vsel %vm871, %v864, %v868
    %v873 = vand.u32 2147483647, %v692
    %vm874 = vcmp.eq.f32.partialorder %v873, 8.507059e+37
    %v875 = vand.u32 %v692, 2147483648
    %v876 = vor.u32 1.1754944e-38, %v875
    %v877 = vsel %vm874, %v876, %v872
    %v878 = vmul.f32 %v660, %v877
    %v879 = vrcp.pop %v693
    %v880 = vmul.f32 %v693, %v879
    %v881 = vsub.f32 1.0, %v880
    %v882 = vmul.f32 %v879, %v881
    %v883 = vadd.f32 %v879, %v882
    %vm884 = vweird.f32 %v693
    %vm885 = vweird.f32 %v879
    %vm886 = vmor %vm884, %vm885
    %v887 = vsel %vm886, %v879, %v883
    %v888 = vand.u32 2147483647, %v693
    %vm889 = vcmp.eq.f32.partialorder %v888, 8.507059e+37
    %v890 = vand.u32 %v693, 2147483648
    %v891 = vor.u32 1.1754944e-38, %v890
    %v892 = vsel %vm889, %v891, %v887
    %v893 = vmul.f32 %v661, %v892
    %v894 = vrcp.pop %v694
    %v895 = vmul.f32 %v694, %v894
    %v896 = vsub.f32 1.0, %v895
    %v897 = vmul.f32 %v894, %v896
    %v898 = vadd.f32 %v894, %v897
    %vm899 = vweird.f32 %v694
    %vm900 = vweird.f32 %v894
    %vm901 = vmor %vm899, %vm900
    %v902 = vsel %vm901, %v894, %v898
    %v903 = vand.u32 2147483647, %v694
    %vm904 = vcmp.eq.f32.partialorder %v903, 8.507059e+37
    %v905 = vand.u32 %v694, 2147483648
    %v906 = vor.u32 1.1754944e-38, %v905
    %v907 = vsel %vm904, %v906, %v902
    %v908 = vmul.f32 %v662, %v907
    %v909 = vrcp.pop %v695
    %v910 = vmul.f32 %v695, %v909
    %v911 = vsub.f32 1.0, %v910
    %v912 = vmul.f32 %v909, %v911
    %v913 = vadd.f32 %v909, %v912
    %vm914 = vweird.f32 %v695
    %vm915 = vweird.f32 %v909
    %vm916 = vmor %vm914, %vm915
    %v917 = vsel %vm916, %v909, %v913
    %v918 = vand.u32 2147483647, %v695
    %vm919 = vcmp.eq.f32.partialorder %v918, 8.507059e+37
    %v920 = vand.u32 %v695, 2147483648
    %v921 = vor.u32 1.1754944e-38, %v920
    %v922 = vsel %vm919, %v921, %v917
    %v923 = vmul.f32 %v663, %v922
    %v924 = vrcp.pop %v696
    %v925 = vmul.f32 %v696, %v924
    %v926 = vsub.f32 1.0, %v925
    %v927 = vmul.f32 %v924, %v926
    %v928 = vadd.f32 %v924, %v927
    %vm929 = vweird.f32 %v696
    %vm930 = vweird.f32 %v924
    %vm931 = vmor %vm929, %vm930
    %v932 = vsel %vm931, %v924, %v928
    %v933 = vand.u32 2147483647, %v696
    %vm934 = vcmp.eq.f32.partialorder %v933, 8.507059e+37
    %v935 = vand.u32 %v696, 2147483648
    %v936 = vor.u32 1.1754944e-38, %v935
    %v937 = vsel %vm934, %v936, %v932
    %v938 = vmul.f32 %v664, %v937
    %v939 = vrcp.pop %v697
    %v940 = vmul.f32 %v697, %v939
    %v941 = vsub.f32 1.0, %v940
    %v942 = vmul.f32 %v939, %v941
    %v943 = vadd.f32 %v939, %v942
    %vm944 = vweird.f32 %v697
    %vm945 = vweird.f32 %v939
    %vm946 = vmor %vm944, %vm945
    %v947 = vsel %vm946, %v939, %v943
    %v948 = vand.u32 2147483647, %v697
    %vm949 = vcmp.eq.f32.partialorder %v948, 8.507059e+37
    %v950 = vand.u32 %v697, 2147483648
    %v951 = vor.u32 1.1754944e-38, %v950
    %v952 = vsel %vm949, %v951, %v947
    %v953 = vmul.f32 %v665, %v952
    %v954 = vrcp.pop %v698
    %v955 = vmul.f32 %v698, %v954
    %v956 = vsub.f32 1.0, %v955
    %v957 = vmul.f32 %v954, %v956
    %v958 = vadd.f32 %v954, %v957
    %vm959 = vweird.f32 %v698
    %vm960 = vweird.f32 %v954
    %vm961 = vmor %vm959, %vm960
    %v962 = vsel %vm961, %v954, %v958
    %v963 = vand.u32 2147483647, %v698
    %vm964 = vcmp.eq.f32.partialorder %v963, 8.507059e+37
    %v965 = vand.u32 %v698, 2147483648
    %v966 = vor.u32 1.1754944e-38, %v965
    %v967 = vsel %vm964, %v966, %v962
    %v968 = vmul.f32 %v666, %v967
    %v969 = vrcp.pop %v699
    %v970 = vmul.f32 %v699, %v969
    %v971 = vsub.f32 1.0, %v970
    %v972 = vmul.f32 %v969, %v971
    %v973 = vadd.f32 %v969, %v972
    %vm974 = vweird.f32 %v699
    %vm975 = vweird.f32 %v969
    %vm976 = vmor %vm974, %vm975
    %v977 = vsel %vm976, %v969, %v973
    %v978 = vand.u32 2147483647, %v699
    %vm979 = vcmp.eq.f32.partialorder %v978, 8.507059e+37
    %v980 = vand.u32 %v699, 2147483648
    %v981 = vor.u32 1.1754944e-38, %v980
    %v982 = vsel %vm979, %v981, %v977
    %v983 = vmul.f32 %v667, %v982
    %v984 = vrcp.pop %v700
    %v985 = vmul.f32 %v700, %v984
    %v986 = vsub.f32 1.0, %v985
    %v987 = vmul.f32 %v984, %v986
    %v988 = vadd.f32 %v984, %v987
    %vm989 = vweird.f32 %v700
    %vm990 = vweird.f32 %v984
    %vm991 = vmor %vm989, %vm990
    %v992 = vsel %vm991, %v984, %v988
    %v993 = vand.u32 2147483647, %v700
    %vm994 = vcmp.eq.f32.partialorder %v993, 8.507059e+37
    %v995 = vand.u32 %v700, 2147483648
    %v996 = vor.u32 1.1754944e-38, %v995
    %v997 = vsel %vm994, %v996, %v992
    %v998 = vmul.f32 %v668, %v997
    %v999 = vrcp.pop %v701
    %v1000 = vmul.f32 %v701, %v999
    %v1001 = vsub.f32 1.0, %v1000
    %v1002 = vmul.f32 %v999, %v1001
    %v1003 = vadd.f32 %v999, %v1002
    %vm1004 = vweird.f32 %v701
    %vm1005 = vweird.f32 %v999
    %vm1006 = vmor %vm1004, %vm1005
    %v1007 = vsel %vm1006, %v999, %v1003
    %v1008 = vand.u32 2147483647, %v701
    %vm1009 = vcmp.eq.f32.partialorder %v1008, 8.507059e+37
    %v1010 = vand.u32 %v701, 2147483648
    %v1011 = vor.u32 1.1754944e-38, %v1010
    %v1012 = vsel %vm1009, %v1011, %v1007
    %v1013 = vmul.f32 %v669, %v1012
    %v1014 = vrcp.pop %v702
    %v1015 = vmul.f32 %v702, %v1014
    %v1016 = vsub.f32 1.0, %v1015
    %v1017 = vmul.f32 %v1014, %v1016
    %v1018 = vadd.f32 %v1014, %v1017
    %vm1019 = vweird.f32 %v702
    %vm1020 = vweird.f32 %v1014
    %vm1021 = vmor %vm1019, %vm1020
    %v1022 = vsel %vm1021, %v1014, %v1018
    %v1023 = vand.u32 2147483647, %v702
    %vm1024 = vcmp.eq.f32.partialorder %v1023, 8.507059e+37
    %v1025 = vand.u32 %v702, 2147483648
    %v1026 = vor.u32 1.1754944e-38, %v1025
    %v1027 = vsel %vm1024, %v1026, %v1022
    %v1028 = vmul.f32 %v670, %v1027
    %v1029 = vrcp.pop %v703
    %v1030 = vmul.f32 %v703, %v1029
    %v1031 = vsub.f32 1.0, %v1030
    %v1032 = vmul.f32 %v1029, %v1031
    %v1033 = vadd.f32 %v1029, %v1032
    %vm1034 = vweird.f32 %v703
    %vm1035 = vweird.f32 %v1029
    %vm1036 = vmor %vm1034, %vm1035
    %v1037 = vsel %vm1036, %v1029, %v1033
    %v1038 = vand.u32 2147483647, %v703
    %vm1039 = vcmp.eq.f32.partialorder %v1038, 8.507059e+37
    %v1040 = vand.u32 %v703, 2147483648
    %v1041 = vor.u32 1.1754944e-38, %v1040
    %v1042 = vsel %vm1039, %v1041, %v1037
    %v1043 = vmul.f32 %v671, %v1042
    %v1044 = vrcp.pop %v704
    %v1045 = vmul.f32 %v704, %v1044
    %v1046 = vsub.f32 1.0, %v1045
    %v1047 = vmul.f32 %v1044, %v1046
    %v1048 = vadd.f32 %v1044, %v1047
    %vm1049 = vweird.f32 %v704
    %vm1050 = vweird.f32 %v1044
    %vm1051 = vmor %vm1049, %vm1050
    %v1052 = vsel %vm1051, %v1044, %v1048
    %v1053 = vand.u32 2147483647, %v704
    %vm1054 = vcmp.eq.f32.partialorder %v1053, 8.507059e+37
    %v1055 = vand.u32 %v704, 2147483648
    %v1056 = vor.u32 1.1754944e-38, %v1055
    %v1057 = vsel %vm1054, %v1056, %v1052
    %v1058 = vmul.f32 %v672, %v1057
    %v1059 = vrcp.pop %v705
    %v1060 = vmul.f32 %v705, %v1059
    %v1061 = vsub.f32 1.0, %v1060
    %v1062 = vmul.f32 %v1059, %v1061
    %v1063 = vadd.f32 %v1059, %v1062
    %vm1064 = vweird.f32 %v705
    %vm1065 = vweird.f32 %v1059
    %vm1066 = vmor %vm1064, %vm1065
    %v1067 = vsel %vm1066, %v1059, %v1063
    %v1068 = vand.u32 2147483647, %v705
    %vm1069 = vcmp.eq.f32.partialorder %v1068, 8.507059e+37
    %v1070 = vand.u32 %v705, 2147483648
    %v1071 = vor.u32 1.1754944e-38, %v1070
    %v1072 = vsel %vm1069, %v1071, %v1067
    %v1073 = vmul.f32 %v673, %v1072
    %v1074 = vrcp.pop %v706
    %v1075 = vmul.f32 %v706, %v1074
    %v1076 = vsub.f32 1.0, %v1075
    %v1077 = vmul.f32 %v1074, %v1076
    %v1078 = vadd.f32 %v1074, %v1077
    %vm1079 = vweird.f32 %v706
    %vm1080 = vweird.f32 %v1074
    %vm1081 = vmor %vm1079, %vm1080
    %v1082 = vsel %vm1081, %v1074, %v1078
    %v1083 = vand.u32 2147483647, %v706
    %vm1084 = vcmp.eq.f32.partialorder %v1083, 8.507059e+37
    %v1085 = vand.u32 %v706, 2147483648
    %v1086 = vor.u32 1.1754944e-38, %v1085
    %v1087 = vsel %vm1084, %v1086, %v1082
    %v1088 = vmul.f32 %v674, %v1087
    %v1089 = vrcp.pop %v707
    %v1090 = vmul.f32 %v707, %v1089
    %v1091 = vsub.f32 1.0, %v1090
    %v1092 = vmul.f32 %v1089, %v1091
    %v1093 = vadd.f32 %v1089, %v1092
    %vm1094 = vweird.f32 %v707
    %vm1095 = vweird.f32 %v1089
    %vm1096 = vmor %vm1094, %vm1095
    %v1097 = vsel %vm1096, %v1089, %v1093
    %v1098 = vand.u32 2147483647, %v707
    %vm1099 = vcmp.eq.f32.partialorder %v1098, 8.507059e+37
    %v1100 = vand.u32 %v707, 2147483648
    %v1101 = vor.u32 1.1754944e-38, %v1100
    %v1102 = vsel %vm1099, %v1101, %v1097
    %v1103 = vmul.f32 %v675, %v1102
    %v1104 = vrcp.pop %v708
    %v1105 = vmul.f32 %v708, %v1104
    %v1106 = vsub.f32 1.0, %v1105
    %v1107 = vmul.f32 %v1104, %v1106
    %v1108 = vadd.f32 %v1104, %v1107
    %vm1109 = vweird.f32 %v708
    %vm1110 = vweird.f32 %v1104
    %vm1111 = vmor %vm1109, %vm1110
    %v1112 = vsel %vm1111, %v1104, %v1108
    %v1113 = vand.u32 2147483647, %v708
    %vm1114 = vcmp.eq.f32.partialorder %v1113, 8.507059e+37
    %v1115 = vand.u32 %v708, 2147483648
    %v1116 = vor.u32 1.1754944e-38, %v1115
    %v1117 = vsel %vm1114, %v1116, %v1112
    %v1118 = vmul.f32 %v676, %v1117
    %v1119 = vrcp.pop %v709
    %v1120 = vmul.f32 %v709, %v1119
    %v1121 = vsub.f32 1.0, %v1120
    %v1122 = vmul.f32 %v1119, %v1121
    %v1123 = vadd.f32 %v1119, %v1122
    %vm1124 = vweird.f32 %v709
    %vm1125 = vweird.f32 %v1119
    %vm1126 = vmor %vm1124, %vm1125
    %v1127 = vsel %vm1126, %v1119, %v1123
    %v1128 = vand.u32 2147483647, %v709
    %vm1129 = vcmp.eq.f32.partialorder %v1128, 8.507059e+37
    %v1130 = vand.u32 %v709, 2147483648
    %v1131 = vor.u32 1.1754944e-38, %v1130
    %v1132 = vsel %vm1129, %v1131, %v1127
    %v1133 = vmul.f32 %v677, %v1132
    %v1134 = vrcp.pop %v710
    %v1135 = vmul.f32 %v710, %v1134
    %v1136 = vsub.f32 1.0, %v1135
    %v1137 = vmul.f32 %v1134, %v1136
    %v1138 = vadd.f32 %v1134, %v1137
    %vm1139 = vweird.f32 %v710
    %vm1140 = vweird.f32 %v1134
    %vm1141 = vmor %vm1139, %vm1140
    %v1142 = vsel %vm1141, %v1134, %v1138
    %v1143 = vand.u32 2147483647, %v710
    %vm1144 = vcmp.eq.f32.partialorder %v1143, 8.507059e+37
    %v1145 = vand.u32 %v710, 2147483648
    %v1146 = vor.u32 1.1754944e-38, %v1145
    %v1147 = vsel %vm1144, %v1146, %v1142
    %v1148 = vmul.f32 %v678, %v1147
    %v1149 = vrcp.pop %v711
    %v1150 = vmul.f32 %v711, %v1149
    %v1151 = vsub.f32 1.0, %v1150
    %v1152 = vmul.f32 %v1149, %v1151
    %v1153 = vadd.f32 %v1149, %v1152
    %vm1154 = vweird.f32 %v711
    %vm1155 = vweird.f32 %v1149
    %vm1156 = vmor %vm1154, %vm1155
    %v1157 = vsel %vm1156, %v1149, %v1153
    %v1158 = vand.u32 2147483647, %v711
    %vm1159 = vcmp.eq.f32.partialorder %v1158, 8.507059e+37
    %v1160 = vand.u32 %v711, 2147483648
    %v1161 = vor.u32 1.1754944e-38, %v1160
    %v1162 = vsel %vm1159, %v1161, %v1157
    %v1163 = vmul.f32 %v679, %v1162
    %v1164 = vrcp.pop %v712
    %v1165 = vmul.f32 %v712, %v1164
    %v1166 = vsub.f32 1.0, %v1165
    %v1167 = vmul.f32 %v1164, %v1166
    %v1168 = vadd.f32 %v1164, %v1167
    %vm1169 = vweird.f32 %v712
    %vm1170 = vweird.f32 %v1164
    %vm1171 = vmor %vm1169, %vm1170
    %v1172 = vsel %vm1171, %v1164, %v1168
    %v1173 = vand.u32 2147483647, %v712
    %vm1174 = vcmp.eq.f32.partialorder %v1173, 8.507059e+37
    %v1175 = vand.u32 %v712, 2147483648
    %v1176 = vor.u32 1.1754944e-38, %v1175
    %v1177 = vsel %vm1174, %v1176, %v1172
    %v1178 = vmul.f32 %v680, %v1177
    %v1179 = vrcp.pop %v713
    %v1180 = vmul.f32 %v713, %v1179
    %v1181 = vsub.f32 1.0, %v1180
    %v1182 = vmul.f32 %v1179, %v1181
    %v1183 = vadd.f32 %v1179, %v1182
    %vm1184 = vweird.f32 %v713
    %vm1185 = vweird.f32 %v1179
    %vm1186 = vmor %vm1184, %vm1185
    %v1187 = vsel %vm1186, %v1179, %v1183
    %v1188 = vand.u32 2147483647, %v713
    %vm1189 = vcmp.eq.f32.partialorder %v1188, 8.507059e+37
    %v1190 = vand.u32 %v713, 2147483648
    %v1191 = vor.u32 1.1754944e-38, %v1190
    %v1192 = vsel %vm1189, %v1191, %v1187
    %v1193 = vmul.f32 %v681, %v1192
    %v1194 = vmul.f32 %v490, %v728
    %v1195 = vmul.f32 %v491, %v743
    %v1196 = vmul.f32 %v492, %v758
    %v1197 = vmul.f32 %v493, %v773
    %v1198 = vmul.f32 %v494, %v788
    %v1199 = vmul.f32 %v495, %v803
    %v1200 = vmul.f32 %v496, %v818
    %v1201 = vmul.f32 %v497, %v833
    %v1202 = vmul.f32 %v498, %v848
    %v1203 = vmul.f32 %v499, %v863
    %v1204 = vmul.f32 %v500, %v878
    %v1205 = vmul.f32 %v501, %v893
    %v1206 = vmul.f32 %v502, %v908
    %v1207 = vmul.f32 %v503, %v923
    %v1208 = vmul.f32 %v504, %v938
    %v1209 = vmul.f32 %v505, %v953
    %v1210 = vmul.f32 %v506, %v968
    %v1211 = vmul.f32 %v507, %v983
    %v1212 = vmul.f32 %v508, %v998
    %v1213 = vmul.f32 %v509, %v1013
    %v1214 = vmul.f32 %v510, %v1028
    %v1215 = vmul.f32 %v511, %v1043
    %v1216 = vmul.f32 %v512, %v1058
    %v1217 = vmul.f32 %v513, %v1073
    %v1218 = vmul.f32 %v514, %v1088
    %v1219 = vmul.f32 %v515, %v1103
    %v1220 = vmul.f32 %v516, %v1118
    %v1221 = vmul.f32 %v517, %v1133
    %v1222 = vmul.f32 %v518, %v1148
    %v1223 = vmul.f32 %v519, %v1163
    %v1224 = vmul.f32 %v520, %v1178
    %v1225 = vmul.f32 %v521, %v1193
    %v1226 = vld [vmem:[#allocation2] sm:$0xff]
    %v1227 = vld [vmem:[#allocation2 + $0x8] sm:$0xff]
    %v1228 = vld [vmem:[#allocation2 + $0x10] sm:$0xff]
    %v1229 = vld [vmem:[#allocation2 + $0x18] sm:$0xff]
    %v1230 = vld [vmem:[#allocation2 + $0x20] sm:$0xff]
    %v1231 = vld [vmem:[#allocation2 + $0x28] sm:$0xff]
    %v1232 = vld [vmem:[#allocation2 + $0x30] sm:$0xff]
    %v1233 = vld [vmem:[#allocation2 + $0x38] sm:$0xff]
    %v1234 = vld [vmem:[#allocation2 + $0x40] sm:$0xff]
    %v1235 = vld [vmem:[#allocation2 + $0x48] sm:$0xff]
    %v1236 = vld [vmem:[#allocation2 + $0x50] sm:$0xff]
    %v1237 = vld [vmem:[#allocation2 + $0x58] sm:$0xff]
    %v1238 = vld [vmem:[#allocation2 + $0x60] sm:$0xff]
    %v1239 = vld [vmem:[#allocation2 + $0x68] sm:$0xff]
    %v1240 = vld [vmem:[#allocation2 + $0x70] sm:$0xff]
    %v1241 = vld [vmem:[#allocation2 + $0x78] sm:$0xff]
    %v1242 = vld [vmem:[#allocation2 + $0x80] sm:$0xff]
    %v1243 = vld [vmem:[#allocation2 + $0x88] sm:$0xff]
    %v1244 = vld [vmem:[#allocation2 + $0x90] sm:$0xff]
    %v1245 = vld [vmem:[#allocation2 + $0x98] sm:$0xff]
    %v1246 = vld [vmem:[#allocation2 + $0xa0] sm:$0xff]
    %v1247 = vld [vmem:[#allocation2 + $0xa8] sm:$0xff]
    %v1248 = vld [vmem:[#allocation2 + $0xb0] sm:$0xff]
    %v1249 = vld [vmem:[#allocation2 + $0xb8] sm:$0xff]
    %v1250 = vld [vmem:[#allocation2 + $0xc0] sm:$0xff]
    %v1251 = vld [vmem:[#allocation2 + $0xc8] sm:$0xff]
    %v1252 = vld [vmem:[#allocation2 + $0xd0] sm:$0xff]
    %v1253 = vld [vmem:[#allocation2 + $0xd8] sm:$0xff]
    %v1254 = vld [vmem:[#allocation2 + $0xe0] sm:$0xff]
    %v1255 = vld [vmem:[#allocation2 + $0xe8] sm:$0xff]
    %v1256 = vld [vmem:[#allocation2 + $0xf0] sm:$0xff]
    %v1257 = vld [vmem:[#allocation2 + $0xf8] sm:$0xff]
    %v1258 = vld [vmem:[#allocation2 + $0x100] sm:$0xff]
    %v1259 = vld [vmem:[#allocation2 + $0x108] sm:$0xff]
    %v1260 = vld [vmem:[#allocation2 + $0x110] sm:$0xff]
    %v1261 = vld [vmem:[#allocation2 + $0x118] sm:$0xff]
    %v1262 = vld [vmem:[#allocation2 + $0x120] sm:$0xff]
    %v1263 = vld [vmem:[#allocation2 + $0x128] sm:$0xff]
    %v1264 = vld [vmem:[#allocation2 + $0x130] sm:$0xff]
    %v1265 = vld [vmem:[#allocation2 + $0x138] sm:$0xff]
    %v1266 = vld [vmem:[#allocation2 + $0x140] sm:$0xff]
    %v1267 = vld [vmem:[#allocation2 + $0x148] sm:$0xff]
    %v1268 = vld [vmem:[#allocation2 + $0x150] sm:$0xff]
    %v1269 = vld [vmem:[#allocation2 + $0x158] sm:$0xff]
    %v1270 = vld [vmem:[#allocation2 + $0x160] sm:$0xff]
    %v1271 = vld [vmem:[#allocation2 + $0x168] sm:$0xff]
    %v1272 = vld [vmem:[#allocation2 + $0x170] sm:$0xff]
    %v1273 = vld [vmem:[#allocation2 + $0x178] sm:$0xff]
    %v1274 = vld [vmem:[#allocation2 + $0x180] sm:$0xff]
    %v1275 = vld [vmem:[#allocation2 + $0x188] sm:$0xff]
    %v1276 = vld [vmem:[#allocation2 + $0x190] sm:$0xff]
    %v1277 = vld [vmem:[#allocation2 + $0x198] sm:$0xff]
    %v1278 = vld [vmem:[#allocation2 + $0x1a0] sm:$0xff]
    %v1279 = vld [vmem:[#allocation2 + $0x1a8] sm:$0xff]
    %v1280 = vld [vmem:[#allocation2 + $0x1b0] sm:$0xff]
    %v1281 = vld [vmem:[#allocation2 + $0x1b8] sm:$0xff]
    %v1282 = vld [vmem:[#allocation2 + $0x1c0] sm:$0xff]
    %v1283 = vld [vmem:[#allocation2 + $0x1c8] sm:$0xff]
    %v1284 = vld [vmem:[#allocation2 + $0x1d0] sm:$0xff]
    %v1285 = vld [vmem:[#allocation2 + $0x1d8] sm:$0xff]
    %v1286 = vld [vmem:[#allocation2 + $0x1e0] sm:$0xff]
    %v1287 = vld [vmem:[#allocation2 + $0x1e8] sm:$0xff]
    %v1288 = vld [vmem:[#allocation2 + $0x1f0] sm:$0xff]
    %v1289 = vld [vmem:[#allocation2 + $0x1f8] sm:$0xff]
    %v1290 = vld [vmem:[%s4] sm:$0x3]
    %v1292 = vperm.slane %v1290, 0
    %v1293 = vperm.slane %v1290, 1
    %1296 = vmatpush.msra.mxu0 %v1256
    %1297 = vmatpush.msra.mxu0 %v1254
    %1298 = vmatpush.msra.mxu0 %v1252
    %1299 = vmatpush.msra.mxu0 %v1250
    %1300 = vmatpush.msra.mxu0 %v1248
    %1301 = vmatpush.msra.mxu0 %v1246
    %1302 = vmatpush.msra.mxu0 %v1244
    %1303 = vmatpush.msra.mxu0 %v1242
    %1304 = vmatpush.msra.mxu0 %v1240
    %1305 = vmatpush.msra.mxu0 %v1238
    %1306 = vmatpush.msra.mxu0 %v1236
    %1307 = vmatpush.msra.mxu0 %v1234
    %1308 = vmatpush.msra.mxu0 %v1232
    %1309 = vmatpush.msra.mxu0 %v1230
    %1310 = vmatpush.msra.mxu0 %v1228
    %1311 = vmatpush.msra.mxu0 %v1226
    %1312 = vmatmul.f32.gmra.mxu0 %v1194
    %v1313 = vpop.f32.mrf.mxu0
    %v1314 = vadd.f32 %v1292, %v1313
    %1315 = vmatmul.f32.gmra.mxu0 %v1196
    %v1316 = vpop.f32.mrf.mxu0
    %v1317 = vadd.f32 %v1292, %v1316
    %1318 = vmatmul.f32.gmra.mxu0 %v1198
    %v1319 = vpop.f32.mrf.mxu0
    %v1320 = vadd.f32 %v1292, %v1319
    %1321 = vmatmul.f32.gmra.mxu0 %v1200
    %v1322 = vpop.f32.mrf.mxu0
    %v1323 = vadd.f32 %v1292, %v1322
    %1324 = vmatmul.f32.gmra.mxu0 %v1202
    %v1325 = vpop.f32.mrf.mxu0
    %v1326 = vadd.f32 %v1292, %v1325
    %1327 = vmatmul.f32.gmra.mxu0 %v1204
    %v1328 = vpop.f32.mrf.mxu0
    %v1329 = vadd.f32 %v1292, %v1328
    %1330 = vmatmul.f32.gmra.mxu0 %v1206
    %v1331 = vpop.f32.mrf.mxu0
    %v1332 = vadd.f32 %v1292, %v1331
    %1333 = vmatmul.f32.gmra.mxu0 %v1208
    %v1334 = vpop.f32.mrf.mxu0
    %v1335 = vadd.f32 %v1292, %v1334
    %1336 = vmatmul.f32.gmra.mxu0 %v1210
    %v1337 = vpop.f32.mrf.mxu0
    %v1338 = vadd.f32 %v1292, %v1337
    %1339 = vmatmul.f32.gmra.mxu0 %v1212
    %v1340 = vpop.f32.mrf.mxu0
    %v1341 = vadd.f32 %v1292, %v1340
    %1342 = vmatmul.f32.gmra.mxu0 %v1214
    %v1343 = vpop.f32.mrf.mxu0
    %v1344 = vadd.f32 %v1292, %v1343
    %1345 = vmatmul.f32.gmra.mxu0 %v1216
    %v1346 = vpop.f32.mrf.mxu0
    %v1347 = vadd.f32 %v1292, %v1346
    %1348 = vmatmul.f32.gmra.mxu0 %v1218
    %v1349 = vpop.f32.mrf.mxu0
    %v1350 = vadd.f32 %v1292, %v1349
    %1351 = vmatmul.f32.gmra.mxu0 %v1220
    %v1352 = vpop.f32.mrf.mxu0
    %v1353 = vadd.f32 %v1292, %v1352
    %1354 = vmatmul.f32.gmra.mxu0 %v1222
    %v1355 = vpop.f32.mrf.mxu0
    %v1356 = vadd.f32 %v1292, %v1355
    %1357 = vmatmul.f32.gmra.mxu0 %v1224
    %v1358 = vpop.f32.mrf.mxu0
    %v1359 = vadd.f32 %v1292, %v1358
    %1360 = vdwg.mxu0
    %1361 = vmatpush.msra.mxu0 %v1288
    %1362 = vmatpush.msra.mxu0 %v1286
    %1363 = vmatpush.msra.mxu0 %v1284
    %1364 = vmatpush.msra.mxu0 %v1282
    %1365 = vmatpush.msra.mxu0 %v1280
    %1366 = vmatpush.msra.mxu0 %v1278
    %1367 = vmatpush.msra.mxu0 %v1276
    %1368 = vmatpush.msra.mxu0 %v1274
    %1369 = vmatpush.msra.mxu0 %v1272
    %1370 = vmatpush.msra.mxu0 %v1270
    %1371 = vmatpush.msra.mxu0 %v1268
    %1372 = vmatpush.msra.mxu0 %v1266
    %1373 = vmatpush.msra.mxu0 %v1264
    %1374 = vmatpush.msra.mxu0 %v1262
    %1375 = vmatpush.msra.mxu0 %v1260
    %1376 = vmatpush.msra.mxu0 %v1258
    %1377 = vmatmul.f32.gmra.mxu0 %v1195
    %v1378 = vpop.f32.mrf.mxu0
    %v1379 = vadd.f32 %v1314, %v1378
    %1380 = vmatmul.f32.gmra.mxu0 %v1197
    %v1381 = vpop.f32.mrf.mxu0
    %v1382 = vadd.f32 %v1317, %v1381
    %1383 = vmatmul.f32.gmra.mxu0 %v1199
    %v1384 = vpop.f32.mrf.mxu0
    %v1385 = vadd.f32 %v1320, %v1384
    %1386 = vmatmul.f32.gmra.mxu0 %v1201
    %v1387 = vpop.f32.mrf.mxu0
    %v1388 = vadd.f32 %v1323, %v1387
    %1389 = vmatmul.f32.gmra.mxu0 %v1203
    %v1390 = vpop.f32.mrf.mxu0
    %v1391 = vadd.f32 %v1326, %v1390
    %1392 = vmatmul.f32.gmra.mxu0 %v1205
    %v1393 = vpop.f32.mrf.mxu0
    %v1394 = vadd.f32 %v1329, %v1393
    %1395 = vmatmul.f32.gmra.mxu0 %v1207
    %v1396 = vpop.f32.mrf.mxu0
    %v1397 = vadd.f32 %v1332, %v1396
    %1398 = vmatmul.f32.gmra.mxu0 %v1209
    %v1399 = vpop.f32.mrf.mxu0
    %v1400 = vadd.f32 %v1335, %v1399
    %1401 = vmatmul.f32.gmra.mxu0 %v1211
    %v1402 = vpop.f32.mrf.mxu0
    %v1403 = vadd.f32 %v1338, %v1402
    %1404 = vmatmul.f32.gmra.mxu0 %v1213
    %v1405 = vpop.f32.mrf.mxu0
    %v1406 = vadd.f32 %v1341, %v1405
    %1407 = vmatmul.f32.gmra.mxu0 %v1215
    %v1408 = vpop.f32.mrf.mxu0
    %v1409 = vadd.f32 %v1344, %v1408
    %1410 = vmatmul.f32.gmra.mxu0 %v1217
    %v1411 = vpop.f32.mrf.mxu0
    %v1412 = vadd.f32 %v1347, %v1411
    %1413 = vmatmul.f32.gmra.mxu0 %v1219
    %v1414 = vpop.f32.mrf.mxu0
    %v1415 = vadd.f32 %v1350, %v1414
    %1416 = vmatmul.f32.gmra.mxu0 %v1221
    %v1417 = vpop.f32.mrf.mxu0
    %v1418 = vadd.f32 %v1353, %v1417
    %1419 = vmatmul.f32.gmra.mxu0 %v1223
    %v1420 = vpop.f32.mrf.mxu0
    %v1421 = vadd.f32 %v1356, %v1420
    %1422 = vmatmul.f32.gmra.mxu0 %v1225
    %v1423 = vpop.f32.mrf.mxu0
    %v1424 = vadd.f32 %v1359, %v1423
    %1425 = vdwg.mxu0
    %1426 = vmatpush.msra.mxu0 %v1257
    %1427 = vmatpush.msra.mxu0 %v1255
    %1428 = vmatpush.msra.mxu0 %v1253
    %1429 = vmatpush.msra.mxu0 %v1251
    %1430 = vmatpush.msra.mxu0 %v1249
    %1431 = vmatpush.msra.mxu0 %v1247
    %1432 = vmatpush.msra.mxu0 %v1245
    %1433 = vmatpush.msra.mxu0 %v1243
    %1434 = vmatpush.msra.mxu0 %v1241
    %1435 = vmatpush.msra.mxu0 %v1239
    %1436 = vmatpush.msra.mxu0 %v1237
    %1437 = vmatpush.msra.mxu0 %v1235
    %1438 = vmatpush.msra.mxu0 %v1233
    %1439 = vmatpush.msra.mxu0 %v1231
    %1440 = vmatpush.msra.mxu0 %v1229
    %1441 = vmatpush.msra.mxu0 %v1227
    %1442 = vmatmul.f32.gmra.mxu0 %v1194
    %v1443 = vpop.f32.mrf.mxu0
    %v1444 = vadd.f32 %v1293, %v1443
    %1445 = vmatmul.f32.gmra.mxu0 %v1196
    %v1446 = vpop.f32.mrf.mxu0
    %v1447 = vadd.f32 %v1293, %v1446
    %1448 = vmatmul.f32.gmra.mxu0 %v1198
    %v1449 = vpop.f32.mrf.mxu0
    %v1450 = vadd.f32 %v1293, %v1449
    %1451 = vmatmul.f32.gmra.mxu0 %v1200
    %v1452 = vpop.f32.mrf.mxu0
    %v1453 = vadd.f32 %v1293, %v1452
    %1454 = vmatmul.f32.gmra.mxu0 %v1202
    %v1455 = vpop.f32.mrf.mxu0
    %v1456 = vadd.f32 %v1293, %v1455
    %1457 = vmatmul.f32.gmra.mxu0 %v1204
    %v1458 = vpop.f32.mrf.mxu0
    %v1459 = vadd.f32 %v1293, %v1458
    %1460 = vmatmul.f32.gmra.mxu0 %v1206
    %v1461 = vpop.f32.mrf.mxu0
    %v1462 = vadd.f32 %v1293, %v1461
    %1463 = vmatmul.f32.gmra.mxu0 %v1208
    %v1464 = vpop.f32.mrf.mxu0
    %v1465 = vadd.f32 %v1293, %v1464
    %1466 = vmatmul.f32.gmra.mxu0 %v1210
    %v1467 = vpop.f32.mrf.mxu0
    %v1468 = vadd.f32 %v1293, %v1467
    %1469 = vmatmul.f32.gmra.mxu0 %v1212
    %v1470 = vpop.f32.mrf.mxu0
    %v1471 = vadd.f32 %v1293, %v1470
    %1472 = vmatmul.f32.gmra.mxu0 %v1214
    %v1473 = vpop.f32.mrf.mxu0
    %v1474 = vadd.f32 %v1293, %v1473
    %1475 = vmatmul.f32.gmra.mxu0 %v1216
    %v1476 = vpop.f32.mrf.mxu0
    %v1477 = vadd.f32 %v1293, %v1476
    %1478 = vmatmul.f32.gmra.mxu0 %v1218
    %v1479 = vpop.f32.mrf.mxu0
    %v1480 = vadd.f32 %v1293, %v1479
    %1481 = vmatmul.f32.gmra.mxu0 %v1220
    %v1482 = vpop.f32.mrf.mxu0
    %v1483 = vadd.f32 %v1293, %v1482
    %1484 = vmatmul.f32.gmra.mxu0 %v1222
    %v1485 = vpop.f32.mrf.mxu0
    %v1486 = vadd.f32 %v1293, %v1485
    %1487 = vmatmul.f32.gmra.mxu0 %v1224
    %v1488 = vpop.f32.mrf.mxu0
    %v1489 = vadd.f32 %v1293, %v1488
    %1490 = vdwg.mxu0
    %1491 = vmatpush.msra.mxu0 %v1289
    %1492 = vmatpush.msra.mxu0 %v1287
    %1493 = vmatpush.msra.mxu0 %v1285
    %1494 = vmatpush.msra.mxu0 %v1283
    %1495 = vmatpush.msra.mxu0 %v1281
    %1496 = vmatpush.msra.mxu0 %v1279
    %1497 = vmatpush.msra.mxu0 %v1277
    %1498 = vmatpush.msra.mxu0 %v1275
    %1499 = vmatpush.msra.mxu0 %v1273
    %1500 = vmatpush.msra.mxu0 %v1271
    %1501 = vmatpush.msra.mxu0 %v1269
    %1502 = vmatpush.msra.mxu0 %v1267
    %1503 = vmatpush.msra.mxu0 %v1265
    %1504 = vmatpush.msra.mxu0 %v1263
    %1505 = vmatpush.msra.mxu0 %v1261
    %1506 = vmatpush.msra.mxu0 %v1259
    %1507 = vmatmul.f32.gmra.mxu0 %v1195
    %v1508 = vpop.f32.mrf.mxu0
    %v1509 = vadd.f32 %v1444, %v1508
    %1510 = vmatmul.f32.gmra.mxu0 %v1197
    %v1511 = vpop.f32.mrf.mxu0
    %v1512 = vadd.f32 %v1447, %v1511
    %1513 = vmatmul.f32.gmra.mxu0 %v1199
    %v1514 = vpop.f32.mrf.mxu0
    %v1515 = vadd.f32 %v1450, %v1514
    %1516 = vmatmul.f32.gmra.mxu0 %v1201
    %v1517 = vpop.f32.mrf.mxu0
    %v1518 = vadd.f32 %v1453, %v1517
    %1519 = vmatmul.f32.gmra.mxu0 %v1203
    %v1520 = vpop.f32.mrf.mxu0
    %v1521 = vadd.f32 %v1456, %v1520
    %1522 = vmatmul.f32.gmra.mxu0 %v1205
    %v1523 = vpop.f32.mrf.mxu0
    %v1524 = vadd.f32 %v1459, %v1523
    %1525 = vmatmul.f32.gmra.mxu0 %v1207
    %v1526 = vpop.f32.mrf.mxu0
    %v1527 = vadd.f32 %v1462, %v1526
    %1528 = vmatmul.f32.gmra.mxu0 %v1209
    %v1529 = vpop.f32.mrf.mxu0
    %v1530 = vadd.f32 %v1465, %v1529
    %1531 = vmatmul.f32.gmra.mxu0 %v1211
    %v1532 = vpop.f32.mrf.mxu0
    %v1533 = vadd.f32 %v1468, %v1532
    %1534 = vmatmul.f32.gmra.mxu0 %v1213
    %v1535 = vpop.f32.mrf.mxu0
    %v1536 = vadd.f32 %v1471, %v1535
    %1537 = vmatmul.f32.gmra.mxu0 %v1215
    %v1538 = vpop.f32.mrf.mxu0
    %v1539 = vadd.f32 %v1474, %v1538
    %1540 = vmatmul.f32.gmra.mxu0 %v1217
    %v1541 = vpop.f32.mrf.mxu0
    %v1542 = vadd.f32 %v1477, %v1541
    %1543 = vmatmul.f32.gmra.mxu0 %v1219
    %v1544 = vpop.f32.mrf.mxu0
    %v1545 = vadd.f32 %v1480, %v1544
    %1546 = vmatmul.f32.gmra.mxu0 %v1221
    %v1547 = vpop.f32.mrf.mxu0
    %v1548 = vadd.f32 %v1483, %v1547
    %1549 = vmatmul.f32.gmra.mxu0 %v1223
    %v1550 = vpop.f32.mrf.mxu0
    %v1551 = vadd.f32 %v1486, %v1550
    %1552 = vmatmul.f32.gmra.mxu0 %v1225
    %v1553 = vpop.f32.mrf.mxu0
    %v1554 = vadd.f32 %v1489, %v1553
    %1555 = vdwg.mxu0
    %v1556 = vmin.f32 %v1379, 20.0
    %v1557 = vmin.f32 %v1509, 20.0
    %v1558 = vmin.f32 %v1382, 20.0
    %v1559 = vmin.f32 %v1512, 20.0
    %v1560 = vmin.f32 %v1385, 20.0
    %v1561 = vmin.f32 %v1515, 20.0
    %v1562 = vmin.f32 %v1388, 20.0
    %v1563 = vmin.f32 %v1518, 20.0
    %v1564 = vmin.f32 %v1391, 20.0
    %v1565 = vmin.f32 %v1521, 20.0
    %v1566 = vmin.f32 %v1394, 20.0
    %v1567 = vmin.f32 %v1524, 20.0
    %v1568 = vmin.f32 %v1397, 20.0
    %v1569 = vmin.f32 %v1527, 20.0
    %v1570 = vmin.f32 %v1400, 20.0
    %v1571 = vmin.f32 %v1530, 20.0
    %v1572 = vmin.f32 %v1403, 20.0
    %v1573 = vmin.f32 %v1533, 20.0
    %v1574 = vmin.f32 %v1406, 20.0
    %v1575 = vmin.f32 %v1536, 20.0
    %v1576 = vmin.f32 %v1409, 20.0
    %v1577 = vmin.f32 %v1539, 20.0
    %v1578 = vmin.f32 %v1412, 20.0
    %v1579 = vmin.f32 %v1542, 20.0
    %v1580 = vmin.f32 %v1415, 20.0
    %v1581 = vmin.f32 %v1545, 20.0
    %v1582 = vmin.f32 %v1418, 20.0
    %v1583 = vmin.f32 %v1548, 20.0
    %v1584 = vmin.f32 %v1421, 20.0
    %v1585 = vmin.f32 %v1551, 20.0
    %v1586 = vmin.f32 %v1424, 20.0
    %v1587 = vmin.f32 %v1554, 20.0
    %v1588 = vmul.f32 %v1556, 1.442695
    %v1589 = vpow.pop %v1588
    %v1590 = vmul.f32 %v1557, 1.442695
    %v1591 = vpow.pop %v1590
    %v1592 = vmul.f32 %v1558, 1.442695
    %v1593 = vpow.pop %v1592
    %v1594 = vmul.f32 %v1559, 1.442695
    %v1595 = vpow.pop %v1594
    %v1596 = vmul.f32 %v1560, 1.442695
    %v1597 = vpow.pop %v1596
    %v1598 = vmul.f32 %v1561, 1.442695
    %v1599 = vpow.pop %v1598
    %v1600 = vmul.f32 %v1562, 1.442695
    %v1601 = vpow.pop %v1600
    %v1602 = vmul.f32 %v1563, 1.442695
    %v1603 = vpow.pop %v1602
    %v1604 = vmul.f32 %v1564, 1.442695
    %v1605 = vpow.pop %v1604
    %v1606 = vmul.f32 %v1565, 1.442695
    %v1607 = vpow.pop %v1606
    %v1608 = vmul.f32 %v1566, 1.442695
    %v1609 = vpow.pop %v1608
    %v1610 = vmul.f32 %v1567, 1.442695
    %v1611 = vpow.pop %v1610
    %v1612 = vmul.f32 %v1568, 1.442695
    %v1613 = vpow.pop %v1612
    %v1614 = vmul.f32 %v1569, 1.442695
    %v1615 = vpow.pop %v1614
    %v1616 = vmul.f32 %v1570, 1.442695
    %v1617 = vpow.pop %v1616
    %v1618 = vmul.f32 %v1571, 1.442695
    %v1619 = vpow.pop %v1618
    %v1620 = vmul.f32 %v1572, 1.442695
    %v1621 = vpow.pop %v1620
    %v1622 = vmul.f32 %v1573, 1.442695
    %v1623 = vpow.pop %v1622
    %v1624 = vmul.f32 %v1574, 1.442695
    %v1625 = vpow.pop %v1624
    %v1626 = vmul.f32 %v1575, 1.442695
    %v1627 = vpow.pop %v1626
    %v1628 = vmul.f32 %v1576, 1.442695
    %v1629 = vpow.pop %v1628
    %v1630 = vmul.f32 %v1577, 1.442695
    %v1631 = vpow.pop %v1630
    %v1632 = vmul.f32 %v1578, 1.442695
    %v1633 = vpow.pop %v1632
    %v1634 = vmul.f32 %v1579, 1.442695
    %v1635 = vpow.pop %v1634
    %v1636 = vmul.f32 %v1580, 1.442695
    %v1637 = vpow.pop %v1636
    %v1638 = vmul.f32 %v1581, 1.442695
    %v1639 = vpow.pop %v1638
    %v1640 = vmul.f32 %v1582, 1.442695
    %v1641 = vpow.pop %v1640
    %v1642 = vmul.f32 %v1583, 1.442695
    %v1643 = vpow.pop %v1642
    %v1644 = vmul.f32 %v1584, 1.442695
    %v1645 = vpow.pop %v1644
    %v1646 = vmul.f32 %v1585, 1.442695
    %v1647 = vpow.pop %v1646
    %v1648 = vmul.f32 %v1586, 1.442695
    %v1649 = vpow.pop %v1648
    %v1650 = vmul.f32 %v1587, 1.442695
    %v1651 = vpow.pop %v1650
    %v1652 = vadd.f32 %v1589, 2.0
    %v1653 = vadd.f32 %v1591, 2.0
    %v1654 = vadd.f32 %v1593, 2.0
    %v1655 = vadd.f32 %v1595, 2.0
    %v1656 = vadd.f32 %v1597, 2.0
    %v1657 = vadd.f32 %v1599, 2.0
    %v1658 = vadd.f32 %v1601, 2.0
    %v1659 = vadd.f32 %v1603, 2.0
    %v1660 = vadd.f32 %v1605, 2.0
    %v1661 = vadd.f32 %v1607, 2.0
    %v1662 = vadd.f32 %v1609, 2.0
    %v1663 = vadd.f32 %v1611, 2.0
    %v1664 = vadd.f32 %v1613, 2.0
    %v1665 = vadd.f32 %v1615, 2.0
    %v1666 = vadd.f32 %v1617, 2.0
    %v1667 = vadd.f32 %v1619, 2.0
    %v1668 = vadd.f32 %v1621, 2.0
    %v1669 = vadd.f32 %v1623, 2.0
    %v1670 = vadd.f32 %v1625, 2.0
    %v1671 = vadd.f32 %v1627, 2.0
    %v1672 = vadd.f32 %v1629, 2.0
    %v1673 = vadd.f32 %v1631, 2.0
    %v1674 = vadd.f32 %v1633, 2.0
    %v1675 = vadd.f32 %v1635, 2.0
    %v1676 = vadd.f32 %v1637, 2.0
    %v1677 = vadd.f32 %v1639, 2.0
    %v1678 = vadd.f32 %v1641, 2.0
    %v1679 = vadd.f32 %v1643, 2.0
    %v1680 = vadd.f32 %v1645, 2.0
    %v1681 = vadd.f32 %v1647, 2.0
    %v1682 = vadd.f32 %v1649, 2.0
    %v1683 = vadd.f32 %v1651, 2.0
    %v1684 = vmul.f32 %v1589, %v1652
    %v1685 = vmul.f32 %v1591, %v1653
    %v1686 = vmul.f32 %v1593, %v1654
    %v1687 = vmul.f32 %v1595, %v1655
    %v1688 = vmul.f32 %v1597, %v1656
    %v1689 = vmul.f32 %v1599, %v1657
    %v1690 = vmul.f32 %v1601, %v1658
    %v1691 = vmul.f32 %v1603, %v1659
    %v1692 = vmul.f32 %v1605, %v1660
    %v1693 = vmul.f32 %v1607, %v1661
    %v1694 = vmul.f32 %v1609, %v1662
    %v1695 = vmul.f32 %v1611, %v1663
    %v1696 = vmul.f32 %v1613, %v1664
    %v1697 = vmul.f32 %v1615, %v1665
    %v1698 = vmul.f32 %v1617, %v1666
    %v1699 = vmul.f32 %v1619, %v1667
    %v1700 = vmul.f32 %v1621, %v1668
    %v1701 = vmul.f32 %v1623, %v1669
    %v1702 = vmul.f32 %v1625, %v1670
    %v1703 = vmul.f32 %v1627, %v1671
    %v1704 = vmul.f32 %v1629, %v1672
    %v1705 = vmul.f32 %v1631, %v1673
    %v1706 = vmul.f32 %v1633, %v1674
    %v1707 = vmul.f32 %v1635, %v1675
    %v1708 = vmul.f32 %v1637, %v1676
    %v1709 = vmul.f32 %v1639, %v1677
    %v1710 = vmul.f32 %v1641, %v1678
    %v1711 = vmul.f32 %v1643, %v1679
    %v1712 = vmul.f32 %v1645, %v1680
    %v1713 = vmul.f32 %v1647, %v1681
    %v1714 = vmul.f32 %v1649, %v1682
    %v1715 = vmul.f32 %v1651, %v1683
    %v1716 = vadd.f32 %v1684, 2.0
    %v1717 = vadd.f32 %v1685, 2.0
    %v1718 = vadd.f32 %v1686, 2.0
    %v1719 = vadd.f32 %v1687, 2.0
    %v1720 = vadd.f32 %v1688, 2.0
    %v1721 = vadd.f32 %v1689, 2.0
    %v1722 = vadd.f32 %v1690, 2.0
    %v1723 = vadd.f32 %v1691, 2.0
    %v1724 = vadd.f32 %v1692, 2.0
    %v1725 = vadd.f32 %v1693, 2.0
    %v1726 = vadd.f32 %v1694, 2.0
    %v1727 = vadd.f32 %v1695, 2.0
    %v1728 = vadd.f32 %v1696, 2.0
    %v1729 = vadd.f32 %v1697, 2.0
    %v1730 = vadd.f32 %v1698, 2.0
    %v1731 = vadd.f32 %v1699, 2.0
    %v1732 = vadd.f32 %v1700, 2.0
    %v1733 = vadd.f32 %v1701, 2.0
    %v1734 = vadd.f32 %v1702, 2.0
    %v1735 = vadd.f32 %v1703, 2.0
    %v1736 = vadd.f32 %v1704, 2.0
    %v1737 = vadd.f32 %v1705, 2.0
    %v1738 = vadd.f32 %v1706, 2.0
    %v1739 = vadd.f32 %v1707, 2.0
    %v1740 = vadd.f32 %v1708, 2.0
    %v1741 = vadd.f32 %v1709, 2.0
    %v1742 = vadd.f32 %v1710, 2.0
    %v1743 = vadd.f32 %v1711, 2.0
    %v1744 = vadd.f32 %v1712, 2.0
    %v1745 = vadd.f32 %v1713, 2.0
    %v1746 = vadd.f32 %v1714, 2.0
    %v1747 = vadd.f32 %v1715, 2.0
    %v1748 = vrcp.pop %v1716
    %v1749 = vmul.f32 %v1716, %v1748
    %v1750 = vsub.f32 1.0, %v1749
    %v1751 = vmul.f32 %v1748, %v1750
    %v1752 = vadd.f32 %v1748, %v1751
    %vm1753 = vweird.f32 %v1716
    %vm1754 = vweird.f32 %v1748
    %vm1755 = vmor %vm1753, %vm1754
    %v1756 = vsel %vm1755, %v1748, %v1752
    %v1757 = vand.u32 2147483647, %v1716
    %vm1758 = vcmp.eq.f32.partialorder %v1757, 8.507059e+37
    %v1759 = vand.u32 %v1716, 2147483648
    %v1760 = vor.u32 1.1754944e-38, %v1759
    %v1761 = vsel %vm1758, %v1760, %v1756
    %v1762 = vmul.f32 %v1684, %v1761
    %v1763 = vrcp.pop %v1717
    %v1764 = vmul.f32 %v1717, %v1763
    %v1765 = vsub.f32 1.0, %v1764
    %v1766 = vmul.f32 %v1763, %v1765
    %v1767 = vadd.f32 %v1763, %v1766
    %vm1768 = vweird.f32 %v1717
    %vm1769 = vweird.f32 %v1763
    %vm1770 = vmor %vm1768, %vm1769
    %v1771 = vsel %vm1770, %v1763, %v1767
    %v1772 = vand.u32 2147483647, %v1717
    %vm1773 = vcmp.eq.f32.partialorder %v1772, 8.507059e+37
    %v1774 = vand.u32 %v1717, 2147483648
    %v1775 = vor.u32 1.1754944e-38, %v1774
    %v1776 = vsel %vm1773, %v1775, %v1771
    %v1777 = vmul.f32 %v1685, %v1776
    %v1778 = vrcp.pop %v1718
    %v1779 = vmul.f32 %v1718, %v1778
    %v1780 = vsub.f32 1.0, %v1779
    %v1781 = vmul.f32 %v1778, %v1780
    %v1782 = vadd.f32 %v1778, %v1781
    %vm1783 = vweird.f32 %v1718
    %vm1784 = vweird.f32 %v1778
    %vm1785 = vmor %vm1783, %vm1784
    %v1786 = vsel %vm1785, %v1778, %v1782
    %v1787 = vand.u32 2147483647, %v1718
    %vm1788 = vcmp.eq.f32.partialorder %v1787, 8.507059e+37
    %v1789 = vand.u32 %v1718, 2147483648
    %v1790 = vor.u32 1.1754944e-38, %v1789
    %v1791 = vsel %vm1788, %v1790, %v1786
    %v1792 = vmul.f32 %v1686, %v1791
    %v1793 = vrcp.pop %v1719
    %v1794 = vmul.f32 %v1719, %v1793
    %v1795 = vsub.f32 1.0, %v1794
    %v1796 = vmul.f32 %v1793, %v1795
    %v1797 = vadd.f32 %v1793, %v1796
    %vm1798 = vweird.f32 %v1719
    %vm1799 = vweird.f32 %v1793
    %vm1800 = vmor %vm1798, %vm1799
    %v1801 = vsel %vm1800, %v1793, %v1797
    %v1802 = vand.u32 2147483647, %v1719
    %vm1803 = vcmp.eq.f32.partialorder %v1802, 8.507059e+37
    %v1804 = vand.u32 %v1719, 2147483648
    %v1805 = vor.u32 1.1754944e-38, %v1804
    %v1806 = vsel %vm1803, %v1805, %v1801
    %v1807 = vmul.f32 %v1687, %v1806
    %v1808 = vrcp.pop %v1720
    %v1809 = vmul.f32 %v1720, %v1808
    %v1810 = vsub.f32 1.0, %v1809
    %v1811 = vmul.f32 %v1808, %v1810
    %v1812 = vadd.f32 %v1808, %v1811
    %vm1813 = vweird.f32 %v1720
    %vm1814 = vweird.f32 %v1808
    %vm1815 = vmor %vm1813, %vm1814
    %v1816 = vsel %vm1815, %v1808, %v1812
    %v1817 = vand.u32 2147483647, %v1720
    %vm1818 = vcmp.eq.f32.partialorder %v1817, 8.507059e+37
    %v1819 = vand.u32 %v1720, 2147483648
    %v1820 = vor.u32 1.1754944e-38, %v1819
    %v1821 = vsel %vm1818, %v1820, %v1816
    %v1822 = vmul.f32 %v1688, %v1821
    %v1823 = vrcp.pop %v1721
    %v1824 = vmul.f32 %v1721, %v1823
    %v1825 = vsub.f32 1.0, %v1824
    %v1826 = vmul.f32 %v1823, %v1825
    %v1827 = vadd.f32 %v1823, %v1826
    %vm1828 = vweird.f32 %v1721
    %vm1829 = vweird.f32 %v1823
    %vm1830 = vmor %vm1828, %vm1829
    %v1831 = vsel %vm1830, %v1823, %v1827
    %v1832 = vand.u32 2147483647, %v1721
    %vm1833 = vcmp.eq.f32.partialorder %v1832, 8.507059e+37
    %v1834 = vand.u32 %v1721, 2147483648
    %v1835 = vor.u32 1.1754944e-38, %v1834
    %v1836 = vsel %vm1833, %v1835, %v1831
    %v1837 = vmul.f32 %v1689, %v1836
    %v1838 = vrcp.pop %v1722
    %v1839 = vmul.f32 %v1722, %v1838
    %v1840 = vsub.f32 1.0, %v1839
    %v1841 = vmul.f32 %v1838, %v1840
    %v1842 = vadd.f32 %v1838, %v1841
    %vm1843 = vweird.f32 %v1722
    %vm1844 = vweird.f32 %v1838
    %vm1845 = vmor %vm1843, %vm1844
    %v1846 = vsel %vm1845, %v1838, %v1842
    %v1847 = vand.u32 2147483647, %v1722
    %vm1848 = vcmp.eq.f32.partialorder %v1847, 8.507059e+37
    %v1849 = vand.u32 %v1722, 2147483648
    %v1850 = vor.u32 1.1754944e-38, %v1849
    %v1851 = vsel %vm1848, %v1850, %v1846
    %v1852 = vmul.f32 %v1690, %v1851
    %v1853 = vrcp.pop %v1723
    %v1854 = vmul.f32 %v1723, %v1853
    %v1855 = vsub.f32 1.0, %v1854
    %v1856 = vmul.f32 %v1853, %v1855
    %v1857 = vadd.f32 %v1853, %v1856
    %vm1858 = vweird.f32 %v1723
    %vm1859 = vweird.f32 %v1853
    %vm1860 = vmor %vm1858, %vm1859
    %v1861 = vsel %vm1860, %v1853, %v1857
    %v1862 = vand.u32 2147483647, %v1723
    %vm1863 = vcmp.eq.f32.partialorder %v1862, 8.507059e+37
    %v1864 = vand.u32 %v1723, 2147483648
    %v1865 = vor.u32 1.1754944e-38, %v1864
    %v1866 = vsel %vm1863, %v1865, %v1861
    %v1867 = vmul.f32 %v1691, %v1866
    %v1868 = vrcp.pop %v1724
    %v1869 = vmul.f32 %v1724, %v1868
    %v1870 = vsub.f32 1.0, %v1869
    %v1871 = vmul.f32 %v1868, %v1870
    %v1872 = vadd.f32 %v1868, %v1871
    %vm1873 = vweird.f32 %v1724
    %vm1874 = vweird.f32 %v1868
    %vm1875 = vmor %vm1873, %vm1874
    %v1876 = vsel %vm1875, %v1868, %v1872
    %v1877 = vand.u32 2147483647, %v1724
    %vm1878 = vcmp.eq.f32.partialorder %v1877, 8.507059e+37
    %v1879 = vand.u32 %v1724, 2147483648
    %v1880 = vor.u32 1.1754944e-38, %v1879
    %v1881 = vsel %vm1878, %v1880, %v1876
    %v1882 = vmul.f32 %v1692, %v1881
    %v1883 = vrcp.pop %v1725
    %v1884 = vmul.f32 %v1725, %v1883
    %v1885 = vsub.f32 1.0, %v1884
    %v1886 = vmul.f32 %v1883, %v1885
    %v1887 = vadd.f32 %v1883, %v1886
    %vm1888 = vweird.f32 %v1725
    %vm1889 = vweird.f32 %v1883
    %vm1890 = vmor %vm1888, %vm1889
    %v1891 = vsel %vm1890, %v1883, %v1887
    %v1892 = vand.u32 2147483647, %v1725
    %vm1893 = vcmp.eq.f32.partialorder %v1892, 8.507059e+37
    %v1894 = vand.u32 %v1725, 2147483648
    %v1895 = vor.u32 1.1754944e-38, %v1894
    %v1896 = vsel %vm1893, %v1895, %v1891
    %v1897 = vmul.f32 %v1693, %v1896
    %v1898 = vrcp.pop %v1726
    %v1899 = vmul.f32 %v1726, %v1898
    %v1900 = vsub.f32 1.0, %v1899
    %v1901 = vmul.f32 %v1898, %v1900
    %v1902 = vadd.f32 %v1898, %v1901
    %vm1903 = vweird.f32 %v1726
    %vm1904 = vweird.f32 %v1898
    %vm1905 = vmor %vm1903, %vm1904
    %v1906 = vsel %vm1905, %v1898, %v1902
    %v1907 = vand.u32 2147483647, %v1726
    %vm1908 = vcmp.eq.f32.partialorder %v1907, 8.507059e+37
    %v1909 = vand.u32 %v1726, 2147483648
    %v1910 = vor.u32 1.1754944e-38, %v1909
    %v1911 = vsel %vm1908, %v1910, %v1906
    %v1912 = vmul.f32 %v1694, %v1911
    %v1913 = vrcp.pop %v1727
    %v1914 = vmul.f32 %v1727, %v1913
    %v1915 = vsub.f32 1.0, %v1914
    %v1916 = vmul.f32 %v1913, %v1915
    %v1917 = vadd.f32 %v1913, %v1916
    %vm1918 = vweird.f32 %v1727
    %vm1919 = vweird.f32 %v1913
    %vm1920 = vmor %vm1918, %vm1919
    %v1921 = vsel %vm1920, %v1913, %v1917
    %v1922 = vand.u32 2147483647, %v1727
    %vm1923 = vcmp.eq.f32.partialorder %v1922, 8.507059e+37
    %v1924 = vand.u32 %v1727, 2147483648
    %v1925 = vor.u32 1.1754944e-38, %v1924
    %v1926 = vsel %vm1923, %v1925, %v1921
    %v1927 = vmul.f32 %v1695, %v1926
    %v1928 = vrcp.pop %v1728
    %v1929 = vmul.f32 %v1728, %v1928
    %v1930 = vsub.f32 1.0, %v1929
    %v1931 = vmul.f32 %v1928, %v1930
    %v1932 = vadd.f32 %v1928, %v1931
    %vm1933 = vweird.f32 %v1728
    %vm1934 = vweird.f32 %v1928
    %vm1935 = vmor %vm1933, %vm1934
    %v1936 = vsel %vm1935, %v1928, %v1932
    %v1937 = vand.u32 2147483647, %v1728
    %vm1938 = vcmp.eq.f32.partialorder %v1937, 8.507059e+37
    %v1939 = vand.u32 %v1728, 2147483648
    %v1940 = vor.u32 1.1754944e-38, %v1939
    %v1941 = vsel %vm1938, %v1940, %v1936
    %v1942 = vmul.f32 %v1696, %v1941
    %v1943 = vrcp.pop %v1729
    %v1944 = vmul.f32 %v1729, %v1943
    %v1945 = vsub.f32 1.0, %v1944
    %v1946 = vmul.f32 %v1943, %v1945
    %v1947 = vadd.f32 %v1943, %v1946
    %vm1948 = vweird.f32 %v1729
    %vm1949 = vweird.f32 %v1943
    %vm1950 = vmor %vm1948, %vm1949
    %v1951 = vsel %vm1950, %v1943, %v1947
    %v1952 = vand.u32 2147483647, %v1729
    %vm1953 = vcmp.eq.f32.partialorder %v1952, 8.507059e+37
    %v1954 = vand.u32 %v1729, 2147483648
    %v1955 = vor.u32 1.1754944e-38, %v1954
    %v1956 = vsel %vm1953, %v1955, %v1951
    %v1957 = vmul.f32 %v1697, %v1956
    %v1958 = vrcp.pop %v1730
    %v1959 = vmul.f32 %v1730, %v1958
    %v1960 = vsub.f32 1.0, %v1959
    %v1961 = vmul.f32 %v1958, %v1960
    %v1962 = vadd.f32 %v1958, %v1961
    %vm1963 = vweird.f32 %v1730
    %vm1964 = vweird.f32 %v1958
    %vm1965 = vmor %vm1963, %vm1964
    %v1966 = vsel %vm1965, %v1958, %v1962
    %v1967 = vand.u32 2147483647, %v1730
    %vm1968 = vcmp.eq.f32.partialorder %v1967, 8.507059e+37
    %v1969 = vand.u32 %v1730, 2147483648
    %v1970 = vor.u32 1.1754944e-38, %v1969
    %v1971 = vsel %vm1968, %v1970, %v1966
    %v1972 = vmul.f32 %v1698, %v1971
    %v1973 = vrcp.pop %v1731
    %v1974 = vmul.f32 %v1731, %v1973
    %v1975 = vsub.f32 1.0, %v1974
    %v1976 = vmul.f32 %v1973, %v1975
    %v1977 = vadd.f32 %v1973, %v1976
    %vm1978 = vweird.f32 %v1731
    %vm1979 = vweird.f32 %v1973
    %vm1980 = vmor %vm1978, %vm1979
    %v1981 = vsel %vm1980, %v1973, %v1977
    %v1982 = vand.u32 2147483647, %v1731
    %vm1983 = vcmp.eq.f32.partialorder %v1982, 8.507059e+37
    %v1984 = vand.u32 %v1731, 2147483648
    %v1985 = vor.u32 1.1754944e-38, %v1984
    %v1986 = vsel %vm1983, %v1985, %v1981
    %v1987 = vmul.f32 %v1699, %v1986
    %v1988 = vrcp.pop %v1732
    %v1989 = vmul.f32 %v1732, %v1988
    %v1990 = vsub.f32 1.0, %v1989
    %v1991 = vmul.f32 %v1988, %v1990
    %v1992 = vadd.f32 %v1988, %v1991
    %vm1993 = vweird.f32 %v1732
    %vm1994 = vweird.f32 %v1988
    %vm1995 = vmor %vm1993, %vm1994
    %v1996 = vsel %vm1995, %v1988, %v1992
    %v1997 = vand.u32 2147483647, %v1732
    %vm1998 = vcmp.eq.f32.partialorder %v1997, 8.507059e+37
    %v1999 = vand.u32 %v1732, 2147483648
    %v2000 = vor.u32 1.1754944e-38, %v1999
    %v2001 = vsel %vm1998, %v2000, %v1996
    %v2002 = vmul.f32 %v1700, %v2001
    %v2003 = vrcp.pop %v1733
    %v2004 = vmul.f32 %v1733, %v2003
    %v2005 = vsub.f32 1.0, %v2004
    %v2006 = vmul.f32 %v2003, %v2005
    %v2007 = vadd.f32 %v2003, %v2006
    %vm2008 = vweird.f32 %v1733
    %vm2009 = vweird.f32 %v2003
    %vm2010 = vmor %vm2008, %vm2009
    %v2011 = vsel %vm2010, %v2003, %v2007
    %v2012 = vand.u32 2147483647, %v1733
    %vm2013 = vcmp.eq.f32.partialorder %v2012, 8.507059e+37
    %v2014 = vand.u32 %v1733, 2147483648
    %v2015 = vor.u32 1.1754944e-38, %v2014
    %v2016 = vsel %vm2013, %v2015, %v2011
    %v2017 = vmul.f32 %v1701, %v2016
    %v2018 = vrcp.pop %v1734
    %v2019 = vmul.f32 %v1734, %v2018
    %v2020 = vsub.f32 1.0, %v2019
    %v2021 = vmul.f32 %v2018, %v2020
    %v2022 = vadd.f32 %v2018, %v2021
    %vm2023 = vweird.f32 %v1734
    %vm2024 = vweird.f32 %v2018
    %vm2025 = vmor %vm2023, %vm2024
    %v2026 = vsel %vm2025, %v2018, %v2022
    %v2027 = vand.u32 2147483647, %v1734
    %vm2028 = vcmp.eq.f32.partialorder %v2027, 8.507059e+37
    %v2029 = vand.u32 %v1734, 2147483648
    %v2030 = vor.u32 1.1754944e-38, %v2029
    %v2031 = vsel %vm2028, %v2030, %v2026
    %v2032 = vmul.f32 %v1702, %v2031
    %v2033 = vrcp.pop %v1735
    %v2034 = vmul.f32 %v1735, %v2033
    %v2035 = vsub.f32 1.0, %v2034
    %v2036 = vmul.f32 %v2033, %v2035
    %v2037 = vadd.f32 %v2033, %v2036
    %vm2038 = vweird.f32 %v1735
    %vm2039 = vweird.f32 %v2033
    %vm2040 = vmor %vm2038, %vm2039
    %v2041 = vsel %vm2040, %v2033, %v2037
    %v2042 = vand.u32 2147483647, %v1735
    %vm2043 = vcmp.eq.f32.partialorder %v2042, 8.507059e+37
    %v2044 = vand.u32 %v1735, 2147483648
    %v2045 = vor.u32 1.1754944e-38, %v2044
    %v2046 = vsel %vm2043, %v2045, %v2041
    %v2047 = vmul.f32 %v1703, %v2046
    %v2048 = vrcp.pop %v1736
    %v2049 = vmul.f32 %v1736, %v2048
    %v2050 = vsub.f32 1.0, %v2049
    %v2051 = vmul.f32 %v2048, %v2050
    %v2052 = vadd.f32 %v2048, %v2051
    %vm2053 = vweird.f32 %v1736
    %vm2054 = vweird.f32 %v2048
    %vm2055 = vmor %vm2053, %vm2054
    %v2056 = vsel %vm2055, %v2048, %v2052
    %v2057 = vand.u32 2147483647, %v1736
    %vm2058 = vcmp.eq.f32.partialorder %v2057, 8.507059e+37
    %v2059 = vand.u32 %v1736, 2147483648
    %v2060 = vor.u32 1.1754944e-38, %v2059
    %v2061 = vsel %vm2058, %v2060, %v2056
    %v2062 = vmul.f32 %v1704, %v2061
    %v2063 = vrcp.pop %v1737
    %v2064 = vmul.f32 %v1737, %v2063
    %v2065 = vsub.f32 1.0, %v2064
    %v2066 = vmul.f32 %v2063, %v2065
    %v2067 = vadd.f32 %v2063, %v2066
    %vm2068 = vweird.f32 %v1737
    %vm2069 = vweird.f32 %v2063
    %vm2070 = vmor %vm2068, %vm2069
    %v2071 = vsel %vm2070, %v2063, %v2067
    %v2072 = vand.u32 2147483647, %v1737
    %vm2073 = vcmp.eq.f32.partialorder %v2072, 8.507059e+37
    %v2074 = vand.u32 %v1737, 2147483648
    %v2075 = vor.u32 1.1754944e-38, %v2074
    %v2076 = vsel %vm2073, %v2075, %v2071
    %v2077 = vmul.f32 %v1705, %v2076
    %v2078 = vrcp.pop %v1738
    %v2079 = vmul.f32 %v1738, %v2078
    %v2080 = vsub.f32 1.0, %v2079
    %v2081 = vmul.f32 %v2078, %v2080
    %v2082 = vadd.f32 %v2078, %v2081
    %vm2083 = vweird.f32 %v1738
    %vm2084 = vweird.f32 %v2078
    %vm2085 = vmor %vm2083, %vm2084
    %v2086 = vsel %vm2085, %v2078, %v2082
    %v2087 = vand.u32 2147483647, %v1738
    %vm2088 = vcmp.eq.f32.partialorder %v2087, 8.507059e+37
    %v2089 = vand.u32 %v1738, 2147483648
    %v2090 = vor.u32 1.1754944e-38, %v2089
    %v2091 = vsel %vm2088, %v2090, %v2086
    %v2092 = vmul.f32 %v1706, %v2091
    %v2093 = vrcp.pop %v1739
    %v2094 = vmul.f32 %v1739, %v2093
    %v2095 = vsub.f32 1.0, %v2094
    %v2096 = vmul.f32 %v2093, %v2095
    %v2097 = vadd.f32 %v2093, %v2096
    %vm2098 = vweird.f32 %v1739
    %vm2099 = vweird.f32 %v2093
    %vm2100 = vmor %vm2098, %vm2099
    %v2101 = vsel %vm2100, %v2093, %v2097
    %v2102 = vand.u32 2147483647, %v1739
    %vm2103 = vcmp.eq.f32.partialorder %v2102, 8.507059e+37
    %v2104 = vand.u32 %v1739, 2147483648
    %v2105 = vor.u32 1.1754944e-38, %v2104
    %v2106 = vsel %vm2103, %v2105, %v2101
    %v2107 = vmul.f32 %v1707, %v2106
    %v2108 = vrcp.pop %v1740
    %v2109 = vmul.f32 %v1740, %v2108
    %v2110 = vsub.f32 1.0, %v2109
    %v2111 = vmul.f32 %v2108, %v2110
    %v2112 = vadd.f32 %v2108, %v2111
    %vm2113 = vweird.f32 %v1740
    %vm2114 = vweird.f32 %v2108
    %vm2115 = vmor %vm2113, %vm2114
    %v2116 = vsel %vm2115, %v2108, %v2112
    %v2117 = vand.u32 2147483647, %v1740
    %vm2118 = vcmp.eq.f32.partialorder %v2117, 8.507059e+37
    %v2119 = vand.u32 %v1740, 2147483648
    %v2120 = vor.u32 1.1754944e-38, %v2119
    %v2121 = vsel %vm2118, %v2120, %v2116
    %v2122 = vmul.f32 %v1708, %v2121
    %v2123 = vrcp.pop %v1741
    %v2124 = vmul.f32 %v1741, %v2123
    %v2125 = vsub.f32 1.0, %v2124
    %v2126 = vmul.f32 %v2123, %v2125
    %v2127 = vadd.f32 %v2123, %v2126
    %vm2128 = vweird.f32 %v1741
    %vm2129 = vweird.f32 %v2123
    %vm2130 = vmor %vm2128, %vm2129
    %v2131 = vsel %vm2130, %v2123, %v2127
    %v2132 = vand.u32 2147483647, %v1741
    %vm2133 = vcmp.eq.f32.partialorder %v2132, 8.507059e+37
    %v2134 = vand.u32 %v1741, 2147483648
    %v2135 = vor.u32 1.1754944e-38, %v2134
    %v2136 = vsel %vm2133, %v2135, %v2131
    %v2137 = vmul.f32 %v1709, %v2136
    %v2138 = vrcp.pop %v1742
    %v2139 = vmul.f32 %v1742, %v2138
    %v2140 = vsub.f32 1.0, %v2139
    %v2141 = vmul.f32 %v2138, %v2140
    %v2142 = vadd.f32 %v2138, %v2141
    %vm2143 = vweird.f32 %v1742
    %vm2144 = vweird.f32 %v2138
    %vm2145 = vmor %vm2143, %vm2144
    %v2146 = vsel %vm2145, %v2138, %v2142
    %v2147 = vand.u32 2147483647, %v1742
    %vm2148 = vcmp.eq.f32.partialorder %v2147, 8.507059e+37
    %v2149 = vand.u32 %v1742, 2147483648
    %v2150 = vor.u32 1.1754944e-38, %v2149
    %v2151 = vsel %vm2148, %v2150, %v2146
    %v2152 = vmul.f32 %v1710, %v2151
    %v2153 = vrcp.pop %v1743
    %v2154 = vmul.f32 %v1743, %v2153
    %v2155 = vsub.f32 1.0, %v2154
    %v2156 = vmul.f32 %v2153, %v2155
    %v2157 = vadd.f32 %v2153, %v2156
    %vm2158 = vweird.f32 %v1743
    %vm2159 = vweird.f32 %v2153
    %vm2160 = vmor %vm2158, %vm2159
    %v2161 = vsel %vm2160, %v2153, %v2157
    %v2162 = vand.u32 2147483647, %v1743
    %vm2163 = vcmp.eq.f32.partialorder %v2162, 8.507059e+37
    %v2164 = vand.u32 %v1743, 2147483648
    %v2165 = vor.u32 1.1754944e-38, %v2164
    %v2166 = vsel %vm2163, %v2165, %v2161
    %v2167 = vmul.f32 %v1711, %v2166
    %v2168 = vrcp.pop %v1744
    %v2169 = vmul.f32 %v1744, %v2168
    %v2170 = vsub.f32 1.0, %v2169
    %v2171 = vmul.f32 %v2168, %v2170
    %v2172 = vadd.f32 %v2168, %v2171
    %vm2173 = vweird.f32 %v1744
    %vm2174 = vweird.f32 %v2168
    %vm2175 = vmor %vm2173, %vm2174
    %v2176 = vsel %vm2175, %v2168, %v2172
    %v2177 = vand.u32 2147483647, %v1744
    %vm2178 = vcmp.eq.f32.partialorder %v2177, 8.507059e+37
    %v2179 = vand.u32 %v1744, 2147483648
    %v2180 = vor.u32 1.1754944e-38, %v2179
    %v2181 = vsel %vm2178, %v2180, %v2176
    %v2182 = vmul.f32 %v1712, %v2181
    %v2183 = vrcp.pop %v1745
    %v2184 = vmul.f32 %v1745, %v2183
    %v2185 = vsub.f32 1.0, %v2184
    %v2186 = vmul.f32 %v2183, %v2185
    %v2187 = vadd.f32 %v2183, %v2186
    %vm2188 = vweird.f32 %v1745
    %vm2189 = vweird.f32 %v2183
    %vm2190 = vmor %vm2188, %vm2189
    %v2191 = vsel %vm2190, %v2183, %v2187
    %v2192 = vand.u32 2147483647, %v1745
    %vm2193 = vcmp.eq.f32.partialorder %v2192, 8.507059e+37
    %v2194 = vand.u32 %v1745, 2147483648
    %v2195 = vor.u32 1.1754944e-38, %v2194
    %v2196 = vsel %vm2193, %v2195, %v2191
    %v2197 = vmul.f32 %v1713, %v2196
    %v2198 = vrcp.pop %v1746
    %v2199 = vmul.f32 %v1746, %v2198
    %v2200 = vsub.f32 1.0, %v2199
    %v2201 = vmul.f32 %v2198, %v2200
    %v2202 = vadd.f32 %v2198, %v2201
    %vm2203 = vweird.f32 %v1746
    %vm2204 = vweird.f32 %v2198
    %vm2205 = vmor %vm2203, %vm2204
    %v2206 = vsel %vm2205, %v2198, %v2202
    %v2207 = vand.u32 2147483647, %v1746
    %vm2208 = vcmp.eq.f32.partialorder %v2207, 8.507059e+37
    %v2209 = vand.u32 %v1746, 2147483648
    %v2210 = vor.u32 1.1754944e-38, %v2209
    %v2211 = vsel %vm2208, %v2210, %v2206
    %v2212 = vmul.f32 %v1714, %v2211
    %v2213 = vrcp.pop %v1747
    %v2214 = vmul.f32 %v1747, %v2213
    %v2215 = vsub.f32 1.0, %v2214
    %v2216 = vmul.f32 %v2213, %v2215
    %v2217 = vadd.f32 %v2213, %v2216
    %vm2218 = vweird.f32 %v1747
    %vm2219 = vweird.f32 %v2213
    %vm2220 = vmor %vm2218, %vm2219
    %v2221 = vsel %vm2220, %v2213, %v2217
    %v2222 = vand.u32 2147483647, %v1747
    %vm2223 = vcmp.eq.f32.partialorder %v2222, 8.507059e+37
    %v2224 = vand.u32 %v1747, 2147483648
    %v2225 = vor.u32 1.1754944e-38, %v2224
    %v2226 = vsel %vm2223, %v2225, %v2221
    %v2227 = vmul.f32 %v1715, %v2226
    %v2228 = vmul.f32 %v1379, %v1762
    %v2229 = vmul.f32 %v1509, %v1777
    %v2230 = vmul.f32 %v1382, %v1792
    %v2231 = vmul.f32 %v1512, %v1807
    %v2232 = vmul.f32 %v1385, %v1822
    %v2233 = vmul.f32 %v1515, %v1837
    %v2234 = vmul.f32 %v1388, %v1852
    %v2235 = vmul.f32 %v1518, %v1867
    %v2236 = vmul.f32 %v1391, %v1882
    %v2237 = vmul.f32 %v1521, %v1897
    %v2238 = vmul.f32 %v1394, %v1912
    %v2239 = vmul.f32 %v1524, %v1927
    %v2240 = vmul.f32 %v1397, %v1942
    %v2241 = vmul.f32 %v1527, %v1957
    %v2242 = vmul.f32 %v1400, %v1972
    %v2243 = vmul.f32 %v1530, %v1987
    %v2244 = vmul.f32 %v1403, %v2002
    %v2245 = vmul.f32 %v1533, %v2017
    %v2246 = vmul.f32 %v1406, %v2032
    %v2247 = vmul.f32 %v1536, %v2047
    %v2248 = vmul.f32 %v1409, %v2062
    %v2249 = vmul.f32 %v1539, %v2077
    %v2250 = vmul.f32 %v1412, %v2092
    %v2251 = vmul.f32 %v1542, %v2107
    %v2252 = vmul.f32 %v1415, %v2122
    %v2253 = vmul.f32 %v1545, %v2137
    %v2254 = vmul.f32 %v1418, %v2152
    %v2255 = vmul.f32 %v1548, %v2167
    %v2256 = vmul.f32 %v1421, %v2182
    %v2257 = vmul.f32 %v1551, %v2197
    %v2258 = vmul.f32 %v1424, %v2212
    %v2259 = vmul.f32 %v1554, %v2227
    %v2260 = vld [vmem:[#allocation5] sm:$0xff]
    %v2261 = vld [vmem:[#allocation5 + $0x8] sm:$0xff]
    %v2262 = vld [vmem:[#allocation5 + $0x10] sm:$0xff]
    %v2263 = vld [vmem:[#allocation5 + $0x18] sm:$0xff]
    %v2264 = vld [vmem:[#allocation5 + $0x20] sm:$0xff]
    %v2265 = vld [vmem:[#allocation5 + $0x28] sm:$0xff]
    %v2266 = vld [vmem:[#allocation5 + $0x30] sm:$0xff]
    %v2267 = vld [vmem:[#allocation5 + $0x38] sm:$0xff]
    %v2268 = vld [vmem:[#allocation5 + $0x40] sm:$0xff]
    %v2269 = vld [vmem:[#allocation5 + $0x48] sm:$0xff]
    %v2270 = vld [vmem:[#allocation5 + $0x50] sm:$0xff]
    %v2271 = vld [vmem:[#allocation5 + $0x58] sm:$0xff]
    %v2272 = vld [vmem:[#allocation5 + $0x60] sm:$0xff]
    %v2273 = vld [vmem:[#allocation5 + $0x68] sm:$0xff]
    %v2274 = vld [vmem:[#allocation5 + $0x70] sm:$0xff]
    %v2275 = vld [vmem:[#allocation5 + $0x78] sm:$0xff]
    %v2276 = vld [vmem:[#allocation5 + $0x80] sm:$0xff]
    %v2277 = vld [vmem:[#allocation5 + $0x88] sm:$0xff]
    %v2278 = vld [vmem:[#allocation5 + $0x90] sm:$0xff]
    %v2279 = vld [vmem:[#allocation5 + $0x98] sm:$0xff]
    %v2280 = vld [vmem:[#allocation5 + $0xa0] sm:$0xff]
    %v2281 = vld [vmem:[#allocation5 + $0xa8] sm:$0xff]
    %v2282 = vld [vmem:[#allocation5 + $0xb0] sm:$0xff]
    %v2283 = vld [vmem:[#allocation5 + $0xb8] sm:$0xff]
    %v2284 = vld [vmem:[#allocation5 + $0xc0] sm:$0xff]
    %v2285 = vld [vmem:[#allocation5 + $0xc8] sm:$0xff]
    %v2286 = vld [vmem:[#allocation5 + $0xd0] sm:$0xff]
    %v2287 = vld [vmem:[#allocation5 + $0xd8] sm:$0xff]
    %v2288 = vld [vmem:[#allocation5 + $0xe0] sm:$0xff]
    %v2289 = vld [vmem:[#allocation5 + $0xe8] sm:$0xff]
    %v2290 = vld [vmem:[#allocation5 + $0xf0] sm:$0xff]
    %v2291 = vld [vmem:[#allocation5 + $0xf8] sm:$0xff]
    %v2292 = vld [vmem:[#allocation5 + $0x100] sm:$0xff]
    %v2293 = vld [vmem:[#allocation5 + $0x108] sm:$0xff]
    %v2294 = vld [vmem:[#allocation5 + $0x110] sm:$0xff]
    %v2295 = vld [vmem:[#allocation5 + $0x118] sm:$0xff]
    %v2296 = vld [vmem:[#allocation5 + $0x120] sm:$0xff]
    %v2297 = vld [vmem:[#allocation5 + $0x128] sm:$0xff]
    %v2298 = vld [vmem:[#allocation5 + $0x130] sm:$0xff]
    %v2299 = vld [vmem:[#allocation5 + $0x138] sm:$0xff]
    %v2300 = vld [vmem:[#allocation5 + $0x140] sm:$0xff]
    %v2301 = vld [vmem:[#allocation5 + $0x148] sm:$0xff]
    %v2302 = vld [vmem:[#allocation5 + $0x150] sm:$0xff]
    %v2303 = vld [vmem:[#allocation5 + $0x158] sm:$0xff]
    %v2304 = vld [vmem:[#allocation5 + $0x160] sm:$0xff]
    %v2305 = vld [vmem:[#allocation5 + $0x168] sm:$0xff]
    %v2306 = vld [vmem:[#allocation5 + $0x170] sm:$0xff]
    %v2307 = vld [vmem:[#allocation5 + $0x178] sm:$0xff]
    %v2308 = vld [vmem:[#allocation5 + $0x180] sm:$0xff]
    %v2309 = vld [vmem:[#allocation5 + $0x188] sm:$0xff]
    %v2310 = vld [vmem:[#allocation5 + $0x190] sm:$0xff]
    %v2311 = vld [vmem:[#allocation5 + $0x198] sm:$0xff]
    %v2312 = vld [vmem:[#allocation5 + $0x1a0] sm:$0xff]
    %v2313 = vld [vmem:[#allocation5 + $0x1a8] sm:$0xff]
    %v2314 = vld [vmem:[#allocation5 + $0x1b0] sm:$0xff]
    %v2315 = vld [vmem:[#allocation5 + $0x1b8] sm:$0xff]
    %v2316 = vld [vmem:[#allocation5 + $0x1c0] sm:$0xff]
    %v2317 = vld [vmem:[#allocation5 + $0x1c8] sm:$0xff]
    %v2318 = vld [vmem:[#allocation5 + $0x1d0] sm:$0xff]
    %v2319 = vld [vmem:[#allocation5 + $0x1d8] sm:$0xff]
    %v2320 = vld [vmem:[#allocation5 + $0x1e0] sm:$0xff]
    %v2321 = vld [vmem:[#allocation5 + $0x1e8] sm:$0xff]
    %v2322 = vld [vmem:[#allocation5 + $0x1f0] sm:$0xff]
    %v2323 = vld [vmem:[#allocation5 + $0x1f8] sm:$0xff]
    %v2324 = vld [vmem:[%s6] sm:$0x3]
    %v2326 = vperm.slane %v2324, 0
    %v2327 = vperm.slane %v2324, 1
    %2330 = vmatpush.msra.mxu0 %v2290
    %2331 = vmatpush.msra.mxu0 %v2288
    %2332 = vmatpush.msra.mxu0 %v2286
    %2333 = vmatpush.msra.mxu0 %v2284
    %2334 = vmatpush.msra.mxu0 %v2282
    %2335 = vmatpush.msra.mxu0 %v2280
    %2336 = vmatpush.msra.mxu0 %v2278
    %2337 = vmatpush.msra.mxu0 %v2276
    %2338 = vmatpush.msra.mxu0 %v2274
    %2339 = vmatpush.msra.mxu0 %v2272
    %2340 = vmatpush.msra.mxu0 %v2270
    %2341 = vmatpush.msra.mxu0 %v2268
    %2342 = vmatpush.msra.mxu0 %v2266
    %2343 = vmatpush.msra.mxu0 %v2264
    %2344 = vmatpush.msra.mxu0 %v2262
    %2345 = vmatpush.msra.mxu0 %v2260
    %2346 = vmatmul.f32.gmra.mxu0 %v2228
    %v2347 = vpop.f32.mrf.mxu0
    %v2348 = vadd.f32 %v2326, %v2347
    %2349 = vmatmul.f32.gmra.mxu0 %v2230
    %v2350 = vpop.f32.mrf.mxu0
    %v2351 = vadd.f32 %v2326, %v2350
    %2352 = vmatmul.f32.gmra.mxu0 %v2232
    %v2353 = vpop.f32.mrf.mxu0
    %v2354 = vadd.f32 %v2326, %v2353
    %2355 = vmatmul.f32.gmra.mxu0 %v2234
    %v2356 = vpop.f32.mrf.mxu0
    %v2357 = vadd.f32 %v2326, %v2356
    %2358 = vmatmul.f32.gmra.mxu0 %v2236
    %v2359 = vpop.f32.mrf.mxu0
    %v2360 = vadd.f32 %v2326, %v2359
    %2361 = vmatmul.f32.gmra.mxu0 %v2238
    %v2362 = vpop.f32.mrf.mxu0
    %v2363 = vadd.f32 %v2326, %v2362
    %2364 = vmatmul.f32.gmra.mxu0 %v2240
    %v2365 = vpop.f32.mrf.mxu0
    %v2366 = vadd.f32 %v2326, %v2365
    %2367 = vmatmul.f32.gmra.mxu0 %v2242
    %v2368 = vpop.f32.mrf.mxu0
    %v2369 = vadd.f32 %v2326, %v2368
    %2370 = vmatmul.f32.gmra.mxu0 %v2244
    %v2371 = vpop.f32.mrf.mxu0
    %v2372 = vadd.f32 %v2326, %v2371
    %2373 = vmatmul.f32.gmra.mxu0 %v2246
    %v2374 = vpop.f32.mrf.mxu0
    %v2375 = vadd.f32 %v2326, %v2374
    %2376 = vmatmul.f32.gmra.mxu0 %v2248
    %v2377 = vpop.f32.mrf.mxu0
    %v2378 = vadd.f32 %v2326, %v2377
    %2379 = vmatmul.f32.gmra.mxu0 %v2250
    %v2380 = vpop.f32.mrf.mxu0
    %v2381 = vadd.f32 %v2326, %v2380
    %2382 = vmatmul.f32.gmra.mxu0 %v2252
    %v2383 = vpop.f32.mrf.mxu0
    %v2384 = vadd.f32 %v2326, %v2383
    %2385 = vmatmul.f32.gmra.mxu0 %v2254
    %v2386 = vpop.f32.mrf.mxu0
    %v2387 = vadd.f32 %v2326, %v2386
    %2388 = vmatmul.f32.gmra.mxu0 %v2256
    %v2389 = vpop.f32.mrf.mxu0
    %v2390 = vadd.f32 %v2326, %v2389
    %2391 = vmatmul.f32.gmra.mxu0 %v2258
    %v2392 = vpop.f32.mrf.mxu0
    %v2393 = vadd.f32 %v2326, %v2392
    %2394 = vdwg.mxu0
    %2395 = vmatpush.msra.mxu0 %v2322
    %2396 = vmatpush.msra.mxu0 %v2320
    %2397 = vmatpush.msra.mxu0 %v2318
    %2398 = vmatpush.msra.mxu0 %v2316
    %2399 = vmatpush.msra.mxu0 %v2314
    %2400 = vmatpush.msra.mxu0 %v2312
    %2401 = vmatpush.msra.mxu0 %v2310
    %2402 = vmatpush.msra.mxu0 %v2308
    %2403 = vmatpush.msra.mxu0 %v2306
    %2404 = vmatpush.msra.mxu0 %v2304
    %2405 = vmatpush.msra.mxu0 %v2302
    %2406 = vmatpush.msra.mxu0 %v2300
    %2407 = vmatpush.msra.mxu0 %v2298
    %2408 = vmatpush.msra.mxu0 %v2296
    %2409 = vmatpush.msra.mxu0 %v2294
    %2410 = vmatpush.msra.mxu0 %v2292
    %2411 = vmatmul.f32.gmra.mxu0 %v2229
    %v2412 = vpop.f32.mrf.mxu0
    %v2413 = vadd.f32 %v2348, %v2412
    %2414 = vmatmul.f32.gmra.mxu0 %v2231
    %v2415 = vpop.f32.mrf.mxu0
    %v2416 = vadd.f32 %v2351, %v2415
    %2417 = vmatmul.f32.gmra.mxu0 %v2233
    %v2418 = vpop.f32.mrf.mxu0
    %v2419 = vadd.f32 %v2354, %v2418
    %2420 = vmatmul.f32.gmra.mxu0 %v2235
    %v2421 = vpop.f32.mrf.mxu0
    %v2422 = vadd.f32 %v2357, %v2421
    %2423 = vmatmul.f32.gmra.mxu0 %v2237
    %v2424 = vpop.f32.mrf.mxu0
    %v2425 = vadd.f32 %v2360, %v2424
    %2426 = vmatmul.f32.gmra.mxu0 %v2239
    %v2427 = vpop.f32.mrf.mxu0
    %v2428 = vadd.f32 %v2363, %v2427
    %2429 = vmatmul.f32.gmra.mxu0 %v2241
    %v2430 = vpop.f32.mrf.mxu0
    %v2431 = vadd.f32 %v2366, %v2430
    %2432 = vmatmul.f32.gmra.mxu0 %v2243
    %v2433 = vpop.f32.mrf.mxu0
    %v2434 = vadd.f32 %v2369, %v2433
    %2435 = vmatmul.f32.gmra.mxu0 %v2245
    %v2436 = vpop.f32.mrf.mxu0
    %v2437 = vadd.f32 %v2372, %v2436
    %2438 = vmatmul.f32.gmra.mxu0 %v2247
    %v2439 = vpop.f32.mrf.mxu0
    %v2440 = vadd.f32 %v2375, %v2439
    %2441 = vmatmul.f32.gmra.mxu0 %v2249
    %v2442 = vpop.f32.mrf.mxu0
    %v2443 = vadd.f32 %v2378, %v2442
    %2444 = vmatmul.f32.gmra.mxu0 %v2251
    %v2445 = vpop.f32.mrf.mxu0
    %v2446 = vadd.f32 %v2381, %v2445
    %2447 = vmatmul.f32.gmra.mxu0 %v2253
    %v2448 = vpop.f32.mrf.mxu0
    %v2449 = vadd.f32 %v2384, %v2448
    %2450 = vmatmul.f32.gmra.mxu0 %v2255
    %v2451 = vpop.f32.mrf.mxu0
    %v2452 = vadd.f32 %v2387, %v2451
    %2453 = vmatmul.f32.gmra.mxu0 %v2257
    %v2454 = vpop.f32.mrf.mxu0
    %v2455 = vadd.f32 %v2390, %v2454
    %2456 = vmatmul.f32.gmra.mxu0 %v2259
    %v2457 = vpop.f32.mrf.mxu0
    %v2458 = vadd.f32 %v2393, %v2457
    %2459 = vdwg.mxu0
    %2460 = vmatpush.msra.mxu0 %v2291
    %2461 = vmatpush.msra.mxu0 %v2289
    %2462 = vmatpush.msra.mxu0 %v2287
    %2463 = vmatpush.msra.mxu0 %v2285
    %2464 = vmatpush.msra.mxu0 %v2283
    %2465 = vmatpush.msra.mxu0 %v2281
    %2466 = vmatpush.msra.mxu0 %v2279
    %2467 = vmatpush.msra.mxu0 %v2277
    %2468 = vmatpush.msra.mxu0 %v2275
    %2469 = vmatpush.msra.mxu0 %v2273
    %2470 = vmatpush.msra.mxu0 %v2271
    %2471 = vmatpush.msra.mxu0 %v2269
    %2472 = vmatpush.msra.mxu0 %v2267
    %2473 = vmatpush.msra.mxu0 %v2265
    %2474 = vmatpush.msra.mxu0 %v2263
    %2475 = vmatpush.msra.mxu0 %v2261
    %2476 = vmatmul.f32.gmra.mxu0 %v2228
    %v2477 = vpop.f32.mrf.mxu0
    %v2478 = vadd.f32 %v2327, %v2477
    %2479 = vmatmul.f32.gmra.mxu0 %v2230
    %v2480 = vpop.f32.mrf.mxu0
    %v2481 = vadd.f32 %v2327, %v2480
    %2482 = vmatmul.f32.gmra.mxu0 %v2232
    %v2483 = vpop.f32.mrf.mxu0
    %v2484 = vadd.f32 %v2327, %v2483
    %2485 = vmatmul.f32.gmra.mxu0 %v2234
    %v2486 = vpop.f32.mrf.mxu0
    %v2487 = vadd.f32 %v2327, %v2486
    %2488 = vmatmul.f32.gmra.mxu0 %v2236
    %v2489 = vpop.f32.mrf.mxu0
    %v2490 = vadd.f32 %v2327, %v2489
    %2491 = vmatmul.f32.gmra.mxu0 %v2238
    %v2492 = vpop.f32.mrf.mxu0
    %v2493 = vadd.f32 %v2327, %v2492
    %2494 = vmatmul.f32.gmra.mxu0 %v2240
    %v2495 = vpop.f32.mrf.mxu0
    %v2496 = vadd.f32 %v2327, %v2495
    %2497 = vmatmul.f32.gmra.mxu0 %v2242
    %v2498 = vpop.f32.mrf.mxu0
    %v2499 = vadd.f32 %v2327, %v2498
    %2500 = vmatmul.f32.gmra.mxu0 %v2244
    %v2501 = vpop.f32.mrf.mxu0
    %v2502 = vadd.f32 %v2327, %v2501
    %2503 = vmatmul.f32.gmra.mxu0 %v2246
    %v2504 = vpop.f32.mrf.mxu0
    %v2505 = vadd.f32 %v2327, %v2504
    %2506 = vmatmul.f32.gmra.mxu0 %v2248
    %v2507 = vpop.f32.mrf.mxu0
    %v2508 = vadd.f32 %v2327, %v2507
    %2509 = vmatmul.f32.gmra.mxu0 %v2250
    %v2510 = vpop.f32.mrf.mxu0
    %v2511 = vadd.f32 %v2327, %v2510
    %2512 = vmatmul.f32.gmra.mxu0 %v2252
    %v2513 = vpop.f32.mrf.mxu0
    %v2514 = vadd.f32 %v2327, %v2513
    %2515 = vmatmul.f32.gmra.mxu0 %v2254
    %v2516 = vpop.f32.mrf.mxu0
    %v2517 = vadd.f32 %v2327, %v2516
    %2518 = vmatmul.f32.gmra.mxu0 %v2256
    %v2519 = vpop.f32.mrf.mxu0
    %v2520 = vadd.f32 %v2327, %v2519
    %2521 = vmatmul.f32.gmra.mxu0 %v2258
    %v2522 = vpop.f32.mrf.mxu0
    %v2523 = vadd.f32 %v2327, %v2522
    %2524 = vdwg.mxu0
    %2525 = vmatpush.msra.mxu0 %v2323
    %2526 = vmatpush.msra.mxu0 %v2321
    %2527 = vmatpush.msra.mxu0 %v2319
    %2528 = vmatpush.msra.mxu0 %v2317
    %2529 = vmatpush.msra.mxu0 %v2315
    %2530 = vmatpush.msra.mxu0 %v2313
    %2531 = vmatpush.msra.mxu0 %v2311
    %2532 = vmatpush.msra.mxu0 %v2309
    %2533 = vmatpush.msra.mxu0 %v2307
    %2534 = vmatpush.msra.mxu0 %v2305
    %2535 = vmatpush.msra.mxu0 %v2303
    %2536 = vmatpush.msra.mxu0 %v2301
    %2537 = vmatpush.msra.mxu0 %v2299
    %2538 = vmatpush.msra.mxu0 %v2297
    %2539 = vmatpush.msra.mxu0 %v2295
    %2540 = vmatpush.msra.mxu0 %v2293
    %2541 = vmatmul.f32.gmra.mxu0 %v2229
    %v2542 = vpop.f32.mrf.mxu0
    %v2543 = vadd.f32 %v2478, %v2542
    %2544 = vmatmul.f32.gmra.mxu0 %v2231
    %v2545 = vpop.f32.mrf.mxu0
    %v2546 = vadd.f32 %v2481, %v2545
    %2547 = vmatmul.f32.gmra.mxu0 %v2233
    %v2548 = vpop.f32.mrf.mxu0
    %v2549 = vadd.f32 %v2484, %v2548
    %2550 = vmatmul.f32.gmra.mxu0 %v2235
    %v2551 = vpop.f32.mrf.mxu0
    %v2552 = vadd.f32 %v2487, %v2551
    %2553 = vmatmul.f32.gmra.mxu0 %v2237
    %v2554 = vpop.f32.mrf.mxu0
    %v2555 = vadd.f32 %v2490, %v2554
    %2556 = vmatmul.f32.gmra.mxu0 %v2239
    %v2557 = vpop.f32.mrf.mxu0
    %v2558 = vadd.f32 %v2493, %v2557
    %2559 = vmatmul.f32.gmra.mxu0 %v2241
    %v2560 = vpop.f32.mrf.mxu0
    %v2561 = vadd.f32 %v2496, %v2560
    %2562 = vmatmul.f32.gmra.mxu0 %v2243
    %v2563 = vpop.f32.mrf.mxu0
    %v2564 = vadd.f32 %v2499, %v2563
    %2565 = vmatmul.f32.gmra.mxu0 %v2245
    %v2566 = vpop.f32.mrf.mxu0
    %v2567 = vadd.f32 %v2502, %v2566
    %2568 = vmatmul.f32.gmra.mxu0 %v2247
    %v2569 = vpop.f32.mrf.mxu0
    %v2570 = vadd.f32 %v2505, %v2569
    %2571 = vmatmul.f32.gmra.mxu0 %v2249
    %v2572 = vpop.f32.mrf.mxu0
    %v2573 = vadd.f32 %v2508, %v2572
    %2574 = vmatmul.f32.gmra.mxu0 %v2251
    %v2575 = vpop.f32.mrf.mxu0
    %v2576 = vadd.f32 %v2511, %v2575
    %2577 = vmatmul.f32.gmra.mxu0 %v2253
    %v2578 = vpop.f32.mrf.mxu0
    %v2579 = vadd.f32 %v2514, %v2578
    %2580 = vmatmul.f32.gmra.mxu0 %v2255
    %v2581 = vpop.f32.mrf.mxu0
    %v2582 = vadd.f32 %v2517, %v2581
    %2583 = vmatmul.f32.gmra.mxu0 %v2257
    %v2584 = vpop.f32.mrf.mxu0
    %v2585 = vadd.f32 %v2520, %v2584
    %2586 = vmatmul.f32.gmra.mxu0 %v2259
    %v2587 = vpop.f32.mrf.mxu0
    %v2588 = vadd.f32 %v2523, %v2587
    %2589 = vdwg.mxu0
    %v2590 = vmin.f32 %v2413, 20.0
    %v2591 = vmin.f32 %v2543, 20.0
    %v2592 = vmin.f32 %v2416, 20.0
    %v2593 = vmin.f32 %v2546, 20.0
    %v2594 = vmin.f32 %v2419, 20.0
    %v2595 = vmin.f32 %v2549, 20.0
    %v2596 = vmin.f32 %v2422, 20.0
    %v2597 = vmin.f32 %v2552, 20.0
    %v2598 = vmin.f32 %v2425, 20.0
    %v2599 = vmin.f32 %v2555, 20.0
    %v2600 = vmin.f32 %v2428, 20.0
    %v2601 = vmin.f32 %v2558, 20.0
    %v2602 = vmin.f32 %v2431, 20.0
    %v2603 = vmin.f32 %v2561, 20.0
    %v2604 = vmin.f32 %v2434, 20.0
    %v2605 = vmin.f32 %v2564, 20.0
    %v2606 = vmin.f32 %v2437, 20.0
    %v2607 = vmin.f32 %v2567, 20.0
    %v2608 = vmin.f32 %v2440, 20.0
    %v2609 = vmin.f32 %v2570, 20.0
    %v2610 = vmin.f32 %v2443, 20.0
    %v2611 = vmin.f32 %v2573, 20.0
    %v2612 = vmin.f32 %v2446, 20.0
    %v2613 = vmin.f32 %v2576, 20.0
    %v2614 = vmin.f32 %v2449, 20.0
    %v2615 = vmin.f32 %v2579, 20.0
    %v2616 = vmin.f32 %v2452, 20.0
    %v2617 = vmin.f32 %v2582, 20.0
    %v2618 = vmin.f32 %v2455, 20.0
    %v2619 = vmin.f32 %v2585, 20.0
    %v2620 = vmin.f32 %v2458, 20.0
    %v2621 = vmin.f32 %v2588, 20.0
    %v2622 = vmul.f32 %v2590, 1.442695
    %v2623 = vpow.pop %v2622
    %v2624 = vmul.f32 %v2591, 1.442695
    %v2625 = vpow.pop %v2624
    %v2626 = vmul.f32 %v2592, 1.442695
    %v2627 = vpow.pop %v2626
    %v2628 = vmul.f32 %v2593, 1.442695
    %v2629 = vpow.pop %v2628
    %v2630 = vmul.f32 %v2594, 1.442695
    %v2631 = vpow.pop %v2630
    %v2632 = vmul.f32 %v2595, 1.442695
    %v2633 = vpow.pop %v2632
    %v2634 = vmul.f32 %v2596, 1.442695
    %v2635 = vpow.pop %v2634
    %v2636 = vmul.f32 %v2597, 1.442695
    %v2637 = vpow.pop %v2636
    %v2638 = vmul.f32 %v2598, 1.442695
    %v2639 = vpow.pop %v2638
    %v2640 = vmul.f32 %v2599, 1.442695
    %v2641 = vpow.pop %v2640
    %v2642 = vmul.f32 %v2600, 1.442695
    %v2643 = vpow.pop %v2642
    %v2644 = vmul.f32 %v2601, 1.442695
    %v2645 = vpow.pop %v2644
    %v2646 = vmul.f32 %v2602, 1.442695
    %v2647 = vpow.pop %v2646
    %v2648 = vmul.f32 %v2603, 1.442695
    %v2649 = vpow.pop %v2648
    %v2650 = vmul.f32 %v2604, 1.442695
    %v2651 = vpow.pop %v2650
    %v2652 = vmul.f32 %v2605, 1.442695
    %v2653 = vpow.pop %v2652
    %v2654 = vmul.f32 %v2606, 1.442695
    %v2655 = vpow.pop %v2654
    %v2656 = vmul.f32 %v2607, 1.442695
    %v2657 = vpow.pop %v2656
    %v2658 = vmul.f32 %v2608, 1.442695
    %v2659 = vpow.pop %v2658
    %v2660 = vmul.f32 %v2609, 1.442695
    %v2661 = vpow.pop %v2660
    %v2662 = vmul.f32 %v2610, 1.442695
    %v2663 = vpow.pop %v2662
    %v2664 = vmul.f32 %v2611, 1.442695
    %v2665 = vpow.pop %v2664
    %v2666 = vmul.f32 %v2612, 1.442695
    %v2667 = vpow.pop %v2666
    %v2668 = vmul.f32 %v2613, 1.442695
    %v2669 = vpow.pop %v2668
    %v2670 = vmul.f32 %v2614, 1.442695
    %v2671 = vpow.pop %v2670
    %v2672 = vmul.f32 %v2615, 1.442695
    %v2673 = vpow.pop %v2672
    %v2674 = vmul.f32 %v2616, 1.442695
    %v2675 = vpow.pop %v2674
    %v2676 = vmul.f32 %v2617, 1.442695
    %v2677 = vpow.pop %v2676
    %v2678 = vmul.f32 %v2618, 1.442695
    %v2679 = vpow.pop %v2678
    %v2680 = vmul.f32 %v2619, 1.442695
    %v2681 = vpow.pop %v2680
    %v2682 = vmul.f32 %v2620, 1.442695
    %v2683 = vpow.pop %v2682
    %v2684 = vmul.f32 %v2621, 1.442695
    %v2685 = vpow.pop %v2684
    %v2686 = vadd.f32 %v2623, 2.0
    %v2687 = vadd.f32 %v2625, 2.0
    %v2688 = vadd.f32 %v2627, 2.0
    %v2689 = vadd.f32 %v2629, 2.0
    %v2690 = vadd.f32 %v2631, 2.0
    %v2691 = vadd.f32 %v2633, 2.0
    %v2692 = vadd.f32 %v2635, 2.0
    %v2693 = vadd.f32 %v2637, 2.0
    %v2694 = vadd.f32 %v2639, 2.0
    %v2695 = vadd.f32 %v2641, 2.0
    %v2696 = vadd.f32 %v2643, 2.0
    %v2697 = vadd.f32 %v2645, 2.0
    %v2698 = vadd.f32 %v2647, 2.0
    %v2699 = vadd.f32 %v2649, 2.0
    %v2700 = vadd.f32 %v2651, 2.0
    %v2701 = vadd.f32 %v2653, 2.0
    %v2702 = vadd.f32 %v2655, 2.0
    %v2703 = vadd.f32 %v2657, 2.0
    %v2704 = vadd.f32 %v2659, 2.0
    %v2705 = vadd.f32 %v2661, 2.0
    %v2706 = vadd.f32 %v2663, 2.0
    %v2707 = vadd.f32 %v2665, 2.0
    %v2708 = vadd.f32 %v2667, 2.0
    %v2709 = vadd.f32 %v2669, 2.0
    %v2710 = vadd.f32 %v2671, 2.0
    %v2711 = vadd.f32 %v2673, 2.0
    %v2712 = vadd.f32 %v2675, 2.0
    %v2713 = vadd.f32 %v2677, 2.0
    %v2714 = vadd.f32 %v2679, 2.0
    %v2715 = vadd.f32 %v2681, 2.0
    %v2716 = vadd.f32 %v2683, 2.0
    %v2717 = vadd.f32 %v2685, 2.0
    %v2718 = vmul.f32 %v2623, %v2686
    %v2719 = vmul.f32 %v2625, %v2687
    %v2720 = vmul.f32 %v2627, %v2688
    %v2721 = vmul.f32 %v2629, %v2689
    %v2722 = vmul.f32 %v2631, %v2690
    %v2723 = vmul.f32 %v2633, %v2691
    %v2724 = vmul.f32 %v2635, %v2692
    %v2725 = vmul.f32 %v2637, %v2693
    %v2726 = vmul.f32 %v2639, %v2694
    %v2727 = vmul.f32 %v2641, %v2695
    %v2728 = vmul.f32 %v2643, %v2696
    %v2729 = vmul.f32 %v2645, %v2697
    %v2730 = vmul.f32 %v2647, %v2698
    %v2731 = vmul.f32 %v2649, %v2699
    %v2732 = vmul.f32 %v2651, %v2700
    %v2733 = vmul.f32 %v2653, %v2701
    %v2734 = vmul.f32 %v2655, %v2702
    %v2735 = vmul.f32 %v2657, %v2703
    %v2736 = vmul.f32 %v2659, %v2704
    %v2737 = vmul.f32 %v2661, %v2705
    %v2738 = vmul.f32 %v2663, %v2706
    %v2739 = vmul.f32 %v2665, %v2707
    %v2740 = vmul.f32 %v2667, %v2708
    %v2741 = vmul.f32 %v2669, %v2709
    %v2742 = vmul.f32 %v2671, %v2710
    %v2743 = vmul.f32 %v2673, %v2711
    %v2744 = vmul.f32 %v2675, %v2712
    %v2745 = vmul.f32 %v2677, %v2713
    %v2746 = vmul.f32 %v2679, %v2714
    %v2747 = vmul.f32 %v2681, %v2715
    %v2748 = vmul.f32 %v2683, %v2716
    %v2749 = vmul.f32 %v2685, %v2717
    %v2750 = vadd.f32 %v2718, 2.0
    %v2751 = vadd.f32 %v2719, 2.0
    %v2752 = vadd.f32 %v2720, 2.0
    %v2753 = vadd.f32 %v2721, 2.0
    %v2754 = vadd.f32 %v2722, 2.0
    %v2755 = vadd.f32 %v2723, 2.0
    %v2756 = vadd.f32 %v2724, 2.0
    %v2757 = vadd.f32 %v2725, 2.0
    %v2758 = vadd.f32 %v2726, 2.0
    %v2759 = vadd.f32 %v2727, 2.0
    %v2760 = vadd.f32 %v2728, 2.0
    %v2761 = vadd.f32 %v2729, 2.0
    %v2762 = vadd.f32 %v2730, 2.0
    %v2763 = vadd.f32 %v2731, 2.0
    %v2764 = vadd.f32 %v2732, 2.0
    %v2765 = vadd.f32 %v2733, 2.0
    %v2766 = vadd.f32 %v2734, 2.0
    %v2767 = vadd.f32 %v2735, 2.0
    %v2768 = vadd.f32 %v2736, 2.0
    %v2769 = vadd.f32 %v2737, 2.0
    %v2770 = vadd.f32 %v2738, 2.0
    %v2771 = vadd.f32 %v2739, 2.0
    %v2772 = vadd.f32 %v2740, 2.0
    %v2773 = vadd.f32 %v2741, 2.0
    %v2774 = vadd.f32 %v2742, 2.0
    %v2775 = vadd.f32 %v2743, 2.0
    %v2776 = vadd.f32 %v2744, 2.0
    %v2777 = vadd.f32 %v2745, 2.0
    %v2778 = vadd.f32 %v2746, 2.0
    %v2779 = vadd.f32 %v2747, 2.0
    %v2780 = vadd.f32 %v2748, 2.0
    %v2781 = vadd.f32 %v2749, 2.0
    %v2782 = vrcp.pop %v2750
    %v2783 = vmul.f32 %v2750, %v2782
    %v2784 = vsub.f32 1.0, %v2783
    %v2785 = vmul.f32 %v2782, %v2784
    %v2786 = vadd.f32 %v2782, %v2785
    %vm2787 = vweird.f32 %v2750
    %vm2788 = vweird.f32 %v2782
    %vm2789 = vmor %vm2787, %vm2788
    %v2790 = vsel %vm2789, %v2782, %v2786
    %v2791 = vand.u32 2147483647, %v2750
    %vm2792 = vcmp.eq.f32.partialorder %v2791, 8.507059e+37
    %v2793 = vand.u32 %v2750, 2147483648
    %v2794 = vor.u32 1.1754944e-38, %v2793
    %v2795 = vsel %vm2792, %v2794, %v2790
    %v2796 = vmul.f32 %v2718, %v2795
    %v2797 = vrcp.pop %v2751
    %v2798 = vmul.f32 %v2751, %v2797
    %v2799 = vsub.f32 1.0, %v2798
    %v2800 = vmul.f32 %v2797, %v2799
    %v2801 = vadd.f32 %v2797, %v2800
    %vm2802 = vweird.f32 %v2751
    %vm2803 = vweird.f32 %v2797
    %vm2804 = vmor %vm2802, %vm2803
    %v2805 = vsel %vm2804, %v2797, %v2801
    %v2806 = vand.u32 2147483647, %v2751
    %vm2807 = vcmp.eq.f32.partialorder %v2806, 8.507059e+37
    %v2808 = vand.u32 %v2751, 2147483648
    %v2809 = vor.u32 1.1754944e-38, %v2808
    %v2810 = vsel %vm2807, %v2809, %v2805
    %v2811 = vmul.f32 %v2719, %v2810
    %v2812 = vrcp.pop %v2752
    %v2813 = vmul.f32 %v2752, %v2812
    %v2814 = vsub.f32 1.0, %v2813
    %v2815 = vmul.f32 %v2812, %v2814
    %v2816 = vadd.f32 %v2812, %v2815
    %vm2817 = vweird.f32 %v2752
    %vm2818 = vweird.f32 %v2812
    %vm2819 = vmor %vm2817, %vm2818
    %v2820 = vsel %vm2819, %v2812, %v2816
    %v2821 = vand.u32 2147483647, %v2752
    %vm2822 = vcmp.eq.f32.partialorder %v2821, 8.507059e+37
    %v2823 = vand.u32 %v2752, 2147483648
    %v2824 = vor.u32 1.1754944e-38, %v2823
    %v2825 = vsel %vm2822, %v2824, %v2820
    %v2826 = vmul.f32 %v2720, %v2825
    %v2827 = vrcp.pop %v2753
    %v2828 = vmul.f32 %v2753, %v2827
    %v2829 = vsub.f32 1.0, %v2828
    %v2830 = vmul.f32 %v2827, %v2829
    %v2831 = vadd.f32 %v2827, %v2830
    %vm2832 = vweird.f32 %v2753
    %vm2833 = vweird.f32 %v2827
    %vm2834 = vmor %vm2832, %vm2833
    %v2835 = vsel %vm2834, %v2827, %v2831
    %v2836 = vand.u32 2147483647, %v2753
    %vm2837 = vcmp.eq.f32.partialorder %v2836, 8.507059e+37
    %v2838 = vand.u32 %v2753, 2147483648
    %v2839 = vor.u32 1.1754944e-38, %v2838
    %v2840 = vsel %vm2837, %v2839, %v2835
    %v2841 = vmul.f32 %v2721, %v2840
    %v2842 = vrcp.pop %v2754
    %v2843 = vmul.f32 %v2754, %v2842
    %v2844 = vsub.f32 1.0, %v2843
    %v2845 = vmul.f32 %v2842, %v2844
    %v2846 = vadd.f32 %v2842, %v2845
    %vm2847 = vweird.f32 %v2754
    %vm2848 = vweird.f32 %v2842
    %vm2849 = vmor %vm2847, %vm2848
    %v2850 = vsel %vm2849, %v2842, %v2846
    %v2851 = vand.u32 2147483647, %v2754
    %vm2852 = vcmp.eq.f32.partialorder %v2851, 8.507059e+37
    %v2853 = vand.u32 %v2754, 2147483648
    %v2854 = vor.u32 1.1754944e-38, %v2853
    %v2855 = vsel %vm2852, %v2854, %v2850
    %v2856 = vmul.f32 %v2722, %v2855
    %v2857 = vrcp.pop %v2755
    %v2858 = vmul.f32 %v2755, %v2857
    %v2859 = vsub.f32 1.0, %v2858
    %v2860 = vmul.f32 %v2857, %v2859
    %v2861 = vadd.f32 %v2857, %v2860
    %vm2862 = vweird.f32 %v2755
    %vm2863 = vweird.f32 %v2857
    %vm2864 = vmor %vm2862, %vm2863
    %v2865 = vsel %vm2864, %v2857, %v2861
    %v2866 = vand.u32 2147483647, %v2755
    %vm2867 = vcmp.eq.f32.partialorder %v2866, 8.507059e+37
    %v2868 = vand.u32 %v2755, 2147483648
    %v2869 = vor.u32 1.1754944e-38, %v2868
    %v2870 = vsel %vm2867, %v2869, %v2865
    %v2871 = vmul.f32 %v2723, %v2870
    %v2872 = vrcp.pop %v2756
    %v2873 = vmul.f32 %v2756, %v2872
    %v2874 = vsub.f32 1.0, %v2873
    %v2875 = vmul.f32 %v2872, %v2874
    %v2876 = vadd.f32 %v2872, %v2875
    %vm2877 = vweird.f32 %v2756
    %vm2878 = vweird.f32 %v2872
    %vm2879 = vmor %vm2877, %vm2878
    %v2880 = vsel %vm2879, %v2872, %v2876
    %v2881 = vand.u32 2147483647, %v2756
    %vm2882 = vcmp.eq.f32.partialorder %v2881, 8.507059e+37
    %v2883 = vand.u32 %v2756, 2147483648
    %v2884 = vor.u32 1.1754944e-38, %v2883
    %v2885 = vsel %vm2882, %v2884, %v2880
    %v2886 = vmul.f32 %v2724, %v2885
    %v2887 = vrcp.pop %v2757
    %v2888 = vmul.f32 %v2757, %v2887
    %v2889 = vsub.f32 1.0, %v2888
    %v2890 = vmul.f32 %v2887, %v2889
    %v2891 = vadd.f32 %v2887, %v2890
    %vm2892 = vweird.f32 %v2757
    %vm2893 = vweird.f32 %v2887
    %vm2894 = vmor %vm2892, %vm2893
    %v2895 = vsel %vm2894, %v2887, %v2891
    %v2896 = vand.u32 2147483647, %v2757
    %vm2897 = vcmp.eq.f32.partialorder %v2896, 8.507059e+37
    %v2898 = vand.u32 %v2757, 2147483648
    %v2899 = vor.u32 1.1754944e-38, %v2898
    %v2900 = vsel %vm2897, %v2899, %v2895
    %v2901 = vmul.f32 %v2725, %v2900
    %v2902 = vrcp.pop %v2758
    %v2903 = vmul.f32 %v2758, %v2902
    %v2904 = vsub.f32 1.0, %v2903
    %v2905 = vmul.f32 %v2902, %v2904
    %v2906 = vadd.f32 %v2902, %v2905
    %vm2907 = vweird.f32 %v2758
    %vm2908 = vweird.f32 %v2902
    %vm2909 = vmor %vm2907, %vm2908
    %v2910 = vsel %vm2909, %v2902, %v2906
    %v2911 = vand.u32 2147483647, %v2758
    %vm2912 = vcmp.eq.f32.partialorder %v2911, 8.507059e+37
    %v2913 = vand.u32 %v2758, 2147483648
    %v2914 = vor.u32 1.1754944e-38, %v2913
    %v2915 = vsel %vm2912, %v2914, %v2910
    %v2916 = vmul.f32 %v2726, %v2915
    %v2917 = vrcp.pop %v2759
    %v2918 = vmul.f32 %v2759, %v2917
    %v2919 = vsub.f32 1.0, %v2918
    %v2920 = vmul.f32 %v2917, %v2919
    %v2921 = vadd.f32 %v2917, %v2920
    %vm2922 = vweird.f32 %v2759
    %vm2923 = vweird.f32 %v2917
    %vm2924 = vmor %vm2922, %vm2923
    %v2925 = vsel %vm2924, %v2917, %v2921
    %v2926 = vand.u32 2147483647, %v2759
    %vm2927 = vcmp.eq.f32.partialorder %v2926, 8.507059e+37
    %v2928 = vand.u32 %v2759, 2147483648
    %v2929 = vor.u32 1.1754944e-38, %v2928
    %v2930 = vsel %vm2927, %v2929, %v2925
    %v2931 = vmul.f32 %v2727, %v2930
    %v2932 = vrcp.pop %v2760
    %v2933 = vmul.f32 %v2760, %v2932
    %v2934 = vsub.f32 1.0, %v2933
    %v2935 = vmul.f32 %v2932, %v2934
    %v2936 = vadd.f32 %v2932, %v2935
    %vm2937 = vweird.f32 %v2760
    %vm2938 = vweird.f32 %v2932
    %vm2939 = vmor %vm2937, %vm2938
    %v2940 = vsel %vm2939, %v2932, %v2936
    %v2941 = vand.u32 2147483647, %v2760
    %vm2942 = vcmp.eq.f32.partialorder %v2941, 8.507059e+37
    %v2943 = vand.u32 %v2760, 2147483648
    %v2944 = vor.u32 1.1754944e-38, %v2943
    %v2945 = vsel %vm2942, %v2944, %v2940
    %v2946 = vmul.f32 %v2728, %v2945
    %v2947 = vrcp.pop %v2761
    %v2948 = vmul.f32 %v2761, %v2947
    %v2949 = vsub.f32 1.0, %v2948
    %v2950 = vmul.f32 %v2947, %v2949
    %v2951 = vadd.f32 %v2947, %v2950
    %vm2952 = vweird.f32 %v2761
    %vm2953 = vweird.f32 %v2947
    %vm2954 = vmor %vm2952, %vm2953
    %v2955 = vsel %vm2954, %v2947, %v2951
    %v2956 = vand.u32 2147483647, %v2761
    %vm2957 = vcmp.eq.f32.partialorder %v2956, 8.507059e+37
    %v2958 = vand.u32 %v2761, 2147483648
    %v2959 = vor.u32 1.1754944e-38, %v2958
    %v2960 = vsel %vm2957, %v2959, %v2955
    %v2961 = vmul.f32 %v2729, %v2960
    %v2962 = vrcp.pop %v2762
    %v2963 = vmul.f32 %v2762, %v2962
    %v2964 = vsub.f32 1.0, %v2963
    %v2965 = vmul.f32 %v2962, %v2964
    %v2966 = vadd.f32 %v2962, %v2965
    %vm2967 = vweird.f32 %v2762
    %vm2968 = vweird.f32 %v2962
    %vm2969 = vmor %vm2967, %vm2968
    %v2970 = vsel %vm2969, %v2962, %v2966
    %v2971 = vand.u32 2147483647, %v2762
    %vm2972 = vcmp.eq.f32.partialorder %v2971, 8.507059e+37
    %v2973 = vand.u32 %v2762, 2147483648
    %v2974 = vor.u32 1.1754944e-38, %v2973
    %v2975 = vsel %vm2972, %v2974, %v2970
    %v2976 = vmul.f32 %v2730, %v2975
    %v2977 = vrcp.pop %v2763
    %v2978 = vmul.f32 %v2763, %v2977
    %v2979 = vsub.f32 1.0, %v2978
    %v2980 = vmul.f32 %v2977, %v2979
    %v2981 = vadd.f32 %v2977, %v2980
    %vm2982 = vweird.f32 %v2763
    %vm2983 = vweird.f32 %v2977
    %vm2984 = vmor %vm2982, %vm2983
    %v2985 = vsel %vm2984, %v2977, %v2981
    %v2986 = vand.u32 2147483647, %v2763
    %vm2987 = vcmp.eq.f32.partialorder %v2986, 8.507059e+37
    %v2988 = vand.u32 %v2763, 2147483648
    %v2989 = vor.u32 1.1754944e-38, %v2988
    %v2990 = vsel %vm2987, %v2989, %v2985
    %v2991 = vmul.f32 %v2731, %v2990
    %v2992 = vrcp.pop %v2764
    %v2993 = vmul.f32 %v2764, %v2992
    %v2994 = vsub.f32 1.0, %v2993
    %v2995 = vmul.f32 %v2992, %v2994
    %v2996 = vadd.f32 %v2992, %v2995
    %vm2997 = vweird.f32 %v2764
    %vm2998 = vweird.f32 %v2992
    %vm2999 = vmor %vm2997, %vm2998
    %v3000 = vsel %vm2999, %v2992, %v2996
    %v3001 = vand.u32 2147483647, %v2764
    %vm3002 = vcmp.eq.f32.partialorder %v3001, 8.507059e+37
    %v3003 = vand.u32 %v2764, 2147483648
    %v3004 = vor.u32 1.1754944e-38, %v3003
    %v3005 = vsel %vm3002, %v3004, %v3000
    %v3006 = vmul.f32 %v2732, %v3005
    %v3007 = vrcp.pop %v2765
    %v3008 = vmul.f32 %v2765, %v3007
    %v3009 = vsub.f32 1.0, %v3008
    %v3010 = vmul.f32 %v3007, %v3009
    %v3011 = vadd.f32 %v3007, %v3010
    %vm3012 = vweird.f32 %v2765
    %vm3013 = vweird.f32 %v3007
    %vm3014 = vmor %vm3012, %vm3013
    %v3015 = vsel %vm3014, %v3007, %v3011
    %v3016 = vand.u32 2147483647, %v2765
    %vm3017 = vcmp.eq.f32.partialorder %v3016, 8.507059e+37
    %v3018 = vand.u32 %v2765, 2147483648
    %v3019 = vor.u32 1.1754944e-38, %v3018
    %v3020 = vsel %vm3017, %v3019, %v3015
    %v3021 = vmul.f32 %v2733, %v3020
    %v3022 = vrcp.pop %v2766
    %v3023 = vmul.f32 %v2766, %v3022
    %v3024 = vsub.f32 1.0, %v3023
    %v3025 = vmul.f32 %v3022, %v3024
    %v3026 = vadd.f32 %v3022, %v3025
    %vm3027 = vweird.f32 %v2766
    %vm3028 = vweird.f32 %v3022
    %vm3029 = vmor %vm3027, %vm3028
    %v3030 = vsel %vm3029, %v3022, %v3026
    %v3031 = vand.u32 2147483647, %v2766
    %vm3032 = vcmp.eq.f32.partialorder %v3031, 8.507059e+37
    %v3033 = vand.u32 %v2766, 2147483648
    %v3034 = vor.u32 1.1754944e-38, %v3033
    %v3035 = vsel %vm3032, %v3034, %v3030
    %v3036 = vmul.f32 %v2734, %v3035
    %v3037 = vrcp.pop %v2767
    %v3038 = vmul.f32 %v2767, %v3037
    %v3039 = vsub.f32 1.0, %v3038
    %v3040 = vmul.f32 %v3037, %v3039
    %v3041 = vadd.f32 %v3037, %v3040
    %vm3042 = vweird.f32 %v2767
    %vm3043 = vweird.f32 %v3037
    %vm3044 = vmor %vm3042, %vm3043
    %v3045 = vsel %vm3044, %v3037, %v3041
    %v3046 = vand.u32 2147483647, %v2767
    %vm3047 = vcmp.eq.f32.partialorder %v3046, 8.507059e+37
    %v3048 = vand.u32 %v2767, 2147483648
    %v3049 = vor.u32 1.1754944e-38, %v3048
    %v3050 = vsel %vm3047, %v3049, %v3045
    %v3051 = vmul.f32 %v2735, %v3050
    %v3052 = vrcp.pop %v2768
    %v3053 = vmul.f32 %v2768, %v3052
    %v3054 = vsub.f32 1.0, %v3053
    %v3055 = vmul.f32 %v3052, %v3054
    %v3056 = vadd.f32 %v3052, %v3055
    %vm3057 = vweird.f32 %v2768
    %vm3058 = vweird.f32 %v3052
    %vm3059 = vmor %vm3057, %vm3058
    %v3060 = vsel %vm3059, %v3052, %v3056
    %v3061 = vand.u32 2147483647, %v2768
    %vm3062 = vcmp.eq.f32.partialorder %v3061, 8.507059e+37
    %v3063 = vand.u32 %v2768, 2147483648
    %v3064 = vor.u32 1.1754944e-38, %v3063
    %v3065 = vsel %vm3062, %v3064, %v3060
    %v3066 = vmul.f32 %v2736, %v3065
    %v3067 = vrcp.pop %v2769
    %v3068 = vmul.f32 %v2769, %v3067
    %v3069 = vsub.f32 1.0, %v3068
    %v3070 = vmul.f32 %v3067, %v3069
    %v3071 = vadd.f32 %v3067, %v3070
    %vm3072 = vweird.f32 %v2769
    %vm3073 = vweird.f32 %v3067
    %vm3074 = vmor %vm3072, %vm3073
    %v3075 = vsel %vm3074, %v3067, %v3071
    %v3076 = vand.u32 2147483647, %v2769
    %vm3077 = vcmp.eq.f32.partialorder %v3076, 8.507059e+37
    %v3078 = vand.u32 %v2769, 2147483648
    %v3079 = vor.u32 1.1754944e-38, %v3078
    %v3080 = vsel %vm3077, %v3079, %v3075
    %v3081 = vmul.f32 %v2737, %v3080
    %v3082 = vrcp.pop %v2770
    %v3083 = vmul.f32 %v2770, %v3082
    %v3084 = vsub.f32 1.0, %v3083
    %v3085 = vmul.f32 %v3082, %v3084
    %v3086 = vadd.f32 %v3082, %v3085
    %vm3087 = vweird.f32 %v2770
    %vm3088 = vweird.f32 %v3082
    %vm3089 = vmor %vm3087, %vm3088
    %v3090 = vsel %vm3089, %v3082, %v3086
    %v3091 = vand.u32 2147483647, %v2770
    %vm3092 = vcmp.eq.f32.partialorder %v3091, 8.507059e+37
    %v3093 = vand.u32 %v2770, 2147483648
    %v3094 = vor.u32 1.1754944e-38, %v3093
    %v3095 = vsel %vm3092, %v3094, %v3090
    %v3096 = vmul.f32 %v2738, %v3095
    %v3097 = vrcp.pop %v2771
    %v3098 = vmul.f32 %v2771, %v3097
    %v3099 = vsub.f32 1.0, %v3098
    %v3100 = vmul.f32 %v3097, %v3099
    %v3101 = vadd.f32 %v3097, %v3100
    %vm3102 = vweird.f32 %v2771
    %vm3103 = vweird.f32 %v3097
    %vm3104 = vmor %vm3102, %vm3103
    %v3105 = vsel %vm3104, %v3097, %v3101
    %v3106 = vand.u32 2147483647, %v2771
    %vm3107 = vcmp.eq.f32.partialorder %v3106, 8.507059e+37
    %v3108 = vand.u32 %v2771, 2147483648
    %v3109 = vor.u32 1.1754944e-38, %v3108
    %v3110 = vsel %vm3107, %v3109, %v3105
    %v3111 = vmul.f32 %v2739, %v3110
    %v3112 = vrcp.pop %v2772
    %v3113 = vmul.f32 %v2772, %v3112
    %v3114 = vsub.f32 1.0, %v3113
    %v3115 = vmul.f32 %v3112, %v3114
    %v3116 = vadd.f32 %v3112, %v3115
    %vm3117 = vweird.f32 %v2772
    %vm3118 = vweird.f32 %v3112
    %vm3119 = vmor %vm3117, %vm3118
    %v3120 = vsel %vm3119, %v3112, %v3116
    %v3121 = vand.u32 2147483647, %v2772
    %vm3122 = vcmp.eq.f32.partialorder %v3121, 8.507059e+37
    %v3123 = vand.u32 %v2772, 2147483648
    %v3124 = vor.u32 1.1754944e-38, %v3123
    %v3125 = vsel %vm3122, %v3124, %v3120
    %v3126 = vmul.f32 %v2740, %v3125
    %v3127 = vrcp.pop %v2773
    %v3128 = vmul.f32 %v2773, %v3127
    %v3129 = vsub.f32 1.0, %v3128
    %v3130 = vmul.f32 %v3127, %v3129
    %v3131 = vadd.f32 %v3127, %v3130
    %vm3132 = vweird.f32 %v2773
    %vm3133 = vweird.f32 %v3127
    %vm3134 = vmor %vm3132, %vm3133
    %v3135 = vsel %vm3134, %v3127, %v3131
    %v3136 = vand.u32 2147483647, %v2773
    %vm3137 = vcmp.eq.f32.partialorder %v3136, 8.507059e+37
    %v3138 = vand.u32 %v2773, 2147483648
    %v3139 = vor.u32 1.1754944e-38, %v3138
    %v3140 = vsel %vm3137, %v3139, %v3135
    %v3141 = vmul.f32 %v2741, %v3140
    %v3142 = vrcp.pop %v2774
    %v3143 = vmul.f32 %v2774, %v3142
    %v3144 = vsub.f32 1.0, %v3143
    %v3145 = vmul.f32 %v3142, %v3144
    %v3146 = vadd.f32 %v3142, %v3145
    %vm3147 = vweird.f32 %v2774
    %vm3148 = vweird.f32 %v3142
    %vm3149 = vmor %vm3147, %vm3148
    %v3150 = vsel %vm3149, %v3142, %v3146
    %v3151 = vand.u32 2147483647, %v2774
    %vm3152 = vcmp.eq.f32.partialorder %v3151, 8.507059e+37
    %v3153 = vand.u32 %v2774, 2147483648
    %v3154 = vor.u32 1.1754944e-38, %v3153
    %v3155 = vsel %vm3152, %v3154, %v3150
    %v3156 = vmul.f32 %v2742, %v3155
    %v3157 = vrcp.pop %v2775
    %v3158 = vmul.f32 %v2775, %v3157
    %v3159 = vsub.f32 1.0, %v3158
    %v3160 = vmul.f32 %v3157, %v3159
    %v3161 = vadd.f32 %v3157, %v3160
    %vm3162 = vweird.f32 %v2775
    %vm3163 = vweird.f32 %v3157
    %vm3164 = vmor %vm3162, %vm3163
    %v3165 = vsel %vm3164, %v3157, %v3161
    %v3166 = vand.u32 2147483647, %v2775
    %vm3167 = vcmp.eq.f32.partialorder %v3166, 8.507059e+37
    %v3168 = vand.u32 %v2775, 2147483648
    %v3169 = vor.u32 1.1754944e-38, %v3168
    %v3170 = vsel %vm3167, %v3169, %v3165
    %v3171 = vmul.f32 %v2743, %v3170
    %v3172 = vrcp.pop %v2776
    %v3173 = vmul.f32 %v2776, %v3172
    %v3174 = vsub.f32 1.0, %v3173
    %v3175 = vmul.f32 %v3172, %v3174
    %v3176 = vadd.f32 %v3172, %v3175
    %vm3177 = vweird.f32 %v2776
    %vm3178 = vweird.f32 %v3172
    %vm3179 = vmor %vm3177, %vm3178
    %v3180 = vsel %vm3179, %v3172, %v3176
    %v3181 = vand.u32 2147483647, %v2776
    %vm3182 = vcmp.eq.f32.partialorder %v3181, 8.507059e+37
    %v3183 = vand.u32 %v2776, 2147483648
    %v3184 = vor.u32 1.1754944e-38, %v3183
    %v3185 = vsel %vm3182, %v3184, %v3180
    %v3186 = vmul.f32 %v2744, %v3185
    %v3187 = vrcp.pop %v2777
    %v3188 = vmul.f32 %v2777, %v3187
    %v3189 = vsub.f32 1.0, %v3188
    %v3190 = vmul.f32 %v3187, %v3189
    %v3191 = vadd.f32 %v3187, %v3190
    %vm3192 = vweird.f32 %v2777
    %vm3193 = vweird.f32 %v3187
    %vm3194 = vmor %vm3192, %vm3193
    %v3195 = vsel %vm3194, %v3187, %v3191
    %v3196 = vand.u32 2147483647, %v2777
    %vm3197 = vcmp.eq.f32.partialorder %v3196, 8.507059e+37
    %v3198 = vand.u32 %v2777, 2147483648
    %v3199 = vor.u32 1.1754944e-38, %v3198
    %v3200 = vsel %vm3197, %v3199, %v3195
    %v3201 = vmul.f32 %v2745, %v3200
    %v3202 = vrcp.pop %v2778
    %v3203 = vmul.f32 %v2778, %v3202
    %v3204 = vsub.f32 1.0, %v3203
    %v3205 = vmul.f32 %v3202, %v3204
    %v3206 = vadd.f32 %v3202, %v3205
    %vm3207 = vweird.f32 %v2778
    %vm3208 = vweird.f32 %v3202
    %vm3209 = vmor %vm3207, %vm3208
    %v3210 = vsel %vm3209, %v3202, %v3206
    %v3211 = vand.u32 2147483647, %v2778
    %vm3212 = vcmp.eq.f32.partialorder %v3211, 8.507059e+37
    %v3213 = vand.u32 %v2778, 2147483648
    %v3214 = vor.u32 1.1754944e-38, %v3213
    %v3215 = vsel %vm3212, %v3214, %v3210
    %v3216 = vmul.f32 %v2746, %v3215
    %v3217 = vrcp.pop %v2779
    %v3218 = vmul.f32 %v2779, %v3217
    %v3219 = vsub.f32 1.0, %v3218
    %v3220 = vmul.f32 %v3217, %v3219
    %v3221 = vadd.f32 %v3217, %v3220
    %vm3222 = vweird.f32 %v2779
    %vm3223 = vweird.f32 %v3217
    %vm3224 = vmor %vm3222, %vm3223
    %v3225 = vsel %vm3224, %v3217, %v3221
    %v3226 = vand.u32 2147483647, %v2779
    %vm3227 = vcmp.eq.f32.partialorder %v3226, 8.507059e+37
    %v3228 = vand.u32 %v2779, 2147483648
    %v3229 = vor.u32 1.1754944e-38, %v3228
    %v3230 = vsel %vm3227, %v3229, %v3225
    %v3231 = vmul.f32 %v2747, %v3230
    %v3232 = vrcp.pop %v2780
    %v3233 = vmul.f32 %v2780, %v3232
    %v3234 = vsub.f32 1.0, %v3233
    %v3235 = vmul.f32 %v3232, %v3234
    %v3236 = vadd.f32 %v3232, %v3235
    %vm3237 = vweird.f32 %v2780
    %vm3238 = vweird.f32 %v3232
    %vm3239 = vmor %vm3237, %vm3238
    %v3240 = vsel %vm3239, %v3232, %v3236
    %v3241 = vand.u32 2147483647, %v2780
    %vm3242 = vcmp.eq.f32.partialorder %v3241, 8.507059e+37
    %v3243 = vand.u32 %v2780, 2147483648
    %v3244 = vor.u32 1.1754944e-38, %v3243
    %v3245 = vsel %vm3242, %v3244, %v3240
    %v3246 = vmul.f32 %v2748, %v3245
    %v3247 = vrcp.pop %v2781
    %v3248 = vmul.f32 %v2781, %v3247
    %v3249 = vsub.f32 1.0, %v3248
    %v3250 = vmul.f32 %v3247, %v3249
    %v3251 = vadd.f32 %v3247, %v3250
    %vm3252 = vweird.f32 %v2781
    %vm3253 = vweird.f32 %v3247
    %vm3254 = vmor %vm3252, %vm3253
    %v3255 = vsel %vm3254, %v3247, %v3251
    %v3256 = vand.u32 2147483647, %v2781
    %vm3257 = vcmp.eq.f32.partialorder %v3256, 8.507059e+37
    %v3258 = vand.u32 %v2781, 2147483648
    %v3259 = vor.u32 1.1754944e-38, %v3258
    %v3260 = vsel %vm3257, %v3259, %v3255
    %v3261 = vmul.f32 %v2749, %v3260
    %v3262 = vmul.f32 %v2413, %v2796
    %v3263 = vmul.f32 %v2543, %v2811
    %v3264 = vmul.f32 %v2416, %v2826
    %v3265 = vmul.f32 %v2546, %v2841
    %v3266 = vmul.f32 %v2419, %v2856
    %v3267 = vmul.f32 %v2549, %v2871
    %v3268 = vmul.f32 %v2422, %v2886
    %v3269 = vmul.f32 %v2552, %v2901
    %v3270 = vmul.f32 %v2425, %v2916
    %v3271 = vmul.f32 %v2555, %v2931
    %v3272 = vmul.f32 %v2428, %v2946
    %v3273 = vmul.f32 %v2558, %v2961
    %v3274 = vmul.f32 %v2431, %v2976
    %v3275 = vmul.f32 %v2561, %v2991
    %v3276 = vmul.f32 %v2434, %v3006
    %v3277 = vmul.f32 %v2564, %v3021
    %v3278 = vmul.f32 %v2437, %v3036
    %v3279 = vmul.f32 %v2567, %v3051
    %v3280 = vmul.f32 %v2440, %v3066
    %v3281 = vmul.f32 %v2570, %v3081
    %v3282 = vmul.f32 %v2443, %v3096
    %v3283 = vmul.f32 %v2573, %v3111
    %v3284 = vmul.f32 %v2446, %v3126
    %v3285 = vmul.f32 %v2576, %v3141
    %v3286 = vmul.f32 %v2449, %v3156
    %v3287 = vmul.f32 %v2579, %v3171
    %v3288 = vmul.f32 %v2452, %v3186
    %v3289 = vmul.f32 %v2582, %v3201
    %v3290 = vmul.f32 %v2455, %v3216
    %v3291 = vmul.f32 %v2585, %v3231
    %v3292 = vmul.f32 %v2458, %v3246
    %v3293 = vmul.f32 %v2588, %v3261
    %v3294 = vld [vmem:[#allocation7] sm:$0xff]
    %v3295 = vld [vmem:[#allocation7 + $0x8] sm:$0xff]
    %v3296 = vld [vmem:[#allocation7 + $0x10] sm:$0xff]
    %v3297 = vld [vmem:[#allocation7 + $0x18] sm:$0xff]
    %v3298 = vld [vmem:[#allocation7 + $0x20] sm:$0xff]
    %v3299 = vld [vmem:[#allocation7 + $0x28] sm:$0xff]
    %v3300 = vld [vmem:[#allocation7 + $0x30] sm:$0xff]
    %v3301 = vld [vmem:[#allocation7 + $0x38] sm:$0xff]
    %v3302 = vld [vmem:[#allocation7 + $0x40] sm:$0xff]
    %v3303 = vld [vmem:[#allocation7 + $0x48] sm:$0xff]
    %v3304 = vld [vmem:[#allocation7 + $0x50] sm:$0xff]
    %v3305 = vld [vmem:[#allocation7 + $0x58] sm:$0xff]
    %v3306 = vld [vmem:[#allocation7 + $0x60] sm:$0xff]
    %v3307 = vld [vmem:[#allocation7 + $0x68] sm:$0xff]
    %v3308 = vld [vmem:[#allocation7 + $0x70] sm:$0xff]
    %v3309 = vld [vmem:[#allocation7 + $0x78] sm:$0xff]
    %v3310 = vld [vmem:[#allocation7 + $0x80] sm:$0xff]
    %v3311 = vld [vmem:[#allocation7 + $0x88] sm:$0xff]
    %v3312 = vld [vmem:[#allocation7 + $0x90] sm:$0xff]
    %v3313 = vld [vmem:[#allocation7 + $0x98] sm:$0xff]
    %v3314 = vld [vmem:[#allocation7 + $0xa0] sm:$0xff]
    %v3315 = vld [vmem:[#allocation7 + $0xa8] sm:$0xff]
    %v3316 = vld [vmem:[#allocation7 + $0xb0] sm:$0xff]
    %v3317 = vld [vmem:[#allocation7 + $0xb8] sm:$0xff]
    %v3318 = vld [vmem:[#allocation7 + $0xc0] sm:$0xff]
    %v3319 = vld [vmem:[#allocation7 + $0xc8] sm:$0xff]
    %v3320 = vld [vmem:[#allocation7 + $0xd0] sm:$0xff]
    %v3321 = vld [vmem:[#allocation7 + $0xd8] sm:$0xff]
    %v3322 = vld [vmem:[#allocation7 + $0xe0] sm:$0xff]
    %v3323 = vld [vmem:[#allocation7 + $0xe8] sm:$0xff]
    %v3324 = vld [vmem:[#allocation7 + $0xf0] sm:$0xff]
    %v3325 = vld [vmem:[#allocation7 + $0xf8] sm:$0xff]
    %v3326 = vld [vmem:[#allocation7 + $0x100] sm:$0xff]
    %v3327 = vld [vmem:[#allocation7 + $0x108] sm:$0xff]
    %v3328 = vld [vmem:[#allocation7 + $0x110] sm:$0xff]
    %v3329 = vld [vmem:[#allocation7 + $0x118] sm:$0xff]
    %v3330 = vld [vmem:[#allocation7 + $0x120] sm:$0xff]
    %v3331 = vld [vmem:[#allocation7 + $0x128] sm:$0xff]
    %v3332 = vld [vmem:[#allocation7 + $0x130] sm:$0xff]
    %v3333 = vld [vmem:[#allocation7 + $0x138] sm:$0xff]
    %v3334 = vld [vmem:[#allocation7 + $0x140] sm:$0xff]
    %v3335 = vld [vmem:[#allocation7 + $0x148] sm:$0xff]
    %v3336 = vld [vmem:[#allocation7 + $0x150] sm:$0xff]
    %v3337 = vld [vmem:[#allocation7 + $0x158] sm:$0xff]
    %v3338 = vld [vmem:[#allocation7 + $0x160] sm:$0xff]
    %v3339 = vld [vmem:[#allocation7 + $0x168] sm:$0xff]
    %v3340 = vld [vmem:[#allocation7 + $0x170] sm:$0xff]
    %v3341 = vld [vmem:[#allocation7 + $0x178] sm:$0xff]
    %v3342 = vld [vmem:[#allocation7 + $0x180] sm:$0xff]
    %v3343 = vld [vmem:[#allocation7 + $0x188] sm:$0xff]
    %v3344 = vld [vmem:[#allocation7 + $0x190] sm:$0xff]
    %v3345 = vld [vmem:[#allocation7 + $0x198] sm:$0xff]
    %v3346 = vld [vmem:[#allocation7 + $0x1a0] sm:$0xff]
    %v3347 = vld [vmem:[#allocation7 + $0x1a8] sm:$0xff]
    %v3348 = vld [vmem:[#allocation7 + $0x1b0] sm:$0xff]
    %v3349 = vld [vmem:[#allocation7 + $0x1b8] sm:$0xff]
    %v3350 = vld [vmem:[#allocation7 + $0x1c0] sm:$0xff]
    %v3351 = vld [vmem:[#allocation7 + $0x1c8] sm:$0xff]
    %v3352 = vld [vmem:[#allocation7 + $0x1d0] sm:$0xff]
    %v3353 = vld [vmem:[#allocation7 + $0x1d8] sm:$0xff]
    %v3354 = vld [vmem:[#allocation7 + $0x1e0] sm:$0xff]
    %v3355 = vld [vmem:[#allocation7 + $0x1e8] sm:$0xff]
    %v3356 = vld [vmem:[#allocation7 + $0x1f0] sm:$0xff]
    %v3357 = vld [vmem:[#allocation7 + $0x1f8] sm:$0xff]
    %v3358 = vld [vmem:[%s8] sm:$0x3]
    %v3360 = vperm.slane %v3358, 0
    %v3361 = vperm.slane %v3358, 1
    %3364 = vmatpush.msra.mxu0 %v3324
    %3365 = vmatpush.msra.mxu0 %v3322
    %3366 = vmatpush.msra.mxu0 %v3320
    %3367 = vmatpush.msra.mxu0 %v3318
    %3368 = vmatpush.msra.mxu0 %v3316
    %3369 = vmatpush.msra.mxu0 %v3314
    %3370 = vmatpush.msra.mxu0 %v3312
    %3371 = vmatpush.msra.mxu0 %v3310
    %3372 = vmatpush.msra.mxu0 %v3308
    %3373 = vmatpush.msra.mxu0 %v3306
    %3374 = vmatpush.msra.mxu0 %v3304
    %3375 = vmatpush.msra.mxu0 %v3302
    %3376 = vmatpush.msra.mxu0 %v3300
    %3377 = vmatpush.msra.mxu0 %v3298
    %3378 = vmatpush.msra.mxu0 %v3296
    %3379 = vmatpush.msra.mxu0 %v3294
    %3380 = vmatmul.f32.gmra.mxu0 %v3262
    %v3381 = vpop.f32.mrf.mxu0
    %v3382 = vadd.f32 %v3360, %v3381
    %3383 = vmatmul.f32.gmra.mxu0 %v3264
    %v3384 = vpop.f32.mrf.mxu0
    %v3385 = vadd.f32 %v3360, %v3384
    %3386 = vmatmul.f32.gmra.mxu0 %v3266
    %v3387 = vpop.f32.mrf.mxu0
    %v3388 = vadd.f32 %v3360, %v3387
    %3389 = vmatmul.f32.gmra.mxu0 %v3268
    %v3390 = vpop.f32.mrf.mxu0
    %v3391 = vadd.f32 %v3360, %v3390
    %3392 = vmatmul.f32.gmra.mxu0 %v3270
    %v3393 = vpop.f32.mrf.mxu0
    %v3394 = vadd.f32 %v3360, %v3393
    %3395 = vmatmul.f32.gmra.mxu0 %v3272
    %v3396 = vpop.f32.mrf.mxu0
    %v3397 = vadd.f32 %v3360, %v3396
    %3398 = vmatmul.f32.gmra.mxu0 %v3274
    %v3399 = vpop.f32.mrf.mxu0
    %v3400 = vadd.f32 %v3360, %v3399
    %3401 = vmatmul.f32.gmra.mxu0 %v3276
    %v3402 = vpop.f32.mrf.mxu0
    %v3403 = vadd.f32 %v3360, %v3402
    %3404 = vmatmul.f32.gmra.mxu0 %v3278
    %v3405 = vpop.f32.mrf.mxu0
    %v3406 = vadd.f32 %v3360, %v3405
    %3407 = vmatmul.f32.gmra.mxu0 %v3280
    %v3408 = vpop.f32.mrf.mxu0
    %v3409 = vadd.f32 %v3360, %v3408
    %3410 = vmatmul.f32.gmra.mxu0 %v3282
    %v3411 = vpop.f32.mrf.mxu0
    %v3412 = vadd.f32 %v3360, %v3411
    %3413 = vmatmul.f32.gmra.mxu0 %v3284
    %v3414 = vpop.f32.mrf.mxu0
    %v3415 = vadd.f32 %v3360, %v3414
    %3416 = vmatmul.f32.gmra.mxu0 %v3286
    %v3417 = vpop.f32.mrf.mxu0
    %v3418 = vadd.f32 %v3360, %v3417
    %3419 = vmatmul.f32.gmra.mxu0 %v3288
    %v3420 = vpop.f32.mrf.mxu0
    %v3421 = vadd.f32 %v3360, %v3420
    %3422 = vmatmul.f32.gmra.mxu0 %v3290
    %v3423 = vpop.f32.mrf.mxu0
    %v3424 = vadd.f32 %v3360, %v3423
    %3425 = vmatmul.f32.gmra.mxu0 %v3292
    %v3426 = vpop.f32.mrf.mxu0
    %v3427 = vadd.f32 %v3360, %v3426
    %3428 = vdwg.mxu0
    %3429 = vmatpush.msra.mxu0 %v3356
    %3430 = vmatpush.msra.mxu0 %v3354
    %3431 = vmatpush.msra.mxu0 %v3352
    %3432 = vmatpush.msra.mxu0 %v3350
    %3433 = vmatpush.msra.mxu0 %v3348
    %3434 = vmatpush.msra.mxu0 %v3346
    %3435 = vmatpush.msra.mxu0 %v3344
    %3436 = vmatpush.msra.mxu0 %v3342
    %3437 = vmatpush.msra.mxu0 %v3340
    %3438 = vmatpush.msra.mxu0 %v3338
    %3439 = vmatpush.msra.mxu0 %v3336
    %3440 = vmatpush.msra.mxu0 %v3334
    %3441 = vmatpush.msra.mxu0 %v3332
    %3442 = vmatpush.msra.mxu0 %v3330
    %3443 = vmatpush.msra.mxu0 %v3328
    %3444 = vmatpush.msra.mxu0 %v3326
    %3445 = vmatmul.f32.gmra.mxu0 %v3263
    %v3446 = vpop.f32.mrf.mxu0
    %v3447 = vadd.f32 %v3382, %v3446
    %3448 = vmatmul.f32.gmra.mxu0 %v3265
    %v3449 = vpop.f32.mrf.mxu0
    %v3450 = vadd.f32 %v3385, %v3449
    %3451 = vmatmul.f32.gmra.mxu0 %v3267
    %v3452 = vpop.f32.mrf.mxu0
    %v3453 = vadd.f32 %v3388, %v3452
    %3454 = vmatmul.f32.gmra.mxu0 %v3269
    %v3455 = vpop.f32.mrf.mxu0
    %v3456 = vadd.f32 %v3391, %v3455
    %3457 = vmatmul.f32.gmra.mxu0 %v3271
    %v3458 = vpop.f32.mrf.mxu0
    %v3459 = vadd.f32 %v3394, %v3458
    %3460 = vmatmul.f32.gmra.mxu0 %v3273
    %v3461 = vpop.f32.mrf.mxu0
    %v3462 = vadd.f32 %v3397, %v3461
    %3463 = vmatmul.f32.gmra.mxu0 %v3275
    %v3464 = vpop.f32.mrf.mxu0
    %v3465 = vadd.f32 %v3400, %v3464
    %3466 = vmatmul.f32.gmra.mxu0 %v3277
    %v3467 = vpop.f32.mrf.mxu0
    %v3468 = vadd.f32 %v3403, %v3467
    %3469 = vmatmul.f32.gmra.mxu0 %v3279
    %v3470 = vpop.f32.mrf.mxu0
    %v3471 = vadd.f32 %v3406, %v3470
    %3472 = vmatmul.f32.gmra.mxu0 %v3281
    %v3473 = vpop.f32.mrf.mxu0
    %v3474 = vadd.f32 %v3409, %v3473
    %3475 = vmatmul.f32.gmra.mxu0 %v3283
    %v3476 = vpop.f32.mrf.mxu0
    %v3477 = vadd.f32 %v3412, %v3476
    %3478 = vmatmul.f32.gmra.mxu0 %v3285
    %v3479 = vpop.f32.mrf.mxu0
    %v3480 = vadd.f32 %v3415, %v3479
    %3481 = vmatmul.f32.gmra.mxu0 %v3287
    %v3482 = vpop.f32.mrf.mxu0
    %v3483 = vadd.f32 %v3418, %v3482
    %3484 = vmatmul.f32.gmra.mxu0 %v3289
    %v3485 = vpop.f32.mrf.mxu0
    %v3486 = vadd.f32 %v3421, %v3485
    %3487 = vmatmul.f32.gmra.mxu0 %v3291
    %v3488 = vpop.f32.mrf.mxu0
    %v3489 = vadd.f32 %v3424, %v3488
    %3490 = vmatmul.f32.gmra.mxu0 %v3293
    %v3491 = vpop.f32.mrf.mxu0
    %v3492 = vadd.f32 %v3427, %v3491
    %3493 = vdwg.mxu0
    %3494 = vmatpush.msra.mxu0 %v3325
    %3495 = vmatpush.msra.mxu0 %v3323
    %3496 = vmatpush.msra.mxu0 %v3321
    %3497 = vmatpush.msra.mxu0 %v3319
    %3498 = vmatpush.msra.mxu0 %v3317
    %3499 = vmatpush.msra.mxu0 %v3315
    %3500 = vmatpush.msra.mxu0 %v3313
    %3501 = vmatpush.msra.mxu0 %v3311
    %3502 = vmatpush.msra.mxu0 %v3309
    %3503 = vmatpush.msra.mxu0 %v3307
    %3504 = vmatpush.msra.mxu0 %v3305
    %3505 = vmatpush.msra.mxu0 %v3303
    %3506 = vmatpush.msra.mxu0 %v3301
    %3507 = vmatpush.msra.mxu0 %v3299
    %3508 = vmatpush.msra.mxu0 %v3297
    %3509 = vmatpush.msra.mxu0 %v3295
    %3510 = vmatmul.f32.gmra.mxu0 %v3262
    %v3511 = vpop.f32.mrf.mxu0
    %v3512 = vadd.f32 %v3361, %v3511
    %3513 = vmatmul.f32.gmra.mxu0 %v3264
    %v3514 = vpop.f32.mrf.mxu0
    %v3515 = vadd.f32 %v3361, %v3514
    %3516 = vmatmul.f32.gmra.mxu0 %v3266
    %v3517 = vpop.f32.mrf.mxu0
    %v3518 = vadd.f32 %v3361, %v3517
    %3519 = vmatmul.f32.gmra.mxu0 %v3268
    %v3520 = vpop.f32.mrf.mxu0
    %v3521 = vadd.f32 %v3361, %v3520
    %3522 = vmatmul.f32.gmra.mxu0 %v3270
    %v3523 = vpop.f32.mrf.mxu0
    %v3524 = vadd.f32 %v3361, %v3523
    %3525 = vmatmul.f32.gmra.mxu0 %v3272
    %v3526 = vpop.f32.mrf.mxu0
    %v3527 = vadd.f32 %v3361, %v3526
    %3528 = vmatmul.f32.gmra.mxu0 %v3274
    %v3529 = vpop.f32.mrf.mxu0
    %v3530 = vadd.f32 %v3361, %v3529
    %3531 = vmatmul.f32.gmra.mxu0 %v3276
    %v3532 = vpop.f32.mrf.mxu0
    %v3533 = vadd.f32 %v3361, %v3532
    %3534 = vmatmul.f32.gmra.mxu0 %v3278
    %v3535 = vpop.f32.mrf.mxu0
    %v3536 = vadd.f32 %v3361, %v3535
    %3537 = vmatmul.f32.gmra.mxu0 %v3280
    %v3538 = vpop.f32.mrf.mxu0
    %v3539 = vadd.f32 %v3361, %v3538
    %3540 = vmatmul.f32.gmra.mxu0 %v3282
    %v3541 = vpop.f32.mrf.mxu0
    %v3542 = vadd.f32 %v3361, %v3541
    %3543 = vmatmul.f32.gmra.mxu0 %v3284
    %v3544 = vpop.f32.mrf.mxu0
    %v3545 = vadd.f32 %v3361, %v3544
    %3546 = vmatmul.f32.gmra.mxu0 %v3286
    %v3547 = vpop.f32.mrf.mxu0
    %v3548 = vadd.f32 %v3361, %v3547
    %3549 = vmatmul.f32.gmra.mxu0 %v3288
    %v3550 = vpop.f32.mrf.mxu0
    %v3551 = vadd.f32 %v3361, %v3550
    %3552 = vmatmul.f32.gmra.mxu0 %v3290
    %v3553 = vpop.f32.mrf.mxu0
    %v3554 = vadd.f32 %v3361, %v3553
    %3555 = vmatmul.f32.gmra.mxu0 %v3292
    %v3556 = vpop.f32.mrf.mxu0
    %v3557 = vadd.f32 %v3361, %v3556
    %3558 = vdwg.mxu0
    %3559 = vmatpush.msra.mxu0 %v3357
    %3560 = vmatpush.msra.mxu0 %v3355
    %3561 = vmatpush.msra.mxu0 %v3353
    %3562 = vmatpush.msra.mxu0 %v3351
    %3563 = vmatpush.msra.mxu0 %v3349
    %3564 = vmatpush.msra.mxu0 %v3347
    %3565 = vmatpush.msra.mxu0 %v3345
    %3566 = vmatpush.msra.mxu0 %v3343
    %3567 = vmatpush.msra.mxu0 %v3341
    %3568 = vmatpush.msra.mxu0 %v3339
    %3569 = vmatpush.msra.mxu0 %v3337
    %3570 = vmatpush.msra.mxu0 %v3335
    %3571 = vmatpush.msra.mxu0 %v3333
    %3572 = vmatpush.msra.mxu0 %v3331
    %3573 = vmatpush.msra.mxu0 %v3329
    %3574 = vmatpush.msra.mxu0 %v3327
    %3575 = vmatmul.f32.gmra.mxu0 %v3263
    %v3576 = vpop.f32.mrf.mxu0
    %v3577 = vadd.f32 %v3512, %v3576
    %3578 = vmatmul.f32.gmra.mxu0 %v3265
    %v3579 = vpop.f32.mrf.mxu0
    %v3580 = vadd.f32 %v3515, %v3579
    %3581 = vmatmul.f32.gmra.mxu0 %v3267
    %v3582 = vpop.f32.mrf.mxu0
    %v3583 = vadd.f32 %v3518, %v3582
    %3584 = vmatmul.f32.gmra.mxu0 %v3269
    %v3585 = vpop.f32.mrf.mxu0
    %v3586 = vadd.f32 %v3521, %v3585
    %3587 = vmatmul.f32.gmra.mxu0 %v3271
    %v3588 = vpop.f32.mrf.mxu0
    %v3589 = vadd.f32 %v3524, %v3588
    %3590 = vmatmul.f32.gmra.mxu0 %v3273
    %v3591 = vpop.f32.mrf.mxu0
    %v3592 = vadd.f32 %v3527, %v3591
    %3593 = vmatmul.f32.gmra.mxu0 %v3275
    %v3594 = vpop.f32.mrf.mxu0
    %v3595 = vadd.f32 %v3530, %v3594
    %3596 = vmatmul.f32.gmra.mxu0 %v3277
    %v3597 = vpop.f32.mrf.mxu0
    %v3598 = vadd.f32 %v3533, %v3597
    %3599 = vmatmul.f32.gmra.mxu0 %v3279
    %v3600 = vpop.f32.mrf.mxu0
    %v3601 = vadd.f32 %v3536, %v3600
    %3602 = vmatmul.f32.gmra.mxu0 %v3281
    %v3603 = vpop.f32.mrf.mxu0
    %v3604 = vadd.f32 %v3539, %v3603
    %3605 = vmatmul.f32.gmra.mxu0 %v3283
    %v3606 = vpop.f32.mrf.mxu0
    %v3607 = vadd.f32 %v3542, %v3606
    %3608 = vmatmul.f32.gmra.mxu0 %v3285
    %v3609 = vpop.f32.mrf.mxu0
    %v3610 = vadd.f32 %v3545, %v3609
    %3611 = vmatmul.f32.gmra.mxu0 %v3287
    %v3612 = vpop.f32.mrf.mxu0
    %v3613 = vadd.f32 %v3548, %v3612
    %3614 = vmatmul.f32.gmra.mxu0 %v3289
    %v3615 = vpop.f32.mrf.mxu0
    %v3616 = vadd.f32 %v3551, %v3615
    %3617 = vmatmul.f32.gmra.mxu0 %v3291
    %v3618 = vpop.f32.mrf.mxu0
    %v3619 = vadd.f32 %v3554, %v3618
    %3620 = vmatmul.f32.gmra.mxu0 %v3293
    %v3621 = vpop.f32.mrf.mxu0
    %v3622 = vadd.f32 %v3557, %v3621
    %3623 = vdwg.mxu0
    %v3624 = vmin.f32 %v3447, 20.0
    %v3625 = vmin.f32 %v3577, 20.0
    %v3626 = vmin.f32 %v3450, 20.0
    %v3627 = vmin.f32 %v3580, 20.0
    %v3628 = vmin.f32 %v3453, 20.0
    %v3629 = vmin.f32 %v3583, 20.0
    %v3630 = vmin.f32 %v3456, 20.0
    %v3631 = vmin.f32 %v3586, 20.0
    %v3632 = vmin.f32 %v3459, 20.0
    %v3633 = vmin.f32 %v3589, 20.0
    %v3634 = vmin.f32 %v3462, 20.0
    %v3635 = vmin.f32 %v3592, 20.0
    %v3636 = vmin.f32 %v3465, 20.0
    %v3637 = vmin.f32 %v3595, 20.0
    %v3638 = vmin.f32 %v3468, 20.0
    %v3639 = vmin.f32 %v3598, 20.0
    %v3640 = vmin.f32 %v3471, 20.0
    %v3641 = vmin.f32 %v3601, 20.0
    %v3642 = vmin.f32 %v3474, 20.0
    %v3643 = vmin.f32 %v3604, 20.0
    %v3644 = vmin.f32 %v3477, 20.0
    %v3645 = vmin.f32 %v3607, 20.0
    %v3646 = vmin.f32 %v3480, 20.0
    %v3647 = vmin.f32 %v3610, 20.0
    %v3648 = vmin.f32 %v3483, 20.0
    %v3649 = vmin.f32 %v3613, 20.0
    %v3650 = vmin.f32 %v3486, 20.0
    %v3651 = vmin.f32 %v3616, 20.0
    %v3652 = vmin.f32 %v3489, 20.0
    %v3653 = vmin.f32 %v3619, 20.0
    %v3654 = vmin.f32 %v3492, 20.0
    %v3655 = vmin.f32 %v3622, 20.0
    %v3656 = vmul.f32 %v3624, 1.442695
    %v3657 = vpow.pop %v3656
    %v3658 = vmul.f32 %v3625, 1.442695
    %v3659 = vpow.pop %v3658
    %v3660 = vmul.f32 %v3626, 1.442695
    %v3661 = vpow.pop %v3660
    %v3662 = vmul.f32 %v3627, 1.442695
    %v3663 = vpow.pop %v3662
    %v3664 = vmul.f32 %v3628, 1.442695
    %v3665 = vpow.pop %v3664
    %v3666 = vmul.f32 %v3629, 1.442695
    %v3667 = vpow.pop %v3666
    %v3668 = vmul.f32 %v3630, 1.442695
    %v3669 = vpow.pop %v3668
    %v3670 = vmul.f32 %v3631, 1.442695
    %v3671 = vpow.pop %v3670
    %v3672 = vmul.f32 %v3632, 1.442695
    %v3673 = vpow.pop %v3672
    %v3674 = vmul.f32 %v3633, 1.442695
    %v3675 = vpow.pop %v3674
    %v3676 = vmul.f32 %v3634, 1.442695
    %v3677 = vpow.pop %v3676
    %v3678 = vmul.f32 %v3635, 1.442695
    %v3679 = vpow.pop %v3678
    %v3680 = vmul.f32 %v3636, 1.442695
    %v3681 = vpow.pop %v3680
    %v3682 = vmul.f32 %v3637, 1.442695
    %v3683 = vpow.pop %v3682
    %v3684 = vmul.f32 %v3638, 1.442695
    %v3685 = vpow.pop %v3684
    %v3686 = vmul.f32 %v3639, 1.442695
    %v3687 = vpow.pop %v3686
    %v3688 = vmul.f32 %v3640, 1.442695
    %v3689 = vpow.pop %v3688
    %v3690 = vmul.f32 %v3641, 1.442695
    %v3691 = vpow.pop %v3690
    %v3692 = vmul.f32 %v3642, 1.442695
    %v3693 = vpow.pop %v3692
    %v3694 = vmul.f32 %v3643, 1.442695
    %v3695 = vpow.pop %v3694
    %v3696 = vmul.f32 %v3644, 1.442695
    %v3697 = vpow.pop %v3696
    %v3698 = vmul.f32 %v3645, 1.442695
    %v3699 = vpow.pop %v3698
    %v3700 = vmul.f32 %v3646, 1.442695
    %v3701 = vpow.pop %v3700
    %v3702 = vmul.f32 %v3647, 1.442695
    %v3703 = vpow.pop %v3702
    %v3704 = vmul.f32 %v3648, 1.442695
    %v3705 = vpow.pop %v3704
    %v3706 = vmul.f32 %v3649, 1.442695
    %v3707 = vpow.pop %v3706
    %v3708 = vmul.f32 %v3650, 1.442695
    %v3709 = vpow.pop %v3708
    %v3710 = vmul.f32 %v3651, 1.442695
    %v3711 = vpow.pop %v3710
    %v3712 = vmul.f32 %v3652, 1.442695
    %v3713 = vpow.pop %v3712
    %v3714 = vmul.f32 %v3653, 1.442695
    %v3715 = vpow.pop %v3714
    %v3716 = vmul.f32 %v3654, 1.442695
    %v3717 = vpow.pop %v3716
    %v3718 = vmul.f32 %v3655, 1.442695
    %v3719 = vpow.pop %v3718
    %v3720 = vadd.f32 %v3657, 2.0
    %v3721 = vadd.f32 %v3659, 2.0
    %v3722 = vadd.f32 %v3661, 2.0
    %v3723 = vadd.f32 %v3663, 2.0
    %v3724 = vadd.f32 %v3665, 2.0
    %v3725 = vadd.f32 %v3667, 2.0
    %v3726 = vadd.f32 %v3669, 2.0
    %v3727 = vadd.f32 %v3671, 2.0
    %v3728 = vadd.f32 %v3673, 2.0
    %v3729 = vadd.f32 %v3675, 2.0
    %v3730 = vadd.f32 %v3677, 2.0
    %v3731 = vadd.f32 %v3679, 2.0
    %v3732 = vadd.f32 %v3681, 2.0
    %v3733 = vadd.f32 %v3683, 2.0
    %v3734 = vadd.f32 %v3685, 2.0
    %v3735 = vadd.f32 %v3687, 2.0
    %v3736 = vadd.f32 %v3689, 2.0
    %v3737 = vadd.f32 %v3691, 2.0
    %v3738 = vadd.f32 %v3693, 2.0
    %v3739 = vadd.f32 %v3695, 2.0
    %v3740 = vadd.f32 %v3697, 2.0
    %v3741 = vadd.f32 %v3699, 2.0
    %v3742 = vadd.f32 %v3701, 2.0
    %v3743 = vadd.f32 %v3703, 2.0
    %v3744 = vadd.f32 %v3705, 2.0
    %v3745 = vadd.f32 %v3707, 2.0
    %v3746 = vadd.f32 %v3709, 2.0
    %v3747 = vadd.f32 %v3711, 2.0
    %v3748 = vadd.f32 %v3713, 2.0
    %v3749 = vadd.f32 %v3715, 2.0
    %v3750 = vadd.f32 %v3717, 2.0
    %v3751 = vadd.f32 %v3719, 2.0
    %v3752 = vmul.f32 %v3657, %v3720
    %v3753 = vmul.f32 %v3659, %v3721
    %v3754 = vmul.f32 %v3661, %v3722
    %v3755 = vmul.f32 %v3663, %v3723
    %v3756 = vmul.f32 %v3665, %v3724
    %v3757 = vmul.f32 %v3667, %v3725
    %v3758 = vmul.f32 %v3669, %v3726
    %v3759 = vmul.f32 %v3671, %v3727
    %v3760 = vmul.f32 %v3673, %v3728
    %v3761 = vmul.f32 %v3675, %v3729
    %v3762 = vmul.f32 %v3677, %v3730
    %v3763 = vmul.f32 %v3679, %v3731
    %v3764 = vmul.f32 %v3681, %v3732
    %v3765 = vmul.f32 %v3683, %v3733
    %v3766 = vmul.f32 %v3685, %v3734
    %v3767 = vmul.f32 %v3687, %v3735
    %v3768 = vmul.f32 %v3689, %v3736
    %v3769 = vmul.f32 %v3691, %v3737
    %v3770 = vmul.f32 %v3693, %v3738
    %v3771 = vmul.f32 %v3695, %v3739
    %v3772 = vmul.f32 %v3697, %v3740
    %v3773 = vmul.f32 %v3699, %v3741
    %v3774 = vmul.f32 %v3701, %v3742
    %v3775 = vmul.f32 %v3703, %v3743
    %v3776 = vmul.f32 %v3705, %v3744
    %v3777 = vmul.f32 %v3707, %v3745
    %v3778 = vmul.f32 %v3709, %v3746
    %v3779 = vmul.f32 %v3711, %v3747
    %v3780 = vmul.f32 %v3713, %v3748
    %v3781 = vmul.f32 %v3715, %v3749
    %v3782 = vmul.f32 %v3717, %v3750
    %v3783 = vmul.f32 %v3719, %v3751
    %v3784 = vadd.f32 %v3752, 2.0
    %v3785 = vadd.f32 %v3753, 2.0
    %v3786 = vadd.f32 %v3754, 2.0
    %v3787 = vadd.f32 %v3755, 2.0
    %v3788 = vadd.f32 %v3756, 2.0
    %v3789 = vadd.f32 %v3757, 2.0
    %v3790 = vadd.f32 %v3758, 2.0
    %v3791 = vadd.f32 %v3759, 2.0
    %v3792 = vadd.f32 %v3760, 2.0
    %v3793 = vadd.f32 %v3761, 2.0
    %v3794 = vadd.f32 %v3762, 2.0
    %v3795 = vadd.f32 %v3763, 2.0
    %v3796 = vadd.f32 %v3764, 2.0
    %v3797 = vadd.f32 %v3765, 2.0
    %v3798 = vadd.f32 %v3766, 2.0
    %v3799 = vadd.f32 %v3767, 2.0
    %v3800 = vadd.f32 %v3768, 2.0
    %v3801 = vadd.f32 %v3769, 2.0
    %v3802 = vadd.f32 %v3770, 2.0
    %v3803 = vadd.f32 %v3771, 2.0
    %v3804 = vadd.f32 %v3772, 2.0
    %v3805 = vadd.f32 %v3773, 2.0
    %v3806 = vadd.f32 %v3774, 2.0
    %v3807 = vadd.f32 %v3775, 2.0
    %v3808 = vadd.f32 %v3776, 2.0
    %v3809 = vadd.f32 %v3777, 2.0
    %v3810 = vadd.f32 %v3778, 2.0
    %v3811 = vadd.f32 %v3779, 2.0
    %v3812 = vadd.f32 %v3780, 2.0
    %v3813 = vadd.f32 %v3781, 2.0
    %v3814 = vadd.f32 %v3782, 2.0
    %v3815 = vadd.f32 %v3783, 2.0
    %v3816 = vrcp.pop %v3784
    %v3817 = vmul.f32 %v3784, %v3816
    %v3818 = vsub.f32 1.0, %v3817
    %v3819 = vmul.f32 %v3816, %v3818
    %v3820 = vadd.f32 %v3816, %v3819
    %vm3821 = vweird.f32 %v3784
    %vm3822 = vweird.f32 %v3816
    %vm3823 = vmor %vm3821, %vm3822
    %v3824 = vsel %vm3823, %v3816, %v3820
    %v3825 = vand.u32 2147483647, %v3784
    %vm3826 = vcmp.eq.f32.partialorder %v3825, 8.507059e+37
    %v3827 = vand.u32 %v3784, 2147483648
    %v3828 = vor.u32 1.1754944e-38, %v3827
    %v3829 = vsel %vm3826, %v3828, %v3824
    %v3830 = vmul.f32 %v3752, %v3829
    %v3831 = vrcp.pop %v3785
    %v3832 = vmul.f32 %v3785, %v3831
    %v3833 = vsub.f32 1.0, %v3832
    %v3834 = vmul.f32 %v3831, %v3833
    %v3835 = vadd.f32 %v3831, %v3834
    %vm3836 = vweird.f32 %v3785
    %vm3837 = vweird.f32 %v3831
    %vm3838 = vmor %vm3836, %vm3837
    %v3839 = vsel %vm3838, %v3831, %v3835
    %v3840 = vand.u32 2147483647, %v3785
    %vm3841 = vcmp.eq.f32.partialorder %v3840, 8.507059e+37
    %v3842 = vand.u32 %v3785, 2147483648
    %v3843 = vor.u32 1.1754944e-38, %v3842
    %v3844 = vsel %vm3841, %v3843, %v3839
    %v3845 = vmul.f32 %v3753, %v3844
    %v3846 = vrcp.pop %v3786
    %v3847 = vmul.f32 %v3786, %v3846
    %v3848 = vsub.f32 1.0, %v3847
    %v3849 = vmul.f32 %v3846, %v3848
    %v3850 = vadd.f32 %v3846, %v3849
    %vm3851 = vweird.f32 %v3786
    %vm3852 = vweird.f32 %v3846
    %vm3853 = vmor %vm3851, %vm3852
    %v3854 = vsel %vm3853, %v3846, %v3850
    %v3855 = vand.u32 2147483647, %v3786
    %vm3856 = vcmp.eq.f32.partialorder %v3855, 8.507059e+37
    %v3857 = vand.u32 %v3786, 2147483648
    %v3858 = vor.u32 1.1754944e-38, %v3857
    %v3859 = vsel %vm3856, %v3858, %v3854
    %v3860 = vmul.f32 %v3754, %v3859
    %v3861 = vrcp.pop %v3787
    %v3862 = vmul.f32 %v3787, %v3861
    %v3863 = vsub.f32 1.0, %v3862
    %v3864 = vmul.f32 %v3861, %v3863
    %v3865 = vadd.f32 %v3861, %v3864
    %vm3866 = vweird.f32 %v3787
    %vm3867 = vweird.f32 %v3861
    %vm3868 = vmor %vm3866, %vm3867
    %v3869 = vsel %vm3868, %v3861, %v3865
    %v3870 = vand.u32 2147483647, %v3787
    %vm3871 = vcmp.eq.f32.partialorder %v3870, 8.507059e+37
    %v3872 = vand.u32 %v3787, 2147483648
    %v3873 = vor.u32 1.1754944e-38, %v3872
    %v3874 = vsel %vm3871, %v3873, %v3869
    %v3875 = vmul.f32 %v3755, %v3874
    %v3876 = vrcp.pop %v3788
    %v3877 = vmul.f32 %v3788, %v3876
    %v3878 = vsub.f32 1.0, %v3877
    %v3879 = vmul.f32 %v3876, %v3878
    %v3880 = vadd.f32 %v3876, %v3879
    %vm3881 = vweird.f32 %v3788
    %vm3882 = vweird.f32 %v3876
    %vm3883 = vmor %vm3881, %vm3882
    %v3884 = vsel %vm3883, %v3876, %v3880
    %v3885 = vand.u32 2147483647, %v3788
    %vm3886 = vcmp.eq.f32.partialorder %v3885, 8.507059e+37
    %v3887 = vand.u32 %v3788, 2147483648
    %v3888 = vor.u32 1.1754944e-38, %v3887
    %v3889 = vsel %vm3886, %v3888, %v3884
    %v3890 = vmul.f32 %v3756, %v3889
    %v3891 = vrcp.pop %v3789
    %v3892 = vmul.f32 %v3789, %v3891
    %v3893 = vsub.f32 1.0, %v3892
    %v3894 = vmul.f32 %v3891, %v3893
    %v3895 = vadd.f32 %v3891, %v3894
    %vm3896 = vweird.f32 %v3789
    %vm3897 = vweird.f32 %v3891
    %vm3898 = vmor %vm3896, %vm3897
    %v3899 = vsel %vm3898, %v3891, %v3895
    %v3900 = vand.u32 2147483647, %v3789
    %vm3901 = vcmp.eq.f32.partialorder %v3900, 8.507059e+37
    %v3902 = vand.u32 %v3789, 2147483648
    %v3903 = vor.u32 1.1754944e-38, %v3902
    %v3904 = vsel %vm3901, %v3903, %v3899
    %v3905 = vmul.f32 %v3757, %v3904
    %v3906 = vrcp.pop %v3790
    %v3907 = vmul.f32 %v3790, %v3906
    %v3908 = vsub.f32 1.0, %v3907
    %v3909 = vmul.f32 %v3906, %v3908
    %v3910 = vadd.f32 %v3906, %v3909
    %vm3911 = vweird.f32 %v3790
    %vm3912 = vweird.f32 %v3906
    %vm3913 = vmor %vm3911, %vm3912
    %v3914 = vsel %vm3913, %v3906, %v3910
    %v3915 = vand.u32 2147483647, %v3790
    %vm3916 = vcmp.eq.f32.partialorder %v3915, 8.507059e+37
    %v3917 = vand.u32 %v3790, 2147483648
    %v3918 = vor.u32 1.1754944e-38, %v3917
    %v3919 = vsel %vm3916, %v3918, %v3914
    %v3920 = vmul.f32 %v3758, %v3919
    %v3921 = vrcp.pop %v3791
    %v3922 = vmul.f32 %v3791, %v3921
    %v3923 = vsub.f32 1.0, %v3922
    %v3924 = vmul.f32 %v3921, %v3923
    %v3925 = vadd.f32 %v3921, %v3924
    %vm3926 = vweird.f32 %v3791
    %vm3927 = vweird.f32 %v3921
    %vm3928 = vmor %vm3926, %vm3927
    %v3929 = vsel %vm3928, %v3921, %v3925
    %v3930 = vand.u32 2147483647, %v3791
    %vm3931 = vcmp.eq.f32.partialorder %v3930, 8.507059e+37
    %v3932 = vand.u32 %v3791, 2147483648
    %v3933 = vor.u32 1.1754944e-38, %v3932
    %v3934 = vsel %vm3931, %v3933, %v3929
    %v3935 = vmul.f32 %v3759, %v3934
    %v3936 = vrcp.pop %v3792
    %v3937 = vmul.f32 %v3792, %v3936
    %v3938 = vsub.f32 1.0, %v3937
    %v3939 = vmul.f32 %v3936, %v3938
    %v3940 = vadd.f32 %v3936, %v3939
    %vm3941 = vweird.f32 %v3792
    %vm3942 = vweird.f32 %v3936
    %vm3943 = vmor %vm3941, %vm3942
    %v3944 = vsel %vm3943, %v3936, %v3940
    %v3945 = vand.u32 2147483647, %v3792
    %vm3946 = vcmp.eq.f32.partialorder %v3945, 8.507059e+37
    %v3947 = vand.u32 %v3792, 2147483648
    %v3948 = vor.u32 1.1754944e-38, %v3947
    %v3949 = vsel %vm3946, %v3948, %v3944
    %v3950 = vmul.f32 %v3760, %v3949
    %v3951 = vrcp.pop %v3793
    %v3952 = vmul.f32 %v3793, %v3951
    %v3953 = vsub.f32 1.0, %v3952
    %v3954 = vmul.f32 %v3951, %v3953
    %v3955 = vadd.f32 %v3951, %v3954
    %vm3956 = vweird.f32 %v3793
    %vm3957 = vweird.f32 %v3951
    %vm3958 = vmor %vm3956, %vm3957
    %v3959 = vsel %vm3958, %v3951, %v3955
    %v3960 = vand.u32 2147483647, %v3793
    %vm3961 = vcmp.eq.f32.partialorder %v3960, 8.507059e+37
    %v3962 = vand.u32 %v3793, 2147483648
    %v3963 = vor.u32 1.1754944e-38, %v3962
    %v3964 = vsel %vm3961, %v3963, %v3959
    %v3965 = vmul.f32 %v3761, %v3964
    %v3966 = vrcp.pop %v3794
    %v3967 = vmul.f32 %v3794, %v3966
    %v3968 = vsub.f32 1.0, %v3967
    %v3969 = vmul.f32 %v3966, %v3968
    %v3970 = vadd.f32 %v3966, %v3969
    %vm3971 = vweird.f32 %v3794
    %vm3972 = vweird.f32 %v3966
    %vm3973 = vmor %vm3971, %vm3972
    %v3974 = vsel %vm3973, %v3966, %v3970
    %v3975 = vand.u32 2147483647, %v3794
    %vm3976 = vcmp.eq.f32.partialorder %v3975, 8.507059e+37
    %v3977 = vand.u32 %v3794, 2147483648
    %v3978 = vor.u32 1.1754944e-38, %v3977
    %v3979 = vsel %vm3976, %v3978, %v3974
    %v3980 = vmul.f32 %v3762, %v3979
    %v3981 = vrcp.pop %v3795
    %v3982 = vmul.f32 %v3795, %v3981
    %v3983 = vsub.f32 1.0, %v3982
    %v3984 = vmul.f32 %v3981, %v3983
    %v3985 = vadd.f32 %v3981, %v3984
    %vm3986 = vweird.f32 %v3795
    %vm3987 = vweird.f32 %v3981
    %vm3988 = vmor %vm3986, %vm3987
    %v3989 = vsel %vm3988, %v3981, %v3985
    %v3990 = vand.u32 2147483647, %v3795
    %vm3991 = vcmp.eq.f32.partialorder %v3990, 8.507059e+37
    %v3992 = vand.u32 %v3795, 2147483648
    %v3993 = vor.u32 1.1754944e-38, %v3992
    %v3994 = vsel %vm3991, %v3993, %v3989
    %v3995 = vmul.f32 %v3763, %v3994
    %v3996 = vrcp.pop %v3796
    %v3997 = vmul.f32 %v3796, %v3996
    %v3998 = vsub.f32 1.0, %v3997
    %v3999 = vmul.f32 %v3996, %v3998
    %v4000 = vadd.f32 %v3996, %v3999
    %vm4001 = vweird.f32 %v3796
    %vm4002 = vweird.f32 %v3996
    %vm4003 = vmor %vm4001, %vm4002
    %v4004 = vsel %vm4003, %v3996, %v4000
    %v4005 = vand.u32 2147483647, %v3796
    %vm4006 = vcmp.eq.f32.partialorder %v4005, 8.507059e+37
    %v4007 = vand.u32 %v3796, 2147483648
    %v4008 = vor.u32 1.1754944e-38, %v4007
    %v4009 = vsel %vm4006, %v4008, %v4004
    %v4010 = vmul.f32 %v3764, %v4009
    %v4011 = vrcp.pop %v3797
    %v4012 = vmul.f32 %v3797, %v4011
    %v4013 = vsub.f32 1.0, %v4012
    %v4014 = vmul.f32 %v4011, %v4013
    %v4015 = vadd.f32 %v4011, %v4014
    %vm4016 = vweird.f32 %v3797
    %vm4017 = vweird.f32 %v4011
    %vm4018 = vmor %vm4016, %vm4017
    %v4019 = vsel %vm4018, %v4011, %v4015
    %v4020 = vand.u32 2147483647, %v3797
    %vm4021 = vcmp.eq.f32.partialorder %v4020, 8.507059e+37
    %v4022 = vand.u32 %v3797, 2147483648
    %v4023 = vor.u32 1.1754944e-38, %v4022
    %v4024 = vsel %vm4021, %v4023, %v4019
    %v4025 = vmul.f32 %v3765, %v4024
    %v4026 = vrcp.pop %v3798
    %v4027 = vmul.f32 %v3798, %v4026
    %v4028 = vsub.f32 1.0, %v4027
    %v4029 = vmul.f32 %v4026, %v4028
    %v4030 = vadd.f32 %v4026, %v4029
    %vm4031 = vweird.f32 %v3798
    %vm4032 = vweird.f32 %v4026
    %vm4033 = vmor %vm4031, %vm4032
    %v4034 = vsel %vm4033, %v4026, %v4030
    %v4035 = vand.u32 2147483647, %v3798
    %vm4036 = vcmp.eq.f32.partialorder %v4035, 8.507059e+37
    %v4037 = vand.u32 %v3798, 2147483648
    %v4038 = vor.u32 1.1754944e-38, %v4037
    %v4039 = vsel %vm4036, %v4038, %v4034
    %v4040 = vmul.f32 %v3766, %v4039
    %v4041 = vrcp.pop %v3799
    %v4042 = vmul.f32 %v3799, %v4041
    %v4043 = vsub.f32 1.0, %v4042
    %v4044 = vmul.f32 %v4041, %v4043
    %v4045 = vadd.f32 %v4041, %v4044
    %vm4046 = vweird.f32 %v3799
    %vm4047 = vweird.f32 %v4041
    %vm4048 = vmor %vm4046, %vm4047
    %v4049 = vsel %vm4048, %v4041, %v4045
    %v4050 = vand.u32 2147483647, %v3799
    %vm4051 = vcmp.eq.f32.partialorder %v4050, 8.507059e+37
    %v4052 = vand.u32 %v3799, 2147483648
    %v4053 = vor.u32 1.1754944e-38, %v4052
    %v4054 = vsel %vm4051, %v4053, %v4049
    %v4055 = vmul.f32 %v3767, %v4054
    %v4056 = vrcp.pop %v3800
    %v4057 = vmul.f32 %v3800, %v4056
    %v4058 = vsub.f32 1.0, %v4057
    %v4059 = vmul.f32 %v4056, %v4058
    %v4060 = vadd.f32 %v4056, %v4059
    %vm4061 = vweird.f32 %v3800
    %vm4062 = vweird.f32 %v4056
    %vm4063 = vmor %vm4061, %vm4062
    %v4064 = vsel %vm4063, %v4056, %v4060
    %v4065 = vand.u32 2147483647, %v3800
    %vm4066 = vcmp.eq.f32.partialorder %v4065, 8.507059e+37
    %v4067 = vand.u32 %v3800, 2147483648
    %v4068 = vor.u32 1.1754944e-38, %v4067
    %v4069 = vsel %vm4066, %v4068, %v4064
    %v4070 = vmul.f32 %v3768, %v4069
    %v4071 = vrcp.pop %v3801
    %v4072 = vmul.f32 %v3801, %v4071
    %v4073 = vsub.f32 1.0, %v4072
    %v4074 = vmul.f32 %v4071, %v4073
    %v4075 = vadd.f32 %v4071, %v4074
    %vm4076 = vweird.f32 %v3801
    %vm4077 = vweird.f32 %v4071
    %vm4078 = vmor %vm4076, %vm4077
    %v4079 = vsel %vm4078, %v4071, %v4075
    %v4080 = vand.u32 2147483647, %v3801
    %vm4081 = vcmp.eq.f32.partialorder %v4080, 8.507059e+37
    %v4082 = vand.u32 %v3801, 2147483648
    %v4083 = vor.u32 1.1754944e-38, %v4082
    %v4084 = vsel %vm4081, %v4083, %v4079
    %v4085 = vmul.f32 %v3769, %v4084
    %v4086 = vrcp.pop %v3802
    %v4087 = vmul.f32 %v3802, %v4086
    %v4088 = vsub.f32 1.0, %v4087
    %v4089 = vmul.f32 %v4086, %v4088
    %v4090 = vadd.f32 %v4086, %v4089
    %vm4091 = vweird.f32 %v3802
    %vm4092 = vweird.f32 %v4086
    %vm4093 = vmor %vm4091, %vm4092
    %v4094 = vsel %vm4093, %v4086, %v4090
    %v4095 = vand.u32 2147483647, %v3802
    %vm4096 = vcmp.eq.f32.partialorder %v4095, 8.507059e+37
    %v4097 = vand.u32 %v3802, 2147483648
    %v4098 = vor.u32 1.1754944e-38, %v4097
    %v4099 = vsel %vm4096, %v4098, %v4094
    %v4100 = vmul.f32 %v3770, %v4099
    %v4101 = vrcp.pop %v3803
    %v4102 = vmul.f32 %v3803, %v4101
    %v4103 = vsub.f32 1.0, %v4102
    %v4104 = vmul.f32 %v4101, %v4103
    %v4105 = vadd.f32 %v4101, %v4104
    %vm4106 = vweird.f32 %v3803
    %vm4107 = vweird.f32 %v4101
    %vm4108 = vmor %vm4106, %vm4107
    %v4109 = vsel %vm4108, %v4101, %v4105
    %v4110 = vand.u32 2147483647, %v3803
    %vm4111 = vcmp.eq.f32.partialorder %v4110, 8.507059e+37
    %v4112 = vand.u32 %v3803, 2147483648
    %v4113 = vor.u32 1.1754944e-38, %v4112
    %v4114 = vsel %vm4111, %v4113, %v4109
    %v4115 = vmul.f32 %v3771, %v4114
    %v4116 = vrcp.pop %v3804
    %v4117 = vmul.f32 %v3804, %v4116
    %v4118 = vsub.f32 1.0, %v4117
    %v4119 = vmul.f32 %v4116, %v4118
    %v4120 = vadd.f32 %v4116, %v4119
    %vm4121 = vweird.f32 %v3804
    %vm4122 = vweird.f32 %v4116
    %vm4123 = vmor %vm4121, %vm4122
    %v4124 = vsel %vm4123, %v4116, %v4120
    %v4125 = vand.u32 2147483647, %v3804
    %vm4126 = vcmp.eq.f32.partialorder %v4125, 8.507059e+37
    %v4127 = vand.u32 %v3804, 2147483648
    %v4128 = vor.u32 1.1754944e-38, %v4127
    %v4129 = vsel %vm4126, %v4128, %v4124
    %v4130 = vmul.f32 %v3772, %v4129
    %v4131 = vrcp.pop %v3805
    %v4132 = vmul.f32 %v3805, %v4131
    %v4133 = vsub.f32 1.0, %v4132
    %v4134 = vmul.f32 %v4131, %v4133
    %v4135 = vadd.f32 %v4131, %v4134
    %vm4136 = vweird.f32 %v3805
    %vm4137 = vweird.f32 %v4131
    %vm4138 = vmor %vm4136, %vm4137
    %v4139 = vsel %vm4138, %v4131, %v4135
    %v4140 = vand.u32 2147483647, %v3805
    %vm4141 = vcmp.eq.f32.partialorder %v4140, 8.507059e+37
    %v4142 = vand.u32 %v3805, 2147483648
    %v4143 = vor.u32 1.1754944e-38, %v4142
    %v4144 = vsel %vm4141, %v4143, %v4139
    %v4145 = vmul.f32 %v3773, %v4144
    %v4146 = vrcp.pop %v3806
    %v4147 = vmul.f32 %v3806, %v4146
    %v4148 = vsub.f32 1.0, %v4147
    %v4149 = vmul.f32 %v4146, %v4148
    %v4150 = vadd.f32 %v4146, %v4149
    %vm4151 = vweird.f32 %v3806
    %vm4152 = vweird.f32 %v4146
    %vm4153 = vmor %vm4151, %vm4152
    %v4154 = vsel %vm4153, %v4146, %v4150
    %v4155 = vand.u32 2147483647, %v3806
    %vm4156 = vcmp.eq.f32.partialorder %v4155, 8.507059e+37
    %v4157 = vand.u32 %v3806, 2147483648
    %v4158 = vor.u32 1.1754944e-38, %v4157
    %v4159 = vsel %vm4156, %v4158, %v4154
    %v4160 = vmul.f32 %v3774, %v4159
    %v4161 = vrcp.pop %v3807
    %v4162 = vmul.f32 %v3807, %v4161
    %v4163 = vsub.f32 1.0, %v4162
    %v4164 = vmul.f32 %v4161, %v4163
    %v4165 = vadd.f32 %v4161, %v4164
    %vm4166 = vweird.f32 %v3807
    %vm4167 = vweird.f32 %v4161
    %vm4168 = vmor %vm4166, %vm4167
    %v4169 = vsel %vm4168, %v4161, %v4165
    %v4170 = vand.u32 2147483647, %v3807
    %vm4171 = vcmp.eq.f32.partialorder %v4170, 8.507059e+37
    %v4172 = vand.u32 %v3807, 2147483648
    %v4173 = vor.u32 1.1754944e-38, %v4172
    %v4174 = vsel %vm4171, %v4173, %v4169
    %v4175 = vmul.f32 %v3775, %v4174
    %v4176 = vrcp.pop %v3808
    %v4177 = vmul.f32 %v3808, %v4176
    %v4178 = vsub.f32 1.0, %v4177
    %v4179 = vmul.f32 %v4176, %v4178
    %v4180 = vadd.f32 %v4176, %v4179
    %vm4181 = vweird.f32 %v3808
    %vm4182 = vweird.f32 %v4176
    %vm4183 = vmor %vm4181, %vm4182
    %v4184 = vsel %vm4183, %v4176, %v4180
    %v4185 = vand.u32 2147483647, %v3808
    %vm4186 = vcmp.eq.f32.partialorder %v4185, 8.507059e+37
    %v4187 = vand.u32 %v3808, 2147483648
    %v4188 = vor.u32 1.1754944e-38, %v4187
    %v4189 = vsel %vm4186, %v4188, %v4184
    %v4190 = vmul.f32 %v3776, %v4189
    %v4191 = vrcp.pop %v3809
    %v4192 = vmul.f32 %v3809, %v4191
    %v4193 = vsub.f32 1.0, %v4192
    %v4194 = vmul.f32 %v4191, %v4193
    %v4195 = vadd.f32 %v4191, %v4194
    %vm4196 = vweird.f32 %v3809
    %vm4197 = vweird.f32 %v4191
    %vm4198 = vmor %vm4196, %vm4197
    %v4199 = vsel %vm4198, %v4191, %v4195
    %v4200 = vand.u32 2147483647, %v3809
    %vm4201 = vcmp.eq.f32.partialorder %v4200, 8.507059e+37
    %v4202 = vand.u32 %v3809, 2147483648
    %v4203 = vor.u32 1.1754944e-38, %v4202
    %v4204 = vsel %vm4201, %v4203, %v4199
    %v4205 = vmul.f32 %v3777, %v4204
    %v4206 = vrcp.pop %v3810
    %v4207 = vmul.f32 %v3810, %v4206
    %v4208 = vsub.f32 1.0, %v4207
    %v4209 = vmul.f32 %v4206, %v4208
    %v4210 = vadd.f32 %v4206, %v4209
    %vm4211 = vweird.f32 %v3810
    %vm4212 = vweird.f32 %v4206
    %vm4213 = vmor %vm4211, %vm4212
    %v4214 = vsel %vm4213, %v4206, %v4210
    %v4215 = vand.u32 2147483647, %v3810
    %vm4216 = vcmp.eq.f32.partialorder %v4215, 8.507059e+37
    %v4217 = vand.u32 %v3810, 2147483648
    %v4218 = vor.u32 1.1754944e-38, %v4217
    %v4219 = vsel %vm4216, %v4218, %v4214
    %v4220 = vmul.f32 %v3778, %v4219
    %v4221 = vrcp.pop %v3811
    %v4222 = vmul.f32 %v3811, %v4221
    %v4223 = vsub.f32 1.0, %v4222
    %v4224 = vmul.f32 %v4221, %v4223
    %v4225 = vadd.f32 %v4221, %v4224
    %vm4226 = vweird.f32 %v3811
    %vm4227 = vweird.f32 %v4221
    %vm4228 = vmor %vm4226, %vm4227
    %v4229 = vsel %vm4228, %v4221, %v4225
    %v4230 = vand.u32 2147483647, %v3811
    %vm4231 = vcmp.eq.f32.partialorder %v4230, 8.507059e+37
    %v4232 = vand.u32 %v3811, 2147483648
    %v4233 = vor.u32 1.1754944e-38, %v4232
    %v4234 = vsel %vm4231, %v4233, %v4229
    %v4235 = vmul.f32 %v3779, %v4234
    %v4236 = vrcp.pop %v3812
    %v4237 = vmul.f32 %v3812, %v4236
    %v4238 = vsub.f32 1.0, %v4237
    %v4239 = vmul.f32 %v4236, %v4238
    %v4240 = vadd.f32 %v4236, %v4239
    %vm4241 = vweird.f32 %v3812
    %vm4242 = vweird.f32 %v4236
    %vm4243 = vmor %vm4241, %vm4242
    %v4244 = vsel %vm4243, %v4236, %v4240
    %v4245 = vand.u32 2147483647, %v3812
    %vm4246 = vcmp.eq.f32.partialorder %v4245, 8.507059e+37
    %v4247 = vand.u32 %v3812, 2147483648
    %v4248 = vor.u32 1.1754944e-38, %v4247
    %v4249 = vsel %vm4246, %v4248, %v4244
    %v4250 = vmul.f32 %v3780, %v4249
    %v4251 = vrcp.pop %v3813
    %v4252 = vmul.f32 %v3813, %v4251
    %v4253 = vsub.f32 1.0, %v4252
    %v4254 = vmul.f32 %v4251, %v4253
    %v4255 = vadd.f32 %v4251, %v4254
    %vm4256 = vweird.f32 %v3813
    %vm4257 = vweird.f32 %v4251
    %vm4258 = vmor %vm4256, %vm4257
    %v4259 = vsel %vm4258, %v4251, %v4255
    %v4260 = vand.u32 2147483647, %v3813
    %vm4261 = vcmp.eq.f32.partialorder %v4260, 8.507059e+37
    %v4262 = vand.u32 %v3813, 2147483648
    %v4263 = vor.u32 1.1754944e-38, %v4262
    %v4264 = vsel %vm4261, %v4263, %v4259
    %v4265 = vmul.f32 %v3781, %v4264
    %v4266 = vrcp.pop %v3814
    %v4267 = vmul.f32 %v3814, %v4266
    %v4268 = vsub.f32 1.0, %v4267
    %v4269 = vmul.f32 %v4266, %v4268
    %v4270 = vadd.f32 %v4266, %v4269
    %vm4271 = vweird.f32 %v3814
    %vm4272 = vweird.f32 %v4266
    %vm4273 = vmor %vm4271, %vm4272
    %v4274 = vsel %vm4273, %v4266, %v4270
    %v4275 = vand.u32 2147483647, %v3814
    %vm4276 = vcmp.eq.f32.partialorder %v4275, 8.507059e+37
    %v4277 = vand.u32 %v3814, 2147483648
    %v4278 = vor.u32 1.1754944e-38, %v4277
    %v4279 = vsel %vm4276, %v4278, %v4274
    %v4280 = vmul.f32 %v3782, %v4279
    %v4281 = vrcp.pop %v3815
    %v4282 = vmul.f32 %v3815, %v4281
    %v4283 = vsub.f32 1.0, %v4282
    %v4284 = vmul.f32 %v4281, %v4283
    %v4285 = vadd.f32 %v4281, %v4284
    %vm4286 = vweird.f32 %v3815
    %vm4287 = vweird.f32 %v4281
    %vm4288 = vmor %vm4286, %vm4287
    %v4289 = vsel %vm4288, %v4281, %v4285
    %v4290 = vand.u32 2147483647, %v3815
    %vm4291 = vcmp.eq.f32.partialorder %v4290, 8.507059e+37
    %v4292 = vand.u32 %v3815, 2147483648
    %v4293 = vor.u32 1.1754944e-38, %v4292
    %v4294 = vsel %vm4291, %v4293, %v4289
    %v4295 = vmul.f32 %v3783, %v4294
    %v4296 = vmul.f32 %v3447, %v3830
    %v4297 = vmul.f32 %v3577, %v3845
    %v4298 = vmul.f32 %v3450, %v3860
    %v4299 = vmul.f32 %v3580, %v3875
    %v4300 = vmul.f32 %v3453, %v3890
    %v4301 = vmul.f32 %v3583, %v3905
    %v4302 = vmul.f32 %v3456, %v3920
    %v4303 = vmul.f32 %v3586, %v3935
    %v4304 = vmul.f32 %v3459, %v3950
    %v4305 = vmul.f32 %v3589, %v3965
    %v4306 = vmul.f32 %v3462, %v3980
    %v4307 = vmul.f32 %v3592, %v3995
    %v4308 = vmul.f32 %v3465, %v4010
    %v4309 = vmul.f32 %v3595, %v4025
    %v4310 = vmul.f32 %v3468, %v4040
    %v4311 = vmul.f32 %v3598, %v4055
    %v4312 = vmul.f32 %v3471, %v4070
    %v4313 = vmul.f32 %v3601, %v4085
    %v4314 = vmul.f32 %v3474, %v4100
    %v4315 = vmul.f32 %v3604, %v4115
    %v4316 = vmul.f32 %v3477, %v4130
    %v4317 = vmul.f32 %v3607, %v4145
    %v4318 = vmul.f32 %v3480, %v4160
    %v4319 = vmul.f32 %v3610, %v4175
    %v4320 = vmul.f32 %v3483, %v4190
    %v4321 = vmul.f32 %v3613, %v4205
    %v4322 = vmul.f32 %v3486, %v4220
    %v4323 = vmul.f32 %v3616, %v4235
    %v4324 = vmul.f32 %v3489, %v4250
    %v4325 = vmul.f32 %v3619, %v4265
    %v4326 = vmul.f32 %v3492, %v4280
    %v4327 = vmul.f32 %v3622, %v4295
    %4328 = vst [vmem:[#allocation8] sm:$0xff] %v4296
    %4329 = vst [vmem:[#allocation8 + $0x8] sm:$0xff] %v4297
    %4330 = vst [vmem:[#allocation8 + $0x10] sm:$0xff] %v4298
    %4331 = vst [vmem:[#allocation8 + $0x18] sm:$0xff] %v4299
    %4332 = vst [vmem:[#allocation8 + $0x20] sm:$0xff] %v4300
    %4333 = vst [vmem:[#allocation8 + $0x28] sm:$0xff] %v4301
    %4334 = vst [vmem:[#allocation8 + $0x30] sm:$0xff] %v4302
    %4335 = vst [vmem:[#allocation8 + $0x38] sm:$0xff] %v4303
    %4336 = vst [vmem:[#allocation8 + $0x40] sm:$0xff] %v4304
    %4337 = vst [vmem:[#allocation8 + $0x48] sm:$0xff] %v4305
    %4338 = vst [vmem:[#allocation8 + $0x50] sm:$0xff] %v4306
    %4339 = vst [vmem:[#allocation8 + $0x58] sm:$0xff] %v4307
    %4340 = vst [vmem:[#allocation8 + $0x60] sm:$0xff] %v4308
    %4341 = vst [vmem:[#allocation8 + $0x68] sm:$0xff] %v4309
    %4342 = vst [vmem:[#allocation8 + $0x70] sm:$0xff] %v4310
    %4343 = vst [vmem:[#allocation8 + $0x78] sm:$0xff] %v4311
    %4344 = vst [vmem:[#allocation8 + $0x80] sm:$0xff] %v4312
    %4345 = vst [vmem:[#allocation8 + $0x88] sm:$0xff] %v4313
    %4346 = vst [vmem:[#allocation8 + $0x90] sm:$0xff] %v4314
    %4347 = vst [vmem:[#allocation8 + $0x98] sm:$0xff] %v4315
    %4348 = vst [vmem:[#allocation8 + $0xa0] sm:$0xff] %v4316
    %4349 = vst [vmem:[#allocation8 + $0xa8] sm:$0xff] %v4317
    %4350 = vst [vmem:[#allocation8 + $0xb0] sm:$0xff] %v4318
    %4351 = vst [vmem:[#allocation8 + $0xb8] sm:$0xff] %v4319
    %4352 = vst [vmem:[#allocation8 + $0xc0] sm:$0xff] %v4320
    %4353 = vst [vmem:[#allocation8 + $0xc8] sm:$0xff] %v4321
    %4354 = vst [vmem:[#allocation8 + $0xd0] sm:$0xff] %v4322
    %4355 = vst [vmem:[#allocation8 + $0xd8] sm:$0xff] %v4323
    %4356 = vst [vmem:[#allocation8 + $0xe0] sm:$0xff] %v4324
    %4357 = vst [vmem:[#allocation8 + $0xe8] sm:$0xff] %v4325
    %4358 = vst [vmem:[#allocation8 + $0xf0] sm:$0xff] %v4326
    %4359 = vst [vmem:[#allocation8 + $0xf8] sm:$0xff] %v4327
    // Predicated region
    $region50: #{pc_position_encoder.1} parent=1 // pred_check
      _
    $region51: #{pc_position_encoder.1} parent=1 // pred_check_branch
      %4361 = sbr.rel (0) target = $region53
    $region52: #{pc_position_encoder.1} parent=1 // pred_region
      %4363 = vsyncadd [#allocation4], 0
      %s4364 = sshll.u32 [#allocation8], 4
      %s4365 = int_to_ptr.vmem [resolvable:$true] %s4364
      %s4366 = sshll.u32 %s9, 4
      %s4367 = int_to_ptr.hbm [resolvable:$true] %s4366
      %4372 = dma.vmem_to_hbm [thread:$0]  %s4365, 4096, %s4367, [#allocation4], 256, 256, 16
    $region53: #{pc_position_encoder.1} parent=1 // pred_fallthru
      _
    // Predicated region
    $region54: #{pc_position_encoder.1} parent=1 // pred_check
      _
    $region55: #{pc_position_encoder.1} parent=1 // pred_check_branch
      %4374 = sbr.rel (0) target = $region57
    $region56: #{pc_position_encoder.1} parent=1 // pred_region
      %4376 = dma.done [#allocation4], 4096
    $region57: #{pc_position_encoder.1} parent=1 // pred_fallthru
      _
    %4377 = vsyncpa [#allocation3], 1
    %4378 = vsyncpa [#allocation6], 1
    %4379 = vsyncpa [#allocation4], 1

</llo_original>
